<compile_context>
chip_gen: v7x
topology: tpu7x:2x2x1
jax: 0.10.0
libtpu: 0.0.40
codegen_flags: <defaults>
</compile_context>

<pallas_src>
import functools

import jax
import jax.numpy as jnp
from jax.experimental import pallas as pl
from jax.experimental.pallas import tpu as pltpu

EPS = 1e-5


# ------------------------------- fused kernel --------------------------------

def _fused_block_kernel(h, w_dim, xd_ref, wb_ref, g_ref, b_ref, agg_ref, out_ref):
    """Whole ResidualBlockTypeB forward for the full stacked batch.

    xd_ref : (N*H, W*Cp)        dense channel-padded NHWC input (row = (n, h))
    wb_ref : (4, 3, W*Cp, W*Cp) banded conv weights [conv1, conv2, se1, se2] per dy
    g_ref  : (3, W*Cp)          per-lane BN gamma rows  [bn1, bn2, bn_se]
    b_ref  : (3, W*Cp)          per-lane BN beta  rows
    agg_ref: (W*Cp, W*Cp)       0/1 same-channel aggregation matrix
    out_ref: (N*H, W*Cp)        dense channel-padded output
    """
    x = xd_ref[...]
    rows, _ = x.shape
    inv_count = 1.0 / float(rows * w_dim)        # positions per channel = N*H*W

    # 0/1 row-shift matrices: p_prev @ a -> previous image row (0 at h == 0),
    # p_next @ a -> next image row (0 at h == H-1).  Done on the MXU so the whole
    # batch stays a single dense (N*H, 128) operand (no roll/concat relayouts).
    r = jax.lax.broadcasted_iota(jnp.int32, (rows, rows), 0)
    c = jax.lax.broadcasted_iota(jnp.int32, (rows, rows), 1)
    p_prev = jnp.where((c == r - 1) & (r % h != 0), 1.0, 0.0).astype(jnp.float32)
    p_next = jnp.where((c == r + 1) & (r % h != h - 1), 1.0, 0.0).astype(jnp.float32)

    agg = agg_ref[...]

    def conv3(a, widx):
        # 3x3 'same' conv == 3 banded matmuls over {previous, same, next} image rows.
        a_prev = jnp.dot(p_prev, a, preferred_element_type=jnp.float32)
        a_next = jnp.dot(p_next, a, preferred_element_type=jnp.float32)
        acc = jnp.dot(a_prev, wb_ref[widx, 0], preferred_element_type=jnp.float32)
        acc = acc + jnp.dot(a, wb_ref[widx, 1], preferred_element_type=jnp.float32)
        acc = acc + jnp.dot(a_next, wb_ref[widx, 2], preferred_element_type=jnp.float32)
        return acc

    def bn(a, idx):
        # Training-mode BatchNorm with batch statistics (biased variance).
        # Per-channel totals via the same-channel aggregation matmul; shifted
        # two-pass variance for numerical robustness.
        mean = jnp.sum(jnp.dot(a, agg, preferred_element_type=jnp.float32),
                       axis=0, keepdims=True) * inv_count
        d = a - mean
        var = jnp.sum(jnp.dot(d * d, agg, preferred_element_type=jnp.float32),
                      axis=0, keepdims=True) * inv_count
        scale = g_ref[idx:idx + 1, :] * jax.lax.rsqrt(var + EPS)
        shift = b_ref[idx:idx + 1, :] - mean * scale
        return a * scale + shift

    # conv1 -> bn1 -> conv2 -> bn2 -> + residual (shortcut is None -> x)
    a1 = bn(conv3(x, 0), 0)
    base = bn(conv3(a1, 1), 1) + x
    # SqueezeExcitation2D: conv -> ReLU -> BN -> conv -> sigmoid ; out = base * gate
    y = jnp.maximum(conv3(base, 2), 0.0)
    gate = jax.nn.sigmoid(conv3(bn(y, 2), 3))
    out_ref[...] = base * gate
    # NOTE: self.relu in the PyTorch module is never used in forward() -> not applied.


# --------------------------- hoisted parameter prep --------------------------

def _banded_weights(w_hwio, cin, cout, cp, w_dim):
    """(3,3,cin,cout) HWIO conv weights -> (3, W*cp, W*cp) banded matrices.

    Width 'same' padding is folded into the block-Toeplitz structure
    (eye(W, W, k=1-dx) blocks); channels are zero-padded to cp.
    """
    wp = jnp.zeros((3, 3, cp, cp), jnp.float32)
    wp = wp.at[:, :, :cin, :cout].set(w_hwio.astype(jnp.float32))
    mats = []
    for dy in range(3):
        m = sum(jnp.kron(jnp.eye(w_dim, w_dim, k=1 - dx, dtype=jnp.float32),
                         wp[dy, dx]) for dx in range(3))
        mats.append(m)
    return jnp.stack(mats)


def _lane_row(v, cp, fill, w_dim):
    vp = jnp.concatenate([v.astype(jnp.float32),
                          jnp.full((cp - v.shape[0],), fill, jnp.float32)])
    return jnp.tile(vp, w_dim)


def prepare_params(params, *, c, w_dim, cp):
    """One-off prep (outside the jitted forward): banded weights, BN lane rows, agg."""
    mid = c // 2
    wb = jnp.stack([
        _banded_weights(params["w1"], c, c, cp, w_dim),
        _banded_weights(params["w2"], c, c, cp, w_dim),
        _banded_weights(params["w_se1"], c, mid, cp, w_dim),
        _banded_weights(params["w_se2"], mid, c, cp, w_dim),
    ])                                                   # (4, 3, W*cp, W*cp)
    g = jnp.stack([_lane_row(params["g1"], cp, 1.0, w_dim),
                   _lane_row(params["g2"], cp, 1.0, w_dim),
                   _lane_row(params["g_se"], cp, 1.0, w_dim)])
    b = jnp.stack([_lane_row(params["b1"], cp, 0.0, w_dim),
                   _lane_row(params["b2"], cp, 0.0, w_dim),
                   _lane_row(params["b_se"], cp, 0.0, w_dim)])
    lanes = jnp.arange(w_dim * cp)
    agg = (lanes[:, None] % cp == lanes[None, :] % cp).astype(jnp.float32)
    return {"wb": wb, "g": g, "b": b, "agg": agg}


# --------------------------------- forward -----------------------------------

@functools.partial(jax.jit, static_argnames=("cp",))
def residual_block_type_b(x_nchw, prep, *, cp):
    n, c, h, w_dim = x_nchw.shape
    lanes = w_dim * cp
    x = jnp.transpose(x_nchw, (0, 2, 3, 1)).astype(jnp.float32)        # NCHW -> NHWC
    xd = jnp.pad(x, ((0, 0), (0, 0), (0, 0), (0, cp - c))).reshape(n * h, lanes)

    kern = functools.partial(_fused_block_kernel, h, w_dim)
    out2 = pl.pallas_call(
        kern,
        out_shape=jax.ShapeDtypeStruct((n * h, lanes), jnp.float32),
        grid=(1,),
        in_specs=[
            pl.BlockSpec((n * h, lanes), lambda i: (0, 0)),
            pl.BlockSpec((4, 3, lanes, lanes), lambda i: (0, 0, 0, 0)),
            pl.BlockSpec((3, lanes), lambda i: (0, 0)),
            pl.BlockSpec((3, lanes), lambda i: (0, 0)),
            pl.BlockSpec((lanes, lanes), lambda i: (0, 0)),
        ],
        out_specs=pl.BlockSpec((n * h, lanes), lambda i: (0, 0)),
        compiler_params=pltpu.CompilerParams(dimension_semantics=("arbitrary",)),
    )(xd, prep["wb"], prep["g"], prep["b"], prep["agg"])

    out = out2.reshape(n, h, w_dim, cp)[..., :c]
    return jnp.transpose(out, (0, 3, 1, 2))                            # NHWC -> NCHW


# ------------------- pure-JAX reference for correctness check ----------------

def reference(x_nchw, params):
    x = jnp.transpose(x_nchw, (0, 2, 3, 1)).astype(jnp.float32)

    def conv(z, w):
        return jax.lax.conv_general_dilated(
            z, w, window_strides=(1, 1), padding="SAME",
            dimension_numbers=("NHWC", "HWIO", "NHWC"),
            precision=jax.lax.Precision.HIGHEST)

    def bn(z, g, b):
        m = jnp.mean(z, axis=(0, 1, 2))
        v = jnp.var(z, axis=(0, 1, 2))
        return (z - m) * (g * jax.lax.rsqrt(v + EPS)) + b

    out = bn(conv(x, params["w1"]), params["g1"], params["b1"])
    out = bn(conv(out, params["w2"]), params["g2"], params["b2"])
    out = out + x
    y = jnp.maximum(conv(out, params["w_se1"]), 0.0)
    y = bn(y, params["g_se"], params["b_se"])
    y = jax.nn.sigmoid(conv(y, params["w_se2"]))
    out = out * y
    return jnp.transpose(out, (0, 3, 1, 2))


if __name__ == "__main__":
    N, C, H, W = 2, 4, 16, 16            # inchannel = outchannel = 4 (shortcut is None)
    mid = C // 2
    CP = 8                               # channel pad so that W*CP == 128 (lane-dense)
    assert CP >= C and (W * CP) % 128 == 0

    key = jax.random.PRNGKey(0)
    ks = jax.random.split(key, 11)
    params = {
        "w1":    0.2 * jax.random.normal(ks[0], (3, 3, C, C), jnp.float32),    # HWIO
        "g1":    1.0 + 0.1 * jax.random.normal(ks[1], (C,), jnp.float32),
        "b1":    0.1 * jax.random.normal(ks[2], (C,), jnp.float32),
        "w2":    0.2 * jax.random.normal(ks[3], (3, 3, C, C), jnp.float32),
        "g2":    1.0 + 0.1 * jax.random.normal(ks[4], (C,), jnp.float32),
        "b2":    0.1 * jax.random.normal(ks[5], (C,), jnp.float32),
        "w_se1": 0.2 * jax.random.normal(ks[6], (3, 3, C, mid), jnp.float32),
        "g_se":  1.0 + 0.1 * jax.random.normal(ks[7], (mid,), jnp.float32),
        "b_se":  0.1 * jax.random.normal(ks[8], (mid,), jnp.float32),
        "w_se2": 0.2 * jax.random.normal(ks[9], (3, 3, mid, C), jnp.float32),
    }
    x = jax.random.normal(ks[10], (N, C, H, W), jnp.float32)     # NCHW, like PyTorch

    # Hoisted one-off prep (banded weights, BN lane rows, channel-agg matrix).
    prep = prepare_params(params, c=C, w_dim=W, cp=CP)

    out = residual_block_type_b(x, prep, cp=CP)
    out = jax.block_until_ready(out)

    ref = reference(x, params)
    assert out.shape == (N, C, H, W)
    assert jnp.allclose(out, ref, atol=2e-3, rtol=2e-3), \
        float(jnp.max(jnp.abs(out - ref)))
    print("KERNEL_OK")
</pallas_src>

<mosaic_0001>
module attributes {stable_mosaic.version = 11 : i64} {
  func.func @_fused_block_kernel(%arg0: i32, %arg1: memref<32x128xf32, #tpu.memory_space<vmem>>, %arg2: memref<4x3x128x128xf32, #tpu.memory_space<vmem>>, %arg3: memref<3x128xf32, #tpu.memory_space<vmem>>, %arg4: memref<3x128xf32, #tpu.memory_space<vmem>>, %arg5: memref<128x128xf32, #tpu.memory_space<vmem>>, %arg6: memref<32x128xf32, #tpu.memory_space<vmem>>) attributes {dimension_semantics = [#tpu.dimension_semantics<arbitrary>], iteration_bounds = array<i64: 1>, scalar_prefetch = 0 : i64, scratch_operands = 0 : i64, tpu.core_type = #tpu.core_type<tc>, window_params = [{pipeline_mode = #tpu.pipeline_mode<synchronous>, transform_indices = @transform_0, window_bounds = array<i64: 32, 128>}, {pipeline_mode = #tpu.pipeline_mode<synchronous>, transform_indices = @transform_1, window_bounds = array<i64: 4, 3, 128, 128>}, {pipeline_mode = #tpu.pipeline_mode<synchronous>, transform_indices = @transform_2, window_bounds = array<i64: 3, 128>}, {pipeline_mode = #tpu.pipeline_mode<synchronous>, transform_indices = @transform_3, window_bounds = array<i64: 3, 128>}, {pipeline_mode = #tpu.pipeline_mode<synchronous>, transform_indices = @transform_4, window_bounds = array<i64: 128, 128>}, {pipeline_mode = #tpu.pipeline_mode<synchronous>, transform_indices = @transform_5, window_bounds = array<i64: 32, 128>}]} {
    %c0 = arith.constant 0 : index
    %c0_0 = arith.constant 0 : index
    %0 = vector.load %arg1[%c0, %c0_0] : memref<32x128xf32, #tpu.memory_space<vmem>>, vector<32x128xf32>
    %1 = tpu.iota {dimensions = array<i32: 0>} : vector<32x32xi32>
    %2 = tpu.iota {dimensions = array<i32: 1>} : vector<32x32xi32>
    %c1_i32 = arith.constant 1 : i32
    %3 = vector.broadcast %c1_i32 : i32 to vector<32x32xi32>
    %4 = arith.subi %1, %3 : vector<32x32xi32>
    %5 = arith.cmpi eq, %2, %4 : vector<32x32xi32>
    %c16_i32 = arith.constant 16 : i32
    %c0_i32 = arith.constant 0 : i32
    %6 = arith.cmpi eq, %c16_i32, %c0_i32 : i32
    %c1_i32_1 = arith.constant 1 : i32
    %7 = arith.select %6, %c1_i32_1, %c16_i32 : i32
    %8 = vector.broadcast %7 : i32 to vector<32x32xi32>
    %9 = arith.remsi %1, %8 : vector<32x32xi32>
    %c0_i32_2 = arith.constant 0 : i32
    %10 = vector.broadcast %c0_i32_2 : i32 to vector<32x32xi32>
    %11 = arith.cmpi ne, %9, %10 : vector<32x32xi32>
    %c0_i32_3 = arith.constant 0 : i32
    %12 = vector.broadcast %c0_i32_3 : i32 to vector<32x32xi32>
    %13 = arith.cmpi slt, %9, %12 : vector<32x32xi32>
    %c0_i32_4 = arith.constant 0 : i32
    %14 = arith.cmpi slt, %7, %c0_i32_4 : i32
    %15 = vector.broadcast %14 : i1 to vector<32x32xi1>
    %16 = vector.broadcast %15 : vector<32x32xi1> to vector<32x32xi1>
    %17 = arith.xori %13, %16 : vector<32x32xi1>
    %18 = arith.andi %17, %11 : vector<32x32xi1>
    %19 = vector.broadcast %7 : i32 to vector<32x32xi32>
    %20 = arith.addi %9, %19 : vector<32x32xi32>
    %21 = arith.select %18, %20, %9 : vector<32x32xi1>, vector<32x32xi32>
    %c0_i32_5 = arith.constant 0 : i32
    %22 = vector.broadcast %c0_i32_5 : i32 to vector<32x32xi32>
    %23 = arith.cmpi ne, %21, %22 : vector<32x32xi32>
    %24 = arith.andi %5, %23 : vector<32x32xi1>
    %cst = arith.constant 1.000000e+00 : f32
    %cst_6 = arith.constant 0.000000e+00 : f32
    %25 = vector.broadcast %cst : f32 to vector<32x32xf32>
    %26 = vector.broadcast %cst_6 : f32 to vector<32x32xf32>
    %27 = arith.select %24, %25, %26 : vector<32x32xi1>, vector<32x32xf32>
    %c1_i32_7 = arith.constant 1 : i32
    %28 = vector.broadcast %c1_i32_7 : i32 to vector<32x32xi32>
    %29 = arith.addi %1, %28 : vector<32x32xi32>
    %30 = arith.cmpi eq, %2, %29 : vector<32x32xi32>
    %c16_i32_8 = arith.constant 16 : i32
    %c0_i32_9 = arith.constant 0 : i32
    %31 = arith.cmpi eq, %c16_i32_8, %c0_i32_9 : i32
    %c1_i32_10 = arith.constant 1 : i32
    %32 = arith.select %31, %c1_i32_10, %c16_i32_8 : i32
    %33 = vector.broadcast %32 : i32 to vector<32x32xi32>
    %34 = arith.remsi %1, %33 : vector<32x32xi32>
    %c0_i32_11 = arith.constant 0 : i32
    %35 = vector.broadcast %c0_i32_11 : i32 to vector<32x32xi32>
    %36 = arith.cmpi ne, %34, %35 : vector<32x32xi32>
    %c0_i32_12 = arith.constant 0 : i32
    %37 = vector.broadcast %c0_i32_12 : i32 to vector<32x32xi32>
    %38 = arith.cmpi slt, %34, %37 : vector<32x32xi32>
    %c0_i32_13 = arith.constant 0 : i32
    %39 = arith.cmpi slt, %32, %c0_i32_13 : i32
    %40 = vector.broadcast %39 : i1 to vector<32x32xi1>
    %41 = vector.broadcast %40 : vector<32x32xi1> to vector<32x32xi1>
    %42 = arith.xori %38, %41 : vector<32x32xi1>
    %43 = arith.andi %42, %36 : vector<32x32xi1>
    %44 = vector.broadcast %32 : i32 to vector<32x32xi32>
    %45 = arith.addi %34, %44 : vector<32x32xi32>
    %46 = arith.select %43, %45, %34 : vector<32x32xi1>, vector<32x32xi32>
    %c15_i32 = arith.constant 15 : i32
    %47 = vector.broadcast %c15_i32 : i32 to vector<32x32xi32>
    %48 = arith.cmpi ne, %46, %47 : vector<32x32xi32>
    %49 = arith.andi %30, %48 : vector<32x32xi1>
    %cst_14 = arith.constant 1.000000e+00 : f32
    %cst_15 = arith.constant 0.000000e+00 : f32
    %50 = vector.broadcast %cst_14 : f32 to vector<32x32xf32>
    %51 = vector.broadcast %cst_15 : f32 to vector<32x32xf32>
    %52 = arith.select %49, %50, %51 : vector<32x32xi1>, vector<32x32xf32>
    %c0_16 = arith.constant 0 : index
    %c0_17 = arith.constant 0 : index
    %53 = vector.load %arg5[%c0_16, %c0_17] : memref<128x128xf32, #tpu.memory_space<vmem>>, vector<128x128xf32>
    %cst_18 = arith.constant dense<0.000000e+00> : vector<32x128xf32>
    %54 = tpu.matmul %27, %0, %cst_18 {dimension_numbers = #tpu.dot_dimension_numbers<[1], [0], [0], [1], [0, 0, 1, 1], [], []>} : vector<32x32xf32>, vector<32x128xf32>, vector<32x128xf32> -> vector<32x128xf32>
    %cst_19 = arith.constant dense<0.000000e+00> : vector<32x128xf32>
    %55 = tpu.matmul %52, %0, %cst_19 {dimension_numbers = #tpu.dot_dimension_numbers<[1], [0], [0], [1], [0, 0, 1, 1], [], []>} : vector<32x32xf32>, vector<32x128xf32>, vector<32x128xf32> -> vector<32x128xf32>
    %c0_20 = arith.constant 0 : index
    %c0_21 = arith.constant 0 : index
    %c0_22 = arith.constant 0 : index
    %c0_23 = arith.constant 0 : index
    %56 = vector.load %arg2[%c0_20, %c0_21, %c0_22, %c0_23] : memref<4x3x128x128xf32, #tpu.memory_space<vmem>>, vector<1x1x128x128xf32>
    %57 = vector.shape_cast %56 : vector<1x1x128x128xf32> to vector<128x128xf32>
    %cst_24 = arith.constant dense<0.000000e+00> : vector<32x128xf32>
    %58 = tpu.matmul %54, %57, %cst_24 {dimension_numbers = #tpu.dot_dimension_numbers<[1], [0], [0], [1], [0, 0, 1, 1], [], []>} : vector<32x128xf32>, vector<128x128xf32>, vector<32x128xf32> -> vector<32x128xf32>
    %c0_25 = arith.constant 0 : index
    %c1 = arith.constant 1 : index
    %c0_26 = arith.constant 0 : index
    %c0_27 = arith.constant 0 : index
    %59 = vector.load %arg2[%c0_25, %c1, %c0_26, %c0_27] : memref<4x3x128x128xf32, #tpu.memory_space<vmem>>, vector<1x1x128x128xf32>
    %60 = vector.shape_cast %59 : vector<1x1x128x128xf32> to vector<128x128xf32>
    %cst_28 = arith.constant dense<0.000000e+00> : vector<32x128xf32>
    %61 = tpu.matmul %0, %60, %cst_28 {dimension_numbers = #tpu.dot_dimension_numbers<[1], [0], [0], [1], [0, 0, 1, 1], [], []>} : vector<32x128xf32>, vector<128x128xf32>, vector<32x128xf32> -> vector<32x128xf32>
    %62 = arith.addf %58, %61 : vector<32x128xf32>
    %c0_29 = arith.constant 0 : index
    %c2 = arith.constant 2 : index
    %c0_30 = arith.constant 0 : index
    %c0_31 = arith.constant 0 : index
    %63 = vector.load %arg2[%c0_29, %c2, %c0_30, %c0_31] : memref<4x3x128x128xf32, #tpu.memory_space<vmem>>, vector<1x1x128x128xf32>
    %64 = vector.shape_cast %63 : vector<1x1x128x128xf32> to vector<128x128xf32>
    %cst_32 = arith.constant dense<0.000000e+00> : vector<32x128xf32>
    %65 = tpu.matmul %55, %64, %cst_32 {dimension_numbers = #tpu.dot_dimension_numbers<[1], [0], [0], [1], [0, 0, 1, 1], [], []>} : vector<32x128xf32>, vector<128x128xf32>, vector<32x128xf32> -> vector<32x128xf32>
    %66 = arith.addf %62, %65 : vector<32x128xf32>
    %cst_33 = arith.constant dense<0.000000e+00> : vector<32x128xf32>
    %67 = tpu.matmul %66, %53, %cst_33 {dimension_numbers = #tpu.dot_dimension_numbers<[1], [0], [0], [1], [0, 0, 1, 1], [], []>} : vector<32x128xf32>, vector<128x128xf32>, vector<32x128xf32> -> vector<32x128xf32>
    %cst_34 = arith.constant dense<0.000000e+00> : vector<128xf32>
    %68 = vector.multi_reduction <add>, %67, %cst_34 [0] : vector<32x128xf32> to vector<128xf32>
    %69 = vector.shape_cast %68 : vector<128xf32> to vector<1x128xf32>
    %cst_35 = arith.constant 0.001953125 : f32
    %70 = vector.broadcast %cst_35 : f32 to vector<1x128xf32>
    %71 = arith.mulf %69, %70 : vector<1x128xf32>
    %72 = vector.broadcast %71 : vector<1x128xf32> to vector<32x128xf32>
    %73 = arith.subf %66, %72 : vector<32x128xf32>
    %74 = arith.mulf %73, %73 : vector<32x128xf32>
    %cst_36 = arith.constant dense<0.000000e+00> : vector<32x128xf32>
    %75 = tpu.matmul %74, %53, %cst_36 {dimension_numbers = #tpu.dot_dimension_numbers<[1], [0], [0], [1], [0, 0, 1, 1], [], []>} : vector<32x128xf32>, vector<128x128xf32>, vector<32x128xf32> -> vector<32x128xf32>
    %cst_37 = arith.constant dense<0.000000e+00> : vector<128xf32>
    %76 = vector.multi_reduction <add>, %75, %cst_37 [0] : vector<32x128xf32> to vector<128xf32>
    %77 = vector.shape_cast %76 : vector<128xf32> to vector<1x128xf32>
    %cst_38 = arith.constant 0.001953125 : f32
    %78 = vector.broadcast %cst_38 : f32 to vector<1x128xf32>
    %79 = arith.mulf %77, %78 : vector<1x128xf32>
    %c0_39 = arith.constant 0 : index
    %c0_40 = arith.constant 0 : index
    %80 = vector.load %arg3[%c0_39, %c0_40] : memref<3x128xf32, #tpu.memory_space<vmem>>, vector<1x128xf32>
    %cst_41 = arith.constant 9.99999974E-6 : f32
    %81 = vector.broadcast %cst_41 : f32 to vector<1x128xf32>
    %82 = arith.addf %79, %81 : vector<1x128xf32>
    %83 = math.rsqrt %82 : vector<1x128xf32>
    %84 = arith.mulf %80, %83 : vector<1x128xf32>
    %c0_42 = arith.constant 0 : index
    %c0_43 = arith.constant 0 : index
    %85 = vector.load %arg4[%c0_42, %c0_43] : memref<3x128xf32, #tpu.memory_space<vmem>>, vector<1x128xf32>
    %86 = arith.mulf %71, %84 : vector<1x128xf32>
    %87 = arith.subf %85, %86 : vector<1x128xf32>
    %88 = vector.broadcast %84 : vector<1x128xf32> to vector<32x128xf32>
    %89 = arith.mulf %66, %88 : vector<32x128xf32>
    %90 = vector.broadcast %87 : vector<1x128xf32> to vector<32x128xf32>
    %91 = arith.addf %89, %90 : vector<32x128xf32>
    %cst_44 = arith.constant dense<0.000000e+00> : vector<32x128xf32>
    %92 = tpu.matmul %27, %91, %cst_44 {dimension_numbers = #tpu.dot_dimension_numbers<[1], [0], [0], [1], [0, 0, 1, 1], [], []>} : vector<32x32xf32>, vector<32x128xf32>, vector<32x128xf32> -> vector<32x128xf32>
    %cst_45 = arith.constant dense<0.000000e+00> : vector<32x128xf32>
    %93 = tpu.matmul %52, %91, %cst_45 {dimension_numbers = #tpu.dot_dimension_numbers<[1], [0], [0], [1], [0, 0, 1, 1], [], []>} : vector<32x32xf32>, vector<32x128xf32>, vector<32x128xf32> -> vector<32x128xf32>
    %c1_46 = arith.constant 1 : index
    %c0_47 = arith.constant 0 : index
    %c0_48 = arith.constant 0 : index
    %c0_49 = arith.constant 0 : index
    %94 = vector.load %arg2[%c1_46, %c0_47, %c0_48, %c0_49] : memref<4x3x128x128xf32, #tpu.memory_space<vmem>>, vector<1x1x128x128xf32>
    %95 = vector.shape_cast %94 : vector<1x1x128x128xf32> to vector<128x128xf32>
    %cst_50 = arith.constant dense<0.000000e+00> : vector<32x128xf32>
    %96 = tpu.matmul %92, %95, %cst_50 {dimension_numbers = #tpu.dot_dimension_numbers<[1], [0], [0], [1], [0, 0, 1, 1], [], []>} : vector<32x128xf32>, vector<128x128xf32>, vector<32x128xf32> -> vector<32x128xf32>
    %c1_51 = arith.constant 1 : index
    %c1_52 = arith.constant 1 : index
    %c0_53 = arith.constant 0 : index
    %c0_54 = arith.constant 0 : index
    %97 = vector.load %arg2[%c1_51, %c1_52, %c0_53, %c0_54] : memref<4x3x128x128xf32, #tpu.memory_space<vmem>>, vector<1x1x128x128xf32>
    %98 = vector.shape_cast %97 : vector<1x1x128x128xf32> to vector<128x128xf32>
    %cst_55 = arith.constant dense<0.000000e+00> : vector<32x128xf32>
    %99 = tpu.matmul %91, %98, %cst_55 {dimension_numbers = #tpu.dot_dimension_numbers<[1], [0], [0], [1], [0, 0, 1, 1], [], []>} : vector<32x128xf32>, vector<128x128xf32>, vector<32x128xf32> -> vector<32x128xf32>
    %100 = arith.addf %96, %99 : vector<32x128xf32>
    %c1_56 = arith.constant 1 : index
    %c2_57 = arith.constant 2 : index
    %c0_58 = arith.constant 0 : index
    %c0_59 = arith.constant 0 : index
    %101 = vector.load %arg2[%c1_56, %c2_57, %c0_58, %c0_59] : memref<4x3x128x128xf32, #tpu.memory_space<vmem>>, vector<1x1x128x128xf32>
    %102 = vector.shape_cast %101 : vector<1x1x128x128xf32> to vector<128x128xf32>
    %cst_60 = arith.constant dense<0.000000e+00> : vector<32x128xf32>
    %103 = tpu.matmul %93, %102, %cst_60 {dimension_numbers = #tpu.dot_dimension_numbers<[1], [0], [0], [1], [0, 0, 1, 1], [], []>} : vector<32x128xf32>, vector<128x128xf32>, vector<32x128xf32> -> vector<32x128xf32>
    %104 = arith.addf %100, %103 : vector<32x128xf32>
    %cst_61 = arith.constant dense<0.000000e+00> : vector<32x128xf32>
    %105 = tpu.matmul %104, %53, %cst_61 {dimension_numbers = #tpu.dot_dimension_numbers<[1], [0], [0], [1], [0, 0, 1, 1], [], []>} : vector<32x128xf32>, vector<128x128xf32>, vector<32x128xf32> -> vector<32x128xf32>
    %cst_62 = arith.constant dense<0.000000e+00> : vector<128xf32>
    %106 = vector.multi_reduction <add>, %105, %cst_62 [0] : vector<32x128xf32> to vector<128xf32>
    %107 = vector.shape_cast %106 : vector<128xf32> to vector<1x128xf32>
    %cst_63 = arith.constant 0.001953125 : f32
    %108 = vector.broadcast %cst_63 : f32 to vector<1x128xf32>
    %109 = arith.mulf %107, %108 : vector<1x128xf32>
    %110 = vector.broadcast %109 : vector<1x128xf32> to vector<32x128xf32>
    %111 = arith.subf %104, %110 : vector<32x128xf32>
    %112 = arith.mulf %111, %111 : vector<32x128xf32>
    %cst_64 = arith.constant dense<0.000000e+00> : vector<32x128xf32>
    %113 = tpu.matmul %112, %53, %cst_64 {dimension_numbers = #tpu.dot_dimension_numbers<[1], [0], [0], [1], [0, 0, 1, 1], [], []>} : vector<32x128xf32>, vector<128x128xf32>, vector<32x128xf32> -> vector<32x128xf32>
    %cst_65 = arith.constant dense<0.000000e+00> : vector<128xf32>
    %114 = vector.multi_reduction <add>, %113, %cst_65 [0] : vector<32x128xf32> to vector<128xf32>
    %115 = vector.shape_cast %114 : vector<128xf32> to vector<1x128xf32>
    %cst_66 = arith.constant 0.001953125 : f32
    %116 = vector.broadcast %cst_66 : f32 to vector<1x128xf32>
    %117 = arith.mulf %115, %116 : vector<1x128xf32>
    %c1_67 = arith.constant 1 : index
    %c0_68 = arith.constant 0 : index
    %118 = vector.load %arg3[%c1_67, %c0_68] : memref<3x128xf32, #tpu.memory_space<vmem>>, vector<1x128xf32>
    %cst_69 = arith.constant 9.99999974E-6 : f32
    %119 = vector.broadcast %cst_69 : f32 to vector<1x128xf32>
    %120 = arith.addf %117, %119 : vector<1x128xf32>
    %121 = math.rsqrt %120 : vector<1x128xf32>
    %122 = arith.mulf %118, %121 : vector<1x128xf32>
    %c1_70 = arith.constant 1 : index
    %c0_71 = arith.constant 0 : index
    %123 = vector.load %arg4[%c1_70, %c0_71] : memref<3x128xf32, #tpu.memory_space<vmem>>, vector<1x128xf32>
    %124 = arith.mulf %109, %122 : vector<1x128xf32>
    %125 = arith.subf %123, %124 : vector<1x128xf32>
    %126 = vector.broadcast %122 : vector<1x128xf32> to vector<32x128xf32>
    %127 = arith.mulf %104, %126 : vector<32x128xf32>
    %128 = vector.broadcast %125 : vector<1x128xf32> to vector<32x128xf32>
    %129 = arith.addf %127, %128 : vector<32x128xf32>
    %130 = arith.addf %129, %0 : vector<32x128xf32>
    %cst_72 = arith.constant dense<0.000000e+00> : vector<32x128xf32>
    %131 = tpu.matmul %27, %130, %cst_72 {dimension_numbers = #tpu.dot_dimension_numbers<[1], [0], [0], [1], [0, 0, 1, 1], [], []>} : vector<32x32xf32>, vector<32x128xf32>, vector<32x128xf32> -> vector<32x128xf32>
    %cst_73 = arith.constant dense<0.000000e+00> : vector<32x128xf32>
    %132 = tpu.matmul %52, %130, %cst_73 {dimension_numbers = #tpu.dot_dimension_numbers<[1], [0], [0], [1], [0, 0, 1, 1], [], []>} : vector<32x32xf32>, vector<32x128xf32>, vector<32x128xf32> -> vector<32x128xf32>
    %c2_74 = arith.constant 2 : index
    %c0_75 = arith.constant 0 : index
    %c0_76 = arith.constant 0 : index
    %c0_77 = arith.constant 0 : index
    %133 = vector.load %arg2[%c2_74, %c0_75, %c0_76, %c0_77] : memref<4x3x128x128xf32, #tpu.memory_space<vmem>>, vector<1x1x128x128xf32>
    %134 = vector.shape_cast %133 : vector<1x1x128x128xf32> to vector<128x128xf32>
    %cst_78 = arith.constant dense<0.000000e+00> : vector<32x128xf32>
    %135 = tpu.matmul %131, %134, %cst_78 {dimension_numbers = #tpu.dot_dimension_numbers<[1], [0], [0], [1], [0, 0, 1, 1], [], []>} : vector<32x128xf32>, vector<128x128xf32>, vector<32x128xf32> -> vector<32x128xf32>
    %c2_79 = arith.constant 2 : index
    %c1_80 = arith.constant 1 : index
    %c0_81 = arith.constant 0 : index
    %c0_82 = arith.constant 0 : index
    %136 = vector.load %arg2[%c2_79, %c1_80, %c0_81, %c0_82] : memref<4x3x128x128xf32, #tpu.memory_space<vmem>>, vector<1x1x128x128xf32>
    %137 = vector.shape_cast %136 : vector<1x1x128x128xf32> to vector<128x128xf32>
    %cst_83 = arith.constant dense<0.000000e+00> : vector<32x128xf32>
    %138 = tpu.matmul %130, %137, %cst_83 {dimension_numbers = #tpu.dot_dimension_numbers<[1], [0], [0], [1], [0, 0, 1, 1], [], []>} : vector<32x128xf32>, vector<128x128xf32>, vector<32x128xf32> -> vector<32x128xf32>
    %139 = arith.addf %135, %138 : vector<32x128xf32>
    %c2_84 = arith.constant 2 : index
    %c2_85 = arith.constant 2 : index
    %c0_86 = arith.constant 0 : index
    %c0_87 = arith.constant 0 : index
    %140 = vector.load %arg2[%c2_84, %c2_85, %c0_86, %c0_87] : memref<4x3x128x128xf32, #tpu.memory_space<vmem>>, vector<1x1x128x128xf32>
    %141 = vector.shape_cast %140 : vector<1x1x128x128xf32> to vector<128x128xf32>
    %cst_88 = arith.constant dense<0.000000e+00> : vector<32x128xf32>
    %142 = tpu.matmul %132, %141, %cst_88 {dimension_numbers = #tpu.dot_dimension_numbers<[1], [0], [0], [1], [0, 0, 1, 1], [], []>} : vector<32x128xf32>, vector<128x128xf32>, vector<32x128xf32> -> vector<32x128xf32>
    %143 = arith.addf %139, %142 : vector<32x128xf32>
    %cst_89 = arith.constant 0.000000e+00 : f32
    %144 = vector.broadcast %cst_89 : f32 to vector<32x128xf32>
    %145 = arith.maximumf %143, %144 : vector<32x128xf32>
    %cst_90 = arith.constant dense<0.000000e+00> : vector<32x128xf32>
    %146 = tpu.matmul %145, %53, %cst_90 {dimension_numbers = #tpu.dot_dimension_numbers<[1], [0], [0], [1], [0, 0, 1, 1], [], []>} : vector<32x128xf32>, vector<128x128xf32>, vector<32x128xf32> -> vector<32x128xf32>
    %cst_91 = arith.constant dense<0.000000e+00> : vector<128xf32>
    %147 = vector.multi_reduction <add>, %146, %cst_91 [0] : vector<32x128xf32> to vector<128xf32>
    %148 = vector.shape_cast %147 : vector<128xf32> to vector<1x128xf32>
    %cst_92 = arith.constant 0.001953125 : f32
    %149 = vector.broadcast %cst_92 : f32 to vector<1x128xf32>
    %150 = arith.mulf %148, %149 : vector<1x128xf32>
    %151 = vector.broadcast %150 : vector<1x128xf32> to vector<32x128xf32>
    %152 = arith.subf %145, %151 : vector<32x128xf32>
    %153 = arith.mulf %152, %152 : vector<32x128xf32>
    %cst_93 = arith.constant dense<0.000000e+00> : vector<32x128xf32>
    %154 = tpu.matmul %153, %53, %cst_93 {dimension_numbers = #tpu.dot_dimension_numbers<[1], [0], [0], [1], [0, 0, 1, 1], [], []>} : vector<32x128xf32>, vector<128x128xf32>, vector<32x128xf32> -> vector<32x128xf32>
    %cst_94 = arith.constant dense<0.000000e+00> : vector<128xf32>
    %155 = vector.multi_reduction <add>, %154, %cst_94 [0] : vector<32x128xf32> to vector<128xf32>
    %156 = vector.shape_cast %155 : vector<128xf32> to vector<1x128xf32>
    %cst_95 = arith.constant 0.001953125 : f32
    %157 = vector.broadcast %cst_95 : f32 to vector<1x128xf32>
    %158 = arith.mulf %156, %157 : vector<1x128xf32>
    %c2_96 = arith.constant 2 : index
    %c0_97 = arith.constant 0 : index
    %159 = vector.load %arg3[%c2_96, %c0_97] : memref<3x128xf32, #tpu.memory_space<vmem>>, vector<1x128xf32>
    %cst_98 = arith.constant 9.99999974E-6 : f32
    %160 = vector.broadcast %cst_98 : f32 to vector<1x128xf32>
    %161 = arith.addf %158, %160 : vector<1x128xf32>
    %162 = math.rsqrt %161 : vector<1x128xf32>
    %163 = arith.mulf %159, %162 : vector<1x128xf32>
    %c2_99 = arith.constant 2 : index
    %c0_100 = arith.constant 0 : index
    %164 = vector.load %arg4[%c2_99, %c0_100] : memref<3x128xf32, #tpu.memory_space<vmem>>, vector<1x128xf32>
    %165 = arith.mulf %150, %163 : vector<1x128xf32>
    %166 = arith.subf %164, %165 : vector<1x128xf32>
    %167 = vector.broadcast %163 : vector<1x128xf32> to vector<32x128xf32>
    %168 = arith.mulf %145, %167 : vector<32x128xf32>
    %169 = vector.broadcast %166 : vector<1x128xf32> to vector<32x128xf32>
    %170 = arith.addf %168, %169 : vector<32x128xf32>
    %cst_101 = arith.constant dense<0.000000e+00> : vector<32x128xf32>
    %171 = tpu.matmul %27, %170, %cst_101 {dimension_numbers = #tpu.dot_dimension_numbers<[1], [0], [0], [1], [0, 0, 1, 1], [], []>} : vector<32x32xf32>, vector<32x128xf32>, vector<32x128xf32> -> vector<32x128xf32>
    %cst_102 = arith.constant dense<0.000000e+00> : vector<32x128xf32>
    %172 = tpu.matmul %52, %170, %cst_102 {dimension_numbers = #tpu.dot_dimension_numbers<[1], [0], [0], [1], [0, 0, 1, 1], [], []>} : vector<32x32xf32>, vector<32x128xf32>, vector<32x128xf32> -> vector<32x128xf32>
    %c3 = arith.constant 3 : index
    %c0_103 = arith.constant 0 : index
    %c0_104 = arith.constant 0 : index
    %c0_105 = arith.constant 0 : index
    %173 = vector.load %arg2[%c3, %c0_103, %c0_104, %c0_105] : memref<4x3x128x128xf32, #tpu.memory_space<vmem>>, vector<1x1x128x128xf32>
    %174 = vector.shape_cast %173 : vector<1x1x128x128xf32> to vector<128x128xf32>
    %cst_106 = arith.constant dense<0.000000e+00> : vector<32x128xf32>
    %175 = tpu.matmul %171, %174, %cst_106 {dimension_numbers = #tpu.dot_dimension_numbers<[1], [0], [0], [1], [0, 0, 1, 1], [], []>} : vector<32x128xf32>, vector<128x128xf32>, vector<32x128xf32> -> vector<32x128xf32>
    %c3_107 = arith.constant 3 : index
    %c1_108 = arith.constant 1 : index
    %c0_109 = arith.constant 0 : index
    %c0_110 = arith.constant 0 : index
    %176 = vector.load %arg2[%c3_107, %c1_108, %c0_109, %c0_110] : memref<4x3x128x128xf32, #tpu.memory_space<vmem>>, vector<1x1x128x128xf32>
    %177 = vector.shape_cast %176 : vector<1x1x128x128xf32> to vector<128x128xf32>
    %cst_111 = arith.constant dense<0.000000e+00> : vector<32x128xf32>
    %178 = tpu.matmul %170, %177, %cst_111 {dimension_numbers = #tpu.dot_dimension_numbers<[1], [0], [0], [1], [0, 0, 1, 1], [], []>} : vector<32x128xf32>, vector<128x128xf32>, vector<32x128xf32> -> vector<32x128xf32>
    %179 = arith.addf %175, %178 : vector<32x128xf32>
    %c3_112 = arith.constant 3 : index
    %c2_113 = arith.constant 2 : index
    %c0_114 = arith.constant 0 : index
    %c0_115 = arith.constant 0 : index
    %180 = vector.load %arg2[%c3_112, %c2_113, %c0_114, %c0_115] : memref<4x3x128x128xf32, #tpu.memory_space<vmem>>, vector<1x1x128x128xf32>
    %181 = vector.shape_cast %180 : vector<1x1x128x128xf32> to vector<128x128xf32>
    %cst_116 = arith.constant dense<0.000000e+00> : vector<32x128xf32>
    %182 = tpu.matmul %172, %181, %cst_116 {dimension_numbers = #tpu.dot_dimension_numbers<[1], [0], [0], [1], [0, 0, 1, 1], [], []>} : vector<32x128xf32>, vector<128x128xf32>, vector<32x128xf32> -> vector<32x128xf32>
    %183 = arith.addf %179, %182 : vector<32x128xf32>
    %184 = arith.negf %183 : vector<32x128xf32>
    %185 = math.exp %184 : vector<32x128xf32>
    %cst_117 = arith.constant 1.000000e+00 : f32
    %186 = vector.broadcast %cst_117 : f32 to vector<32x128xf32>
    %187 = arith.addf %186, %185 : vector<32x128xf32>
    %188 = arith.divf %186, %187 : vector<32x128xf32>
    %189 = arith.mulf %130, %188 : vector<32x128xf32>
    %c0_118 = arith.constant 0 : index
    %c0_119 = arith.constant 0 : index
    %190 = vector.load %arg6[%c0_118, %c0_119] : memref<32x128xf32, #tpu.memory_space<vmem>>, vector<32x128xf32>
    tpu.vector_store %arg6[%c0_118, %c0_119], %189 {strides = array<i32>} : memref<32x128xf32, #tpu.memory_space<vmem>>, vector<32x128xf32>,
    return
  }
  func.func @transform_0(%arg0: i32) -> (i32, i32) {
    %c0_i32 = arith.constant 0 : i32
    %c0_i32_0 = arith.constant 0 : i32
    %c0_i32_1 = arith.constant 0 : i32
    return %c0_i32, %c0_i32_0 : i32, i32
  }
  func.func @transform_1(%arg0: i32) -> (i32, i32, i32, i32) {
    %c0_i32 = arith.constant 0 : i32
    %c0_i32_0 = arith.constant 0 : i32
    %c0_i32_1 = arith.constant 0 : i32
    %c0_i32_2 = arith.constant 0 : i32
    %c0_i32_3 = arith.constant 0 : i32
    return %c0_i32, %c0_i32_0, %c0_i32_1, %c0_i32_2 : i32, i32, i32, i32
  }
  func.func @transform_2(%arg0: i32) -> (i32, i32) {
    %c0_i32 = arith.constant 0 : i32
    %c0_i32_0 = arith.constant 0 : i32
    %c0_i32_1 = arith.constant 0 : i32
    return %c0_i32, %c0_i32_0 : i32, i32
  }
  func.func @transform_3(%arg0: i32) -> (i32, i32) {
    %c0_i32 = arith.constant 0 : i32
    %c0_i32_0 = arith.constant 0 : i32
    %c0_i32_1 = arith.constant 0 : i32
    return %c0_i32, %c0_i32_0 : i32, i32
  }
  func.func @transform_4(%arg0: i32) -> (i32, i32) {
    %c0_i32 = arith.constant 0 : i32
    %c0_i32_0 = arith.constant 0 : i32
    %c0_i32_1 = arith.constant 0 : i32
    return %c0_i32, %c0_i32_0 : i32, i32
  }
  func.func @transform_5(%arg0: i32) -> (i32, i32) {
    %c0_i32 = arith.constant 0 : i32
    %c0_i32_0 = arith.constant 0 : i32
    %c0_i32_1 = arith.constant 0 : i32
    return %c0_i32, %c0_i32_0 : i32, i32
  }
}

</mosaic_0001>

<llo_original>
// kernel: residual_block_type_b.1
$region0: #{residual_block_type_b.1}
  #allocation0 [shape = 'u32[]', space=smem, size = 0x4, offset = 0x4, fixed_abs, tag = 'smem constant byte address 0x4 - core index']
  #allocation1 [shape = 'u32[144,128]{1,0:T(1,128)}', space=vmem, size = 0x12000, scoped, tag = 'internal scratch']
  %s0 = inlined_call_operand.vmem [shape: f32[32,128], index: 0, kind: input, shape index: {}]
  %s1 = inlined_call_operand.hbm [shape: f32[4,3,128,128], index: 1, kind: input, shape index: {}]
  %s2 = inlined_call_operand.vmem [shape: f32[3,128], index: 2, kind: input, shape index: {}]
  %s3 = inlined_call_operand.vmem [shape: f32[3,128], index: 3, kind: input, shape index: {}]
  %s4 = inlined_call_operand.vmem [shape: f32[128,128], index: 4, kind: input, shape index: {}]
  %s5 = inlined_call_operand.vmem [shape: f32[32,128], index: 5, kind: output, shape index: {}]
  %s6 = sld [smem:[#allocation0]]
  $region34: #{residual_block_type_b.1} parent=0
    _
  %s8 = ssub.s32 1, %s6
  %s9 = scalar_select 0, %s8, %s6
  $region1: #{residual_block_type_b.1} parent=0
    #allocation2 [shape = 'u8[786432]{0}', space=vmem, size = 0xc0000, scoped, tag = 'input window, operand 1, single buffered']
    #allocation3 [shape = 's32[1]{0}', space=sflag, size = 0x4, scoped, tag = 'scoped memory for residual_block_type_b.1']
    %10 = vsyncpa [#allocation3], 0
    // Predicated region
    $region2: #{residual_block_type_b.1} parent=1 // pred_check
      _
    $region3: #{residual_block_type_b.1} parent=1 // pred_check_branch
      %12 = sbr.rel (0) target = $region5
    $region4: #{residual_block_type_b.1} parent=1 // pred_region
      _
    $region5: #{residual_block_type_b.1} parent=1 // pred_fallthru
      _
    // Predicated region
    $region6: #{residual_block_type_b.1} parent=1 // pred_check
      _
    $region7: #{residual_block_type_b.1} parent=1 // pred_check_branch
      %14 = sbr.rel (0) target = $region9
    $region8: #{residual_block_type_b.1} parent=1 // pred_region
      %s16 = ssub.s32 24576, 24576
      %17 = vsyncadd [#allocation3], %s16
      %s18 = sshll.u32 [#allocation2], 4
      %s19 = int_to_ptr.vmem [resolvable:$true] %s18
      %24 = dma.hbm_to_vmem [thread:$0]  %s1, 24576, %s19, [#allocation3], 128, 128, 8
    $region9: #{residual_block_type_b.1} parent=1 // pred_fallthru
      _
    // Predicated region
    $region10: #{residual_block_type_b.1} parent=1 // pred_check
      _
    $region11: #{residual_block_type_b.1} parent=1 // pred_check_branch
      %26 = sbr.rel (0) target = $region13
    $region12: #{residual_block_type_b.1} parent=1 // pred_region
      _
    $region13: #{residual_block_type_b.1} parent=1 // pred_fallthru
      _
    // Predicated region
    $region14: #{residual_block_type_b.1} parent=1 // pred_check
      _
    $region15: #{residual_block_type_b.1} parent=1 // pred_check_branch
      %28 = sbr.rel (0) target = $region17
    $region16: #{residual_block_type_b.1} parent=1 // pred_region
      _
    $region17: #{residual_block_type_b.1} parent=1 // pred_fallthru
      _
    // Predicated region
    $region18: #{residual_block_type_b.1} parent=1 // pred_check
      _
    $region19: #{residual_block_type_b.1} parent=1 // pred_check_branch
      %30 = sbr.rel (0) target = $region21
    $region20: #{residual_block_type_b.1} parent=1 // pred_region
      _
    $region21: #{residual_block_type_b.1} parent=1 // pred_fallthru
      _
    // Predicated region
    $region22: #{residual_block_type_b.1} parent=1 // pred_check
      _
    $region23: #{residual_block_type_b.1} parent=1 // pred_check_branch
      %32 = sbr.rel (0) target = $region25
    $region24: #{residual_block_type_b.1} parent=1 // pred_region
      %33 = dma.done [#allocation3], 24576
    $region25: #{residual_block_type_b.1} parent=1 // pred_fallthru
      _
    %v34 = vld [vmem:[%s0] sm:$0xff]
    %v35 = vld [vmem:[%s0 + $0x8] sm:$0xff]
    %v36 = vld [vmem:[%s0 + $0x10] sm:$0xff]
    %v37 = vld [vmem:[%s0 + $0x18] sm:$0xff]
    %v38 = vlaneseq
    %v39 = vshrl.u32 %v38, 7
    %v40 = vadd.s32 %v39, 8
    %v41 = vadd.s32 %v39, 16
    %v42 = vadd.s32 %v39, 24
    %v43 = vlaneseq
    %v44 = vand.u32 %v43, 127
    %v45 = vsub.s32 %v39, 1
    %v46 = vsub.s32 %v40, 1
    %v47 = vsub.s32 %v41, 1
    %v48 = vsub.s32 %v42, 1
    %vm49 = vcmp.eq.s32.totalorder %v44, %v45
    %vm50 = vcmp.eq.s32.totalorder %v44, %v46
    %vm51 = vcmp.eq.s32.totalorder %v44, %v47
    %vm52 = vcmp.eq.s32.totalorder %v44, %v48
    %vm53 = vcmp.lt.s32.totalorder %v39, 0
    %v54 = vsub.s32 0, %v39
    %v55 = vsel %vm53, %v54, %v39
    %v56 = vshrl.u32 %v55, 4
    %v57 = vand.u32 %v55, 15
    %v58 = vsub.s32 0, %v57
    %v59 = vsel %vm53, %v58, %v57
    %vm60 = vcmp.lt.s32.totalorder %v40, 0
    %v61 = vsub.s32 0, %v40
    %v62 = vsel %vm60, %v61, %v40
    %v63 = vshrl.u32 %v62, 4
    %v64 = vand.u32 %v62, 15
    %v65 = vsub.s32 0, %v64
    %v66 = vsel %vm60, %v65, %v64
    %vm67 = vcmp.lt.s32.totalorder %v41, 0
    %v68 = vsub.s32 0, %v41
    %v69 = vsel %vm67, %v68, %v41
    %v70 = vshrl.u32 %v69, 4
    %v71 = vand.u32 %v69, 15
    %v72 = vsub.s32 0, %v71
    %v73 = vsel %vm67, %v72, %v71
    %vm74 = vcmp.lt.s32.totalorder %v42, 0
    %v75 = vsub.s32 0, %v42
    %v76 = vsel %vm74, %v75, %v42
    %v77 = vshrl.u32 %v76, 4
    %v78 = vand.u32 %v76, 15
    %v79 = vsub.s32 0, %v78
    %v80 = vsel %vm74, %v79, %v78
    %vm81 = vcmp.ne.s32.totalorder %v59, 0
    %vm82 = vcmp.ne.s32.totalorder %v66, 0
    %vm83 = vcmp.ne.s32.totalorder %v73, 0
    %vm84 = vcmp.ne.s32.totalorder %v80, 0
    %vm85 = vcmp.lt.s32.totalorder %v59, 0
    %vm86 = vcmp.lt.s32.totalorder %v66, 0
    %vm87 = vcmp.lt.s32.totalorder %v73, 0
    %vm88 = vcmp.lt.s32.totalorder %v80, 0
    %vm89 = vmand %vm85, %vm81
    %vm90 = vmand %vm86, %vm82
    %vm91 = vmand %vm87, %vm83
    %vm92 = vmand %vm88, %vm84
    %v93 = vadd.s32 %v59, 16
    %v94 = vadd.s32 %v66, 16
    %v95 = vadd.s32 %v73, 16
    %v96 = vadd.s32 %v80, 16
    %v97 = vsel %vm89, %v93, %v59
    %v98 = vsel %vm90, %v94, %v66
    %v99 = vsel %vm91, %v95, %v73
    %v100 = vsel %vm92, %v96, %v80
    %vm101 = vcmp.ne.s32.totalorder %v97, 0
    %vm102 = vcmp.ne.s32.totalorder %v98, 0
    %vm103 = vcmp.ne.s32.totalorder %v99, 0
    %vm104 = vcmp.ne.s32.totalorder %v100, 0
    %vm105 = vmand %vm49, %vm101
    %vm106 = vmand %vm50, %vm102
    %vm107 = vmand %vm51, %vm103
    %vm108 = vmand %vm52, %vm104
    %v109 = vsel %vm105, 1.0, 0.0
    %v110 = vsel %vm106, 1.0, 0.0
    %v111 = vsel %vm107, 1.0, 0.0
    %v112 = vsel %vm108, 1.0, 0.0
    %v113 = vadd.s32 %v39, 1
    %v114 = vadd.s32 %v40, 1
    %v115 = vadd.s32 %v41, 1
    %v116 = vadd.s32 %v42, 1
    %vm117 = vcmp.eq.s32.totalorder %v44, %v113
    %vm118 = vcmp.eq.s32.totalorder %v44, %v114
    %vm119 = vcmp.eq.s32.totalorder %v44, %v115
    %vm120 = vcmp.eq.s32.totalorder %v44, %v116
    %vm121 = vcmp.ne.s32.totalorder %v97, 15
    %vm122 = vcmp.ne.s32.totalorder %v98, 15
    %vm123 = vcmp.ne.s32.totalorder %v99, 15
    %vm124 = vcmp.ne.s32.totalorder %v100, 15
    %vm125 = vmand %vm117, %vm121
    %vm126 = vmand %vm118, %vm122
    %vm127 = vmand %vm119, %vm123
    %vm128 = vmand %vm120, %vm124
    %v129 = vsel %vm125, 1.0, 0.0
    %v130 = vsel %vm126, 1.0, 0.0
    %v131 = vsel %vm127, 1.0, 0.0
    %v132 = vsel %vm128, 1.0, 0.0
    %v133 = vld [vmem:[%s4] sm:$0xff]
    %v134 = vld [vmem:[%s4 + $0x8] sm:$0xff]
    %v135 = vld [vmem:[%s4 + $0x10] sm:$0xff]
    %v136 = vld [vmem:[%s4 + $0x18] sm:$0xff]
    %v137 = vld [vmem:[%s4 + $0x20] sm:$0xff]
    %v138 = vld [vmem:[%s4 + $0x28] sm:$0xff]
    %v139 = vld [vmem:[%s4 + $0x30] sm:$0xff]
    %v140 = vld [vmem:[%s4 + $0x38] sm:$0xff]
    %v141 = vld [vmem:[%s4 + $0x40] sm:$0xff]
    %v142 = vld [vmem:[%s4 + $0x48] sm:$0xff]
    %v143 = vld [vmem:[%s4 + $0x50] sm:$0xff]
    %v144 = vld [vmem:[%s4 + $0x58] sm:$0xff]
    %v145 = vld [vmem:[%s4 + $0x60] sm:$0xff]
    %v146 = vld [vmem:[%s4 + $0x68] sm:$0xff]
    %v147 = vld [vmem:[%s4 + $0x70] sm:$0xff]
    %v148 = vld [vmem:[%s4 + $0x78] sm:$0xff]
    %vm149 = vcmask 261120
    %v151 = vsel %vm149, %v109, 0
    %v154 = vsel %vm149, %v110, 0
    %v157 = vsel %vm149, %v111, 0
    %v160 = vsel %vm149, %v112, 0
    %162 = vmatprep.subr.mxu0 0.0
    %163 = vmatpush1.msra.mxu0 %v34
    %164 = vmatprep.subr.mxu0 0.0
    %165 = vmatpush1.msra.mxu0 %v35
    %166 = vmatprep.subr.mxu0 0.0
    %167 = vmatpush1.msra.mxu0 %v36
    %168 = vmatprep.subr.mxu0 0.0
    %169 = vmatpush1.msra.mxu0 %v37
    %170 = vmatprep.subr.mxu0 0.0
    %171 = vmatpush1.msra.mxu0 0.0
    %172 = vmatprep.subr.mxu0 0.0
    %173 = vmatpush1.msra.mxu0 0.0
    %174 = vmatprep.subr.mxu0 0.0
    %175 = vmatpush1.msra.mxu0 0.0
    %176 = vmatprep.subr.mxu0 0.0
    %177 = vmatpush1.msra.mxu0 0.0
    %178 = vmatprep.subr.mxu0 0.0
    %179 = vmatpush1.msra.mxu0 0.0
    %180 = vmatprep.subr.mxu0 0.0
    %181 = vmatpush1.msra.mxu0 0.0
    %182 = vmatprep.subr.mxu0 0.0
    %183 = vmatpush1.msra.mxu0 0.0
    %184 = vmatprep.subr.mxu0 0.0
    %185 = vmatpush1.msra.mxu0 0.0
    %186 = vmatprep.subr.mxu0 0.0
    %187 = vmatpush1.msra.mxu0 0.0
    %188 = vmatprep.subr.mxu0 0.0
    %189 = vmatpush1.msra.mxu0 0.0
    %190 = vmatprep.subr.mxu0 0.0
    %191 = vmatpush1.msra.mxu0 0.0
    %192 = vmatprep.subr.mxu0 0.0
    %193 = vmatpush1.msra.mxu0 0.0
    %194 = vmatprep.subr.mxu0 0.0
    %195 = vmatpush1.msra.mxu0 0.0
    %196 = vmatprep.subr.mxu0 0.0
    %197 = vmatpush1.msra.mxu0 0.0
    %198 = vmatprep.subr.mxu0 0.0
    %199 = vmatpush1.msra.mxu0 0.0
    %200 = vmatprep.subr.mxu0 0.0
    %201 = vmatpush1.msra.mxu0 0.0
    %202 = vmatprep.subr.mxu0 0.0
    %203 = vmatpush1.msra.mxu0 0.0
    %204 = vmatprep.subr.mxu0 0.0
    %205 = vmatpush1.msra.mxu0 0.0
    %206 = vmatprep.subr.mxu0 0.0
    %207 = vmatpush1.msra.mxu0 0.0
    %208 = vmatprep.subr.mxu0 0.0
    %209 = vmatpush1.msra.mxu0 0.0
    %210 = vmatprep.subr.mxu0 0.0
    %211 = vmatpush1.msra.mxu0 0.0
    %212 = vmatprep.subr.mxu0 0.0
    %213 = vmatpush1.msra.mxu0 0.0
    %214 = vmatprep.subr.mxu0 0.0
    %215 = vmatpush1.msra.mxu0 0.0
    %216 = vmatprep.subr.mxu0 0.0
    %217 = vmatpush1.msra.mxu0 0.0
    %218 = vmatprep.subr.mxu0 0.0
    %219 = vmatpush1.msra.mxu0 0.0
    %220 = vmatprep.subr.mxu0 0.0
    %221 = vmatpush1.msra.mxu0 0.0
    %222 = vmatprep.subr.mxu0 0.0
    %223 = vmatpush1.msra.mxu0 0.0
    %224 = vmatprep.subr.mxu0 0.0
    %225 = vmatpush1.msra.mxu0 0.0
    %226 = vmatprep.mubr.f32.mxu0 0.0
    %227 = vmatmul.mubr.f32.gmra.mrb[0].mxu0 %v151
    %v228 = vpop.f32.mrb[0].mxu0
    %v229 = vadd.f32 0.0, %v228
    %v230 = vpop.f32.mrb[0].mxu0
    %231 = vmatprep.mubr.f32.mxu0 0.0
    %232 = vmatmul.mubr.f32.gmra.mrb[0].mxu0 %v154
    %v233 = vpop.f32.mrb[0].mxu0
    %v234 = vadd.f32 0.0, %v233
    %v235 = vpop.f32.mrb[0].mxu0
    %236 = vmatprep.mubr.f32.mxu0 0.0
    %237 = vmatmul.mubr.f32.gmra.mrb[0].mxu0 %v157
    %v238 = vpop.f32.mrb[0].mxu0
    %v239 = vadd.f32 0.0, %v238
    %v240 = vpop.f32.mrb[0].mxu0
    %241 = vmatprep.mubr.f32.mxu0 0.0
    %242 = vmatmul.mubr.f32.gmra.mrb[0].mxu0 %v160
    %v243 = vpop.f32.mrb[0].mxu0
    %v244 = vadd.f32 0.0, %v243
    %v245 = vpop.f32.mrb[0].mxu0
    %246 = vdwg.mxu0
    %v248 = vsel %vm149, %v129, 0
    %v251 = vsel %vm149, %v130, 0
    %v254 = vsel %vm149, %v131, 0
    %v257 = vsel %vm149, %v132, 0
    %259 = vmatprep.subr.mxu0 0.0
    %260 = vmatpush1.msra.mxu0 %v34
    %261 = vmatprep.subr.mxu0 0.0
    %262 = vmatpush1.msra.mxu0 %v35
    %263 = vmatprep.subr.mxu0 0.0
    %264 = vmatpush1.msra.mxu0 %v36
    %265 = vmatprep.subr.mxu0 0.0
    %266 = vmatpush1.msra.mxu0 %v37
    %267 = vmatprep.subr.mxu0 0.0
    %268 = vmatpush1.msra.mxu0 0.0
    %269 = vmatprep.subr.mxu0 0.0
    %270 = vmatpush1.msra.mxu0 0.0
    %271 = vmatprep.subr.mxu0 0.0
    %272 = vmatpush1.msra.mxu0 0.0
    %273 = vmatprep.subr.mxu0 0.0
    %274 = vmatpush1.msra.mxu0 0.0
    %275 = vmatprep.subr.mxu0 0.0
    %276 = vmatpush1.msra.mxu0 0.0
    %277 = vmatprep.subr.mxu0 0.0
    %278 = vmatpush1.msra.mxu0 0.0
    %279 = vmatprep.subr.mxu0 0.0
    %280 = vmatpush1.msra.mxu0 0.0
    %281 = vmatprep.subr.mxu0 0.0
    %282 = vmatpush1.msra.mxu0 0.0
    %283 = vmatprep.subr.mxu0 0.0
    %284 = vmatpush1.msra.mxu0 0.0
    %285 = vmatprep.subr.mxu0 0.0
    %286 = vmatpush1.msra.mxu0 0.0
    %287 = vmatprep.subr.mxu0 0.0
    %288 = vmatpush1.msra.mxu0 0.0
    %289 = vmatprep.subr.mxu0 0.0
    %290 = vmatpush1.msra.mxu0 0.0
    %291 = vmatprep.subr.mxu0 0.0
    %292 = vmatpush1.msra.mxu0 0.0
    %293 = vmatprep.subr.mxu0 0.0
    %294 = vmatpush1.msra.mxu0 0.0
    %295 = vmatprep.subr.mxu0 0.0
    %296 = vmatpush1.msra.mxu0 0.0
    %297 = vmatprep.subr.mxu0 0.0
    %298 = vmatpush1.msra.mxu0 0.0
    %299 = vmatprep.subr.mxu0 0.0
    %300 = vmatpush1.msra.mxu0 0.0
    %301 = vmatprep.subr.mxu0 0.0
    %302 = vmatpush1.msra.mxu0 0.0
    %303 = vmatprep.subr.mxu0 0.0
    %304 = vmatpush1.msra.mxu0 0.0
    %305 = vmatprep.subr.mxu0 0.0
    %306 = vmatpush1.msra.mxu0 0.0
    %307 = vmatprep.subr.mxu0 0.0
    %308 = vmatpush1.msra.mxu0 0.0
    %309 = vmatprep.subr.mxu0 0.0
    %310 = vmatpush1.msra.mxu0 0.0
    %311 = vmatprep.subr.mxu0 0.0
    %312 = vmatpush1.msra.mxu0 0.0
    %313 = vmatprep.subr.mxu0 0.0
    %314 = vmatpush1.msra.mxu0 0.0
    %315 = vmatprep.subr.mxu0 0.0
    %316 = vmatpush1.msra.mxu0 0.0
    %317 = vmatprep.subr.mxu0 0.0
    %318 = vmatpush1.msra.mxu0 0.0
    %319 = vmatprep.subr.mxu0 0.0
    %320 = vmatpush1.msra.mxu0 0.0
    %321 = vmatprep.subr.mxu0 0.0
    %322 = vmatpush1.msra.mxu0 0.0
    %323 = vmatprep.mubr.f32.mxu0 0.0
    %324 = vmatmul.mubr.f32.gmra.mrb[0].mxu0 %v248
    %v325 = vpop.f32.mrb[0].mxu0
    %v326 = vadd.f32 0.0, %v325
    %v327 = vpop.f32.mrb[0].mxu0
    %328 = vmatprep.mubr.f32.mxu0 0.0
    %329 = vmatmul.mubr.f32.gmra.mrb[0].mxu0 %v251
    %v330 = vpop.f32.mrb[0].mxu0
    %v331 = vadd.f32 0.0, %v330
    %v332 = vpop.f32.mrb[0].mxu0
    %333 = vmatprep.mubr.f32.mxu0 0.0
    %334 = vmatmul.mubr.f32.gmra.mrb[0].mxu0 %v254
    %v335 = vpop.f32.mrb[0].mxu0
    %v336 = vadd.f32 0.0, %v335
    %v337 = vpop.f32.mrb[0].mxu0
    %338 = vmatprep.mubr.f32.mxu0 0.0
    %339 = vmatmul.mubr.f32.gmra.mrb[0].mxu0 %v257
    %v340 = vpop.f32.mrb[0].mxu0
    %v341 = vadd.f32 0.0, %v340
    %v342 = vpop.f32.mrb[0].mxu0
    %343 = vdwg.mxu0
    %v344 = vld [vmem:[#allocation2] sm:$0xff]
    %v345 = vld [vmem:[#allocation2 + $0x8] sm:$0xff]
    %v346 = vld [vmem:[#allocation2 + $0x10] sm:$0xff]
    %v347 = vld [vmem:[#allocation2 + $0x18] sm:$0xff]
    %v348 = vld [vmem:[#allocation2 + $0x20] sm:$0xff]
    %v349 = vld [vmem:[#allocation2 + $0x28] sm:$0xff]
    %v350 = vld [vmem:[#allocation2 + $0x30] sm:$0xff]
    %v351 = vld [vmem:[#allocation2 + $0x38] sm:$0xff]
    %v352 = vld [vmem:[#allocation2 + $0x40] sm:$0xff]
    %v353 = vld [vmem:[#allocation2 + $0x48] sm:$0xff]
    %v354 = vld [vmem:[#allocation2 + $0x50] sm:$0xff]
    %v355 = vld [vmem:[#allocation2 + $0x58] sm:$0xff]
    %v356 = vld [vmem:[#allocation2 + $0x60] sm:$0xff]
    %v357 = vld [vmem:[#allocation2 + $0x68] sm:$0xff]
    %v358 = vld [vmem:[#allocation2 + $0x70] sm:$0xff]
    %v359 = vld [vmem:[#allocation2 + $0x78] sm:$0xff]
    %s360 = scalar_lea.vmem [#allocation2], 128
    %v361 = vld [vmem:[%s360] sm:$0xff]
    %v362 = vld [vmem:[%s360 + $0x8] sm:$0xff]
    %v363 = vld [vmem:[%s360 + $0x10] sm:$0xff]
    %v364 = vld [vmem:[%s360 + $0x18] sm:$0xff]
    %v365 = vld [vmem:[%s360 + $0x20] sm:$0xff]
    %v366 = vld [vmem:[%s360 + $0x28] sm:$0xff]
    %v367 = vld [vmem:[%s360 + $0x30] sm:$0xff]
    %v368 = vld [vmem:[%s360 + $0x38] sm:$0xff]
    %v369 = vld [vmem:[%s360 + $0x40] sm:$0xff]
    %v370 = vld [vmem:[%s360 + $0x48] sm:$0xff]
    %v371 = vld [vmem:[%s360 + $0x50] sm:$0xff]
    %v372 = vld [vmem:[%s360 + $0x58] sm:$0xff]
    %v373 = vld [vmem:[%s360 + $0x60] sm:$0xff]
    %v374 = vld [vmem:[%s360 + $0x68] sm:$0xff]
    %v375 = vld [vmem:[%s360 + $0x70] sm:$0xff]
    %v376 = vld [vmem:[%s360 + $0x78] sm:$0xff]
    %377 = vmatprep.subr.mxu0 0.0
    %378 = vmatpush1.msra.mxu0 %v361
    %379 = vmatprep.subr.mxu0 0.0
    %380 = vmatpush1.msra.mxu0 %v362
    %381 = vmatprep.subr.mxu0 0.0
    %382 = vmatpush1.msra.mxu0 %v363
    %383 = vmatprep.subr.mxu0 0.0
    %384 = vmatpush1.msra.mxu0 %v364
    %385 = vmatprep.subr.mxu0 0.0
    %386 = vmatpush1.msra.mxu0 %v365
    %387 = vmatprep.subr.mxu0 0.0
    %388 = vmatpush1.msra.mxu0 %v366
    %389 = vmatprep.subr.mxu0 0.0
    %390 = vmatpush1.msra.mxu0 %v367
    %391 = vmatprep.subr.mxu0 0.0
    %392 = vmatpush1.msra.mxu0 %v368
    %393 = vmatprep.subr.mxu0 0.0
    %394 = vmatpush1.msra.mxu0 %v369
    %395 = vmatprep.subr.mxu0 0.0
    %396 = vmatpush1.msra.mxu0 %v370
    %397 = vmatprep.subr.mxu0 0.0
    %398 = vmatpush1.msra.mxu0 %v371
    %399 = vmatprep.subr.mxu0 0.0
    %400 = vmatpush1.msra.mxu0 %v372
    %401 = vmatprep.subr.mxu0 0.0
    %402 = vmatpush1.msra.mxu0 %v373
    %403 = vmatprep.subr.mxu0 0.0
    %404 = vmatpush1.msra.mxu0 %v374
    %405 = vmatprep.subr.mxu0 0.0
    %406 = vmatpush1.msra.mxu0 %v375
    %407 = vmatprep.subr.mxu0 0.0
    %408 = vmatpush1.msra.mxu0 %v376
    %409 = vmatprep.subr.mxu0 0.0
    %410 = vmatpush1.msra.mxu0 0.0
    %411 = vmatprep.subr.mxu0 0.0
    %412 = vmatpush1.msra.mxu0 0.0
    %413 = vmatprep.subr.mxu0 0.0
    %414 = vmatpush1.msra.mxu0 0.0
    %415 = vmatprep.subr.mxu0 0.0
    %416 = vmatpush1.msra.mxu0 0.0
    %417 = vmatprep.subr.mxu0 0.0
    %418 = vmatpush1.msra.mxu0 0.0
    %419 = vmatprep.subr.mxu0 0.0
    %420 = vmatpush1.msra.mxu0 0.0
    %421 = vmatprep.subr.mxu0 0.0
    %422 = vmatpush1.msra.mxu0 0.0
    %423 = vmatprep.subr.mxu0 0.0
    %424 = vmatpush1.msra.mxu0 0.0
    %425 = vmatprep.subr.mxu0 0.0
    %426 = vmatpush1.msra.mxu0 0.0
    %427 = vmatprep.subr.mxu0 0.0
    %428 = vmatpush1.msra.mxu0 0.0
    %429 = vmatprep.subr.mxu0 0.0
    %430 = vmatpush1.msra.mxu0 0.0
    %431 = vmatprep.subr.mxu0 0.0
    %432 = vmatpush1.msra.mxu0 0.0
    %433 = vmatprep.subr.mxu0 0.0
    %434 = vmatpush1.msra.mxu0 0.0
    %435 = vmatprep.subr.mxu0 0.0
    %436 = vmatpush1.msra.mxu0 0.0
    %437 = vmatprep.subr.mxu0 0.0
    %438 = vmatpush1.msra.mxu0 0.0
    %439 = vmatprep.subr.mxu0 0.0
    %440 = vmatpush1.msra.mxu0 0.0
    %441 = vmatprep.mubr.f32.mxu0 0.0
    %442 = vmatmul.mubr.f32.gmra.mrb[0].mxu0 %v34
    %v443 = vpop.f32.mrb[0].mxu0
    %v444 = vadd.f32 0.0, %v443
    %v445 = vpop.f32.mrb[0].mxu0
    %446 = vmatprep.mubr.f32.mxu0 0.0
    %447 = vmatmul.mubr.f32.gmra.mrb[0].mxu0 %v35
    %v448 = vpop.f32.mrb[0].mxu0
    %v449 = vadd.f32 0.0, %v448
    %v450 = vpop.f32.mrb[0].mxu0
    %451 = vmatprep.mubr.f32.mxu0 0.0
    %452 = vmatmul.mubr.f32.gmra.mrb[0].mxu0 %v36
    %v453 = vpop.f32.mrb[0].mxu0
    %v454 = vadd.f32 0.0, %v453
    %v455 = vpop.f32.mrb[0].mxu0
    %456 = vmatprep.mubr.f32.mxu0 0.0
    %457 = vmatmul.mubr.f32.gmra.mrb[0].mxu0 %v37
    %v458 = vpop.f32.mrb[0].mxu0
    %v459 = vadd.f32 0.0, %v458
    %v460 = vpop.f32.mrb[0].mxu0
    %461 = vdwg.mxu0
    %462 = vmatprep.subr.mxu0 0.0
    %463 = vmatpush1.msra.mxu0 %v344
    %464 = vmatprep.subr.mxu0 0.0
    %465 = vmatpush1.msra.mxu0 %v345
    %466 = vmatprep.subr.mxu0 0.0
    %467 = vmatpush1.msra.mxu0 %v346
    %468 = vmatprep.subr.mxu0 0.0
    %469 = vmatpush1.msra.mxu0 %v347
    %470 = vmatprep.subr.mxu0 0.0
    %471 = vmatpush1.msra.mxu0 %v348
    %472 = vmatprep.subr.mxu0 0.0
    %473 = vmatpush1.msra.mxu0 %v349
    %474 = vmatprep.subr.mxu0 0.0
    %475 = vmatpush1.msra.mxu0 %v350
    %476 = vmatprep.subr.mxu0 0.0
    %477 = vmatpush1.msra.mxu0 %v351
    %478 = vmatprep.subr.mxu0 0.0
    %479 = vmatpush1.msra.mxu0 %v352
    %480 = vmatprep.subr.mxu0 0.0
    %481 = vmatpush1.msra.mxu0 %v353
    %482 = vmatprep.subr.mxu0 0.0
    %483 = vmatpush1.msra.mxu0 %v354
    %484 = vmatprep.subr.mxu0 0.0
    %485 = vmatpush1.msra.mxu0 %v355
    %486 = vmatprep.subr.mxu0 0.0
    %487 = vmatpush1.msra.mxu0 %v356
    %488 = vmatprep.subr.mxu0 0.0
    %489 = vmatpush1.msra.mxu0 %v357
    %490 = vmatprep.subr.mxu0 0.0
    %491 = vmatpush1.msra.mxu0 %v358
    %492 = vmatprep.subr.mxu0 0.0
    %493 = vmatpush1.msra.mxu0 %v359
    %494 = vmatprep.subr.mxu0 0.0
    %495 = vmatpush1.msra.mxu0 0.0
    %496 = vmatprep.subr.mxu0 0.0
    %497 = vmatpush1.msra.mxu0 0.0
    %498 = vmatprep.subr.mxu0 0.0
    %499 = vmatpush1.msra.mxu0 0.0
    %500 = vmatprep.subr.mxu0 0.0
    %501 = vmatpush1.msra.mxu0 0.0
    %502 = vmatprep.subr.mxu0 0.0
    %503 = vmatpush1.msra.mxu0 0.0
    %504 = vmatprep.subr.mxu0 0.0
    %505 = vmatpush1.msra.mxu0 0.0
    %506 = vmatprep.subr.mxu0 0.0
    %507 = vmatpush1.msra.mxu0 0.0
    %508 = vmatprep.subr.mxu0 0.0
    %509 = vmatpush1.msra.mxu0 0.0
    %510 = vmatprep.subr.mxu0 0.0
    %511 = vmatpush1.msra.mxu0 0.0
    %512 = vmatprep.subr.mxu0 0.0
    %513 = vmatpush1.msra.mxu0 0.0
    %514 = vmatprep.subr.mxu0 0.0
    %515 = vmatpush1.msra.mxu0 0.0
    %516 = vmatprep.subr.mxu0 0.0
    %517 = vmatpush1.msra.mxu0 0.0
    %518 = vmatprep.subr.mxu0 0.0
    %519 = vmatpush1.msra.mxu0 0.0
    %520 = vmatprep.subr.mxu0 0.0
    %521 = vmatpush1.msra.mxu0 0.0
    %522 = vmatprep.subr.mxu0 0.0
    %523 = vmatpush1.msra.mxu0 0.0
    %524 = vmatprep.subr.mxu0 0.0
    %525 = vmatpush1.msra.mxu0 0.0
    %526 = vmatprep.mubr.f32.mxu0 0.0
    %527 = vmatmul.mubr.f32.gmra.mrb[0].mxu0 %v229
    %v528 = vpop.f32.mrb[0].mxu0
    %v529 = vadd.f32 %v444, %v528
    %v530 = vpop.f32.mrb[0].mxu0
    %531 = vmatprep.mubr.f32.mxu0 0.0
    %532 = vmatmul.mubr.f32.gmra.mrb[0].mxu0 %v234
    %v533 = vpop.f32.mrb[0].mxu0
    %v534 = vadd.f32 %v449, %v533
    %v535 = vpop.f32.mrb[0].mxu0
    %536 = vmatprep.mubr.f32.mxu0 0.0
    %537 = vmatmul.mubr.f32.gmra.mrb[0].mxu0 %v239
    %v538 = vpop.f32.mrb[0].mxu0
    %v539 = vadd.f32 %v454, %v538
    %v540 = vpop.f32.mrb[0].mxu0
    %541 = vmatprep.mubr.f32.mxu0 0.0
    %542 = vmatmul.mubr.f32.gmra.mrb[0].mxu0 %v244
    %v543 = vpop.f32.mrb[0].mxu0
    %v544 = vadd.f32 %v459, %v543
    %v545 = vpop.f32.mrb[0].mxu0
    %546 = vdwg.mxu0
    %s547 = scalar_lea.vmem [#allocation2], 256
    %v548 = vld [vmem:[%s547] sm:$0xff]
    %v549 = vld [vmem:[%s547 + $0x8] sm:$0xff]
    %v550 = vld [vmem:[%s547 + $0x10] sm:$0xff]
    %v551 = vld [vmem:[%s547 + $0x18] sm:$0xff]
    %v552 = vld [vmem:[%s547 + $0x20] sm:$0xff]
    %v553 = vld [vmem:[%s547 + $0x28] sm:$0xff]
    %v554 = vld [vmem:[%s547 + $0x30] sm:$0xff]
    %v555 = vld [vmem:[%s547 + $0x38] sm:$0xff]
    %v556 = vld [vmem:[%s547 + $0x40] sm:$0xff]
    %v557 = vld [vmem:[%s547 + $0x48] sm:$0xff]
    %v558 = vld [vmem:[%s547 + $0x50] sm:$0xff]
    %v559 = vld [vmem:[%s547 + $0x58] sm:$0xff]
    %v560 = vld [vmem:[%s547 + $0x60] sm:$0xff]
    %v561 = vld [vmem:[%s547 + $0x68] sm:$0xff]
    %v562 = vld [vmem:[%s547 + $0x70] sm:$0xff]
    %v563 = vld [vmem:[%s547 + $0x78] sm:$0xff]
    %564 = vmatprep.subr.mxu0 0.0
    %565 = vmatpush1.msra.mxu0 %v548
    %566 = vmatprep.subr.mxu0 0.0
    %567 = vmatpush1.msra.mxu0 %v549
    %568 = vmatprep.subr.mxu0 0.0
    %569 = vmatpush1.msra.mxu0 %v550
    %570 = vmatprep.subr.mxu0 0.0
    %571 = vmatpush1.msra.mxu0 %v551
    %572 = vmatprep.subr.mxu0 0.0
    %573 = vmatpush1.msra.mxu0 %v552
    %574 = vmatprep.subr.mxu0 0.0
    %575 = vmatpush1.msra.mxu0 %v553
    %576 = vmatprep.subr.mxu0 0.0
    %577 = vmatpush1.msra.mxu0 %v554
    %578 = vmatprep.subr.mxu0 0.0
    %579 = vmatpush1.msra.mxu0 %v555
    %580 = vmatprep.subr.mxu0 0.0
    %581 = vmatpush1.msra.mxu0 %v556
    %582 = vmatprep.subr.mxu0 0.0
    %583 = vmatpush1.msra.mxu0 %v557
    %584 = vmatprep.subr.mxu0 0.0
    %585 = vmatpush1.msra.mxu0 %v558
    %586 = vmatprep.subr.mxu0 0.0
    %587 = vmatpush1.msra.mxu0 %v559
    %588 = vmatprep.subr.mxu0 0.0
    %589 = vmatpush1.msra.mxu0 %v560
    %590 = vmatprep.subr.mxu0 0.0
    %591 = vmatpush1.msra.mxu0 %v561
    %592 = vmatprep.subr.mxu0 0.0
    %593 = vmatpush1.msra.mxu0 %v562
    %594 = vmatprep.subr.mxu0 0.0
    %595 = vmatpush1.msra.mxu0 %v563
    %596 = vmatprep.subr.mxu0 0.0
    %597 = vmatpush1.msra.mxu0 0.0
    %598 = vmatprep.subr.mxu0 0.0
    %599 = vmatpush1.msra.mxu0 0.0
    %600 = vmatprep.subr.mxu0 0.0
    %601 = vmatpush1.msra.mxu0 0.0
    %602 = vmatprep.subr.mxu0 0.0
    %603 = vmatpush1.msra.mxu0 0.0
    %604 = vmatprep.subr.mxu0 0.0
    %605 = vmatpush1.msra.mxu0 0.0
    %606 = vmatprep.subr.mxu0 0.0
    %607 = vmatpush1.msra.mxu0 0.0
    %608 = vmatprep.subr.mxu0 0.0
    %609 = vmatpush1.msra.mxu0 0.0
    %610 = vmatprep.subr.mxu0 0.0
    %611 = vmatpush1.msra.mxu0 0.0
    %612 = vmatprep.subr.mxu0 0.0
    %613 = vmatpush1.msra.mxu0 0.0
    %614 = vmatprep.subr.mxu0 0.0
    %615 = vmatpush1.msra.mxu0 0.0
    %616 = vmatprep.subr.mxu0 0.0
    %617 = vmatpush1.msra.mxu0 0.0
    %618 = vmatprep.subr.mxu0 0.0
    %619 = vmatpush1.msra.mxu0 0.0
    %620 = vmatprep.subr.mxu0 0.0
    %621 = vmatpush1.msra.mxu0 0.0
    %622 = vmatprep.subr.mxu0 0.0
    %623 = vmatpush1.msra.mxu0 0.0
    %624 = vmatprep.subr.mxu0 0.0
    %625 = vmatpush1.msra.mxu0 0.0
    %626 = vmatprep.subr.mxu0 0.0
    %627 = vmatpush1.msra.mxu0 0.0
    %628 = vmatprep.mubr.f32.mxu0 0.0
    %629 = vmatmul.mubr.f32.gmra.mrb[0].mxu0 %v326
    %v630 = vpop.f32.mrb[0].mxu0
    %v631 = vadd.f32 0.0, %v630
    %v632 = vpop.f32.mrb[0].mxu0
    %633 = vmatprep.mubr.f32.mxu0 0.0
    %634 = vmatmul.mubr.f32.gmra.mrb[0].mxu0 %v331
    %v635 = vpop.f32.mrb[0].mxu0
    %v636 = vadd.f32 0.0, %v635
    %v637 = vpop.f32.mrb[0].mxu0
    %638 = vmatprep.mubr.f32.mxu0 0.0
    %639 = vmatmul.mubr.f32.gmra.mrb[0].mxu0 %v336
    %v640 = vpop.f32.mrb[0].mxu0
    %v641 = vadd.f32 0.0, %v640
    %v642 = vpop.f32.mrb[0].mxu0
    %643 = vmatprep.mubr.f32.mxu0 0.0
    %644 = vmatmul.mubr.f32.gmra.mrb[0].mxu0 %v341
    %v645 = vpop.f32.mrb[0].mxu0
    %v646 = vadd.f32 0.0, %v645
    %v647 = vpop.f32.mrb[0].mxu0
    %648 = vdwg.mxu0
    %v649 = vadd.f32 %v529, %v631
    %v650 = vadd.f32 %v534, %v636
    %v651 = vadd.f32 %v539, %v641
    %v652 = vadd.f32 %v544, %v646
    %653 = vmatprep.subr.mxu0 0.0
    %654 = vmatpush1.msra.mxu0 %v133
    %655 = vmatprep.subr.mxu0 0.0
    %656 = vmatpush1.msra.mxu0 %v134
    %657 = vmatprep.subr.mxu0 0.0
    %658 = vmatpush1.msra.mxu0 %v135
    %659 = vmatprep.subr.mxu0 0.0
    %660 = vmatpush1.msra.mxu0 %v136
    %661 = vmatprep.subr.mxu0 0.0
    %662 = vmatpush1.msra.mxu0 %v137
    %663 = vmatprep.subr.mxu0 0.0
    %664 = vmatpush1.msra.mxu0 %v138
    %665 = vmatprep.subr.mxu0 0.0
    %666 = vmatpush1.msra.mxu0 %v139
    %667 = vmatprep.subr.mxu0 0.0
    %668 = vmatpush1.msra.mxu0 %v140
    %669 = vmatprep.subr.mxu0 0.0
    %670 = vmatpush1.msra.mxu0 %v141
    %671 = vmatprep.subr.mxu0 0.0
    %672 = vmatpush1.msra.mxu0 %v142
    %673 = vmatprep.subr.mxu0 0.0
    %674 = vmatpush1.msra.mxu0 %v143
    %675 = vmatprep.subr.mxu0 0.0
    %676 = vmatpush1.msra.mxu0 %v144
    %677 = vmatprep.subr.mxu0 0.0
    %678 = vmatpush1.msra.mxu0 %v145
    %679 = vmatprep.subr.mxu0 0.0
    %680 = vmatpush1.msra.mxu0 %v146
    %681 = vmatprep.subr.mxu0 0.0
    %682 = vmatpush1.msra.mxu0 %v147
    %683 = vmatprep.subr.mxu0 0.0
    %684 = vmatpush1.msra.mxu0 %v148
    %685 = vmatprep.subr.mxu0 0.0
    %686 = vmatpush1.msra.mxu0 0.0
    %687 = vmatprep.subr.mxu0 0.0
    %688 = vmatpush1.msra.mxu0 0.0
    %689 = vmatprep.subr.mxu0 0.0
    %690 = vmatpush1.msra.mxu0 0.0
    %691 = vmatprep.subr.mxu0 0.0
    %692 = vmatpush1.msra.mxu0 0.0
    %693 = vmatprep.subr.mxu0 0.0
    %694 = vmatpush1.msra.mxu0 0.0
    %695 = vmatprep.subr.mxu0 0.0
    %696 = vmatpush1.msra.mxu0 0.0
    %697 = vmatprep.subr.mxu0 0.0
    %698 = vmatpush1.msra.mxu0 0.0
    %699 = vmatprep.subr.mxu0 0.0
    %700 = vmatpush1.msra.mxu0 0.0
    %701 = vmatprep.subr.mxu0 0.0
    %702 = vmatpush1.msra.mxu0 0.0
    %703 = vmatprep.subr.mxu0 0.0
    %704 = vmatpush1.msra.mxu0 0.0
    %705 = vmatprep.subr.mxu0 0.0
    %706 = vmatpush1.msra.mxu0 0.0
    %707 = vmatprep.subr.mxu0 0.0
    %708 = vmatpush1.msra.mxu0 0.0
    %709 = vmatprep.subr.mxu0 0.0
    %710 = vmatpush1.msra.mxu0 0.0
    %711 = vmatprep.subr.mxu0 0.0
    %712 = vmatpush1.msra.mxu0 0.0
    %713 = vmatprep.subr.mxu0 0.0
    %714 = vmatpush1.msra.mxu0 0.0
    %715 = vmatprep.subr.mxu0 0.0
    %716 = vmatpush1.msra.mxu0 0.0
    %717 = vmatprep.mubr.f32.mxu0 0.0
    %718 = vmatmul.mubr.f32.gmra.mrb[0].mxu0 %v649
    %v719 = vpop.f32.mrb[0].mxu0
    %v720 = vadd.f32 0.0, %v719
    %v721 = vpop.f32.mrb[0].mxu0
    %722 = vmatprep.mubr.f32.mxu0 0.0
    %723 = vmatmul.mubr.f32.gmra.mrb[0].mxu0 %v650
    %v724 = vpop.f32.mrb[0].mxu0
    %v725 = vadd.f32 0.0, %v724
    %v726 = vpop.f32.mrb[0].mxu0
    %727 = vmatprep.mubr.f32.mxu0 0.0
    %728 = vmatmul.mubr.f32.gmra.mrb[0].mxu0 %v651
    %v729 = vpop.f32.mrb[0].mxu0
    %v730 = vadd.f32 0.0, %v729
    %v731 = vpop.f32.mrb[0].mxu0
    %732 = vmatprep.mubr.f32.mxu0 0.0
    %733 = vmatmul.mubr.f32.gmra.mrb[0].mxu0 %v652
    %v734 = vpop.f32.mrb[0].mxu0
    %v735 = vadd.f32 0.0, %v734
    %v736 = vpop.f32.mrb[0].mxu0
    %737 = vdwg.mxu0
    %v738 = vadd.f32 %v720, %v725
    %v739 = vadd.f32 %v738, %v730
    %v740 = vadd.f32 %v739, %v735
    %v741 = vrot.slane %v740, 4
    %v742 = vadd.f32 %v740, %v741
    %v743 = vrot.slane %v742, 2
    %v744 = vadd.f32 %v742, %v743
    %v745 = vrot.slane %v744, 1
    %v746 = vadd.f32 %v744, %v745
    %v747 = vmul.f32 %v746, 0.001953125
    %v748 = vsub.f32 %v649, %v747
    %v749 = vsub.f32 %v650, %v747
    %v750 = vsub.f32 %v651, %v747
    %v751 = vsub.f32 %v652, %v747
    %v752 = vmul.f32 %v748, %v748
    %v753 = vmul.f32 %v749, %v749
    %v754 = vmul.f32 %v750, %v750
    %v755 = vmul.f32 %v751, %v751
    %756 = vmatprep.subr.mxu0 0.0
    %757 = vmatpush1.msra.mxu0 %v133
    %758 = vmatprep.subr.mxu0 0.0
    %759 = vmatpush1.msra.mxu0 %v134
    %760 = vmatprep.subr.mxu0 0.0
    %761 = vmatpush1.msra.mxu0 %v135
    %762 = vmatprep.subr.mxu0 0.0
    %763 = vmatpush1.msra.mxu0 %v136
    %764 = vmatprep.subr.mxu0 0.0
    %765 = vmatpush1.msra.mxu0 %v137
    %766 = vmatprep.subr.mxu0 0.0
    %767 = vmatpush1.msra.mxu0 %v138
    %768 = vmatprep.subr.mxu0 0.0
    %769 = vmatpush1.msra.mxu0 %v139
    %770 = vmatprep.subr.mxu0 0.0
    %771 = vmatpush1.msra.mxu0 %v140
    %772 = vmatprep.subr.mxu0 0.0
    %773 = vmatpush1.msra.mxu0 %v141
    %774 = vmatprep.subr.mxu0 0.0
    %775 = vmatpush1.msra.mxu0 %v142
    %776 = vmatprep.subr.mxu0 0.0
    %777 = vmatpush1.msra.mxu0 %v143
    %778 = vmatprep.subr.mxu0 0.0
    %779 = vmatpush1.msra.mxu0 %v144
    %780 = vmatprep.subr.mxu0 0.0
    %781 = vmatpush1.msra.mxu0 %v145
    %782 = vmatprep.subr.mxu0 0.0
    %783 = vmatpush1.msra.mxu0 %v146
    %784 = vmatprep.subr.mxu0 0.0
    %785 = vmatpush1.msra.mxu0 %v147
    %786 = vmatprep.subr.mxu0 0.0
    %787 = vmatpush1.msra.mxu0 %v148
    %788 = vmatprep.subr.mxu0 0.0
    %789 = vmatpush1.msra.mxu0 0.0
    %790 = vmatprep.subr.mxu0 0.0
    %791 = vmatpush1.msra.mxu0 0.0
    %792 = vmatprep.subr.mxu0 0.0
    %793 = vmatpush1.msra.mxu0 0.0
    %794 = vmatprep.subr.mxu0 0.0
    %795 = vmatpush1.msra.mxu0 0.0
    %796 = vmatprep.subr.mxu0 0.0
    %797 = vmatpush1.msra.mxu0 0.0
    %798 = vmatprep.subr.mxu0 0.0
    %799 = vmatpush1.msra.mxu0 0.0
    %800 = vmatprep.subr.mxu0 0.0
    %801 = vmatpush1.msra.mxu0 0.0
    %802 = vmatprep.subr.mxu0 0.0
    %803 = vmatpush1.msra.mxu0 0.0
    %804 = vmatprep.subr.mxu0 0.0
    %805 = vmatpush1.msra.mxu0 0.0
    %806 = vmatprep.subr.mxu0 0.0
    %807 = vmatpush1.msra.mxu0 0.0
    %808 = vmatprep.subr.mxu0 0.0
    %809 = vmatpush1.msra.mxu0 0.0
    %810 = vmatprep.subr.mxu0 0.0
    %811 = vmatpush1.msra.mxu0 0.0
    %812 = vmatprep.subr.mxu0 0.0
    %813 = vmatpush1.msra.mxu0 0.0
    %814 = vmatprep.subr.mxu0 0.0
    %815 = vmatpush1.msra.mxu0 0.0
    %816 = vmatprep.subr.mxu0 0.0
    %817 = vmatpush1.msra.mxu0 0.0
    %818 = vmatprep.subr.mxu0 0.0
    %819 = vmatpush1.msra.mxu0 0.0
    %820 = vmatprep.mubr.f32.mxu0 0.0
    %821 = vmatmul.mubr.f32.gmra.mrb[0].mxu0 %v752
    %v822 = vpop.f32.mrb[0].mxu0
    %v823 = vadd.f32 0.0, %v822
    %v824 = vpop.f32.mrb[0].mxu0
    %825 = vmatprep.mubr.f32.mxu0 0.0
    %826 = vmatmul.mubr.f32.gmra.mrb[0].mxu0 %v753
    %v827 = vpop.f32.mrb[0].mxu0
    %v828 = vadd.f32 0.0, %v827
    %v829 = vpop.f32.mrb[0].mxu0
    %830 = vmatprep.mubr.f32.mxu0 0.0
    %831 = vmatmul.mubr.f32.gmra.mrb[0].mxu0 %v754
    %v832 = vpop.f32.mrb[0].mxu0
    %v833 = vadd.f32 0.0, %v832
    %v834 = vpop.f32.mrb[0].mxu0
    %835 = vmatprep.mubr.f32.mxu0 0.0
    %836 = vmatmul.mubr.f32.gmra.mrb[0].mxu0 %v755
    %v837 = vpop.f32.mrb[0].mxu0
    %v838 = vadd.f32 0.0, %v837
    %v839 = vpop.f32.mrb[0].mxu0
    %840 = vdwg.mxu0
    %v841 = vadd.f32 %v823, %v828
    %v842 = vadd.f32 %v841, %v833
    %v843 = vadd.f32 %v842, %v838
    %v844 = vrot.slane %v843, 4
    %v845 = vadd.f32 %v843, %v844
    %v846 = vrot.slane %v845, 2
    %v847 = vadd.f32 %v845, %v846
    %v848 = vrot.slane %v847, 1
    %v849 = vadd.f32 %v847, %v848
    %v850 = vmul.f32 %v849, 0.001953125
    %v851 = vld [vmem:[%s2] sm:$0x1]
    %v852 = vadd.f32 %v850, 1e-05
    %v853 = vrsqrt.pop %v852
    %v854 = vmul.f32 %v851, %v853
    %v855 = vld [vmem:[%s3] sm:$0x1]
    %v856 = vmul.f32 %v747, %v854
    %v857 = vsub.f32 %v855, %v856
    %v858 = vlaneseq
    %v859 = vshrl.u32 %v858, 7
    %v860 = vsub.s32 0, %v859
    %v861 = vrot.slane %v854, %v860
    %v862 = vmul.f32 %v649, %v861
    %v863 = vmul.f32 %v650, %v861
    %v864 = vmul.f32 %v651, %v861
    %v865 = vmul.f32 %v652, %v861
    %v866 = vlaneseq
    %v867 = vshrl.u32 %v866, 7
    %v868 = vsub.s32 0, %v867
    %v869 = vrot.slane %v857, %v868
    %v870 = vadd.f32 %v862, %v869
    %v871 = vadd.f32 %v863, %v869
    %v872 = vadd.f32 %v864, %v869
    %v873 = vadd.f32 %v865, %v869
    %874 = vmatprep.subr.mxu0 0.0
    %875 = vmatpush1.msra.mxu0 %v870
    %876 = vmatprep.subr.mxu0 0.0
    %877 = vmatpush1.msra.mxu0 %v871
    %878 = vmatprep.subr.mxu0 0.0
    %879 = vmatpush1.msra.mxu0 %v872
    %880 = vmatprep.subr.mxu0 0.0
    %881 = vmatpush1.msra.mxu0 %v873
    %882 = vmatprep.subr.mxu0 0.0
    %883 = vmatpush1.msra.mxu0 0.0
    %884 = vmatprep.subr.mxu0 0.0
    %885 = vmatpush1.msra.mxu0 0.0
    %886 = vmatprep.subr.mxu0 0.0
    %887 = vmatpush1.msra.mxu0 0.0
    %888 = vmatprep.subr.mxu0 0.0
    %889 = vmatpush1.msra.mxu0 0.0
    %890 = vmatprep.subr.mxu0 0.0
    %891 = vmatpush1.msra.mxu0 0.0
    %892 = vmatprep.subr.mxu0 0.0
    %893 = vmatpush1.msra.mxu0 0.0
    %894 = vmatprep.subr.mxu0 0.0
    %895 = vmatpush1.msra.mxu0 0.0
    %896 = vmatprep.subr.mxu0 0.0
    %897 = vmatpush1.msra.mxu0 0.0
    %898 = vmatprep.subr.mxu0 0.0
    %899 = vmatpush1.msra.mxu0 0.0
    %900 = vmatprep.subr.mxu0 0.0
    %901 = vmatpush1.msra.mxu0 0.0
    %902 = vmatprep.subr.mxu0 0.0
    %903 = vmatpush1.msra.mxu0 0.0
    %904 = vmatprep.subr.mxu0 0.0
    %905 = vmatpush1.msra.mxu0 0.0
    %906 = vmatprep.subr.mxu0 0.0
    %907 = vmatpush1.msra.mxu0 0.0
    %908 = vmatprep.subr.mxu0 0.0
    %909 = vmatpush1.msra.mxu0 0.0
    %910 = vmatprep.subr.mxu0 0.0
    %911 = vmatpush1.msra.mxu0 0.0
    %912 = vmatprep.subr.mxu0 0.0
    %913 = vmatpush1.msra.mxu0 0.0
    %914 = vmatprep.subr.mxu0 0.0
    %915 = vmatpush1.msra.mxu0 0.0
    %916 = vmatprep.subr.mxu0 0.0
    %917 = vmatpush1.msra.mxu0 0.0
    %918 = vmatprep.subr.mxu0 0.0
    %919 = vmatpush1.msra.mxu0 0.0
    %920 = vmatprep.subr.mxu0 0.0
    %921 = vmatpush1.msra.mxu0 0.0
    %922 = vmatprep.subr.mxu0 0.0
    %923 = vmatpush1.msra.mxu0 0.0
    %924 = vmatprep.subr.mxu0 0.0
    %925 = vmatpush1.msra.mxu0 0.0
    %926 = vmatprep.subr.mxu0 0.0
    %927 = vmatpush1.msra.mxu0 0.0
    %928 = vmatprep.subr.mxu0 0.0
    %929 = vmatpush1.msra.mxu0 0.0
    %930 = vmatprep.subr.mxu0 0.0
    %931 = vmatpush1.msra.mxu0 0.0
    %932 = vmatprep.subr.mxu0 0.0
    %933 = vmatpush1.msra.mxu0 0.0
    %934 = vmatprep.subr.mxu0 0.0
    %935 = vmatpush1.msra.mxu0 0.0
    %936 = vmatprep.subr.mxu0 0.0
    %937 = vmatpush1.msra.mxu0 0.0
    %938 = vmatprep.mubr.f32.mxu0 0.0
    %939 = vmatmul.mubr.f32.gmra.mrb[0].mxu0 %v151
    %v940 = vpop.f32.mrb[0].mxu0
    %v941 = vadd.f32 0.0, %v940
    %v942 = vpop.f32.mrb[0].mxu0
    %943 = vmatprep.mubr.f32.mxu0 0.0
    %944 = vmatmul.mubr.f32.gmra.mrb[0].mxu0 %v154
    %v945 = vpop.f32.mrb[0].mxu0
    %v946 = vadd.f32 0.0, %v945
    %v947 = vpop.f32.mrb[0].mxu0
    %948 = vmatprep.mubr.f32.mxu0 0.0
    %949 = vmatmul.mubr.f32.gmra.mrb[0].mxu0 %v157
    %v950 = vpop.f32.mrb[0].mxu0
    %v951 = vadd.f32 0.0, %v950
    %v952 = vpop.f32.mrb[0].mxu0
    %953 = vmatprep.mubr.f32.mxu0 0.0
    %954 = vmatmul.mubr.f32.gmra.mrb[0].mxu0 %v160
    %v955 = vpop.f32.mrb[0].mxu0
    %v956 = vadd.f32 0.0, %v955
    %v957 = vpop.f32.mrb[0].mxu0
    %958 = vdwg.mxu0
    %959 = vmatprep.subr.mxu0 0.0
    %960 = vmatpush1.msra.mxu0 %v870
    %961 = vmatprep.subr.mxu0 0.0
    %962 = vmatpush1.msra.mxu0 %v871
    %963 = vmatprep.subr.mxu0 0.0
    %964 = vmatpush1.msra.mxu0 %v872
    %965 = vmatprep.subr.mxu0 0.0
    %966 = vmatpush1.msra.mxu0 %v873
    %967 = vmatprep.subr.mxu0 0.0
    %968 = vmatpush1.msra.mxu0 0.0
    %969 = vmatprep.subr.mxu0 0.0
    %970 = vmatpush1.msra.mxu0 0.0
    %971 = vmatprep.subr.mxu0 0.0
    %972 = vmatpush1.msra.mxu0 0.0
    %973 = vmatprep.subr.mxu0 0.0
    %974 = vmatpush1.msra.mxu0 0.0
    %975 = vmatprep.subr.mxu0 0.0
    %976 = vmatpush1.msra.mxu0 0.0
    %977 = vmatprep.subr.mxu0 0.0
    %978 = vmatpush1.msra.mxu0 0.0
    %979 = vmatprep.subr.mxu0 0.0
    %980 = vmatpush1.msra.mxu0 0.0
    %981 = vmatprep.subr.mxu0 0.0
    %982 = vmatpush1.msra.mxu0 0.0
    %983 = vmatprep.subr.mxu0 0.0
    %984 = vmatpush1.msra.mxu0 0.0
    %985 = vmatprep.subr.mxu0 0.0
    %986 = vmatpush1.msra.mxu0 0.0
    %987 = vmatprep.subr.mxu0 0.0
    %988 = vmatpush1.msra.mxu0 0.0
    %989 = vmatprep.subr.mxu0 0.0
    %990 = vmatpush1.msra.mxu0 0.0
    %991 = vmatprep.subr.mxu0 0.0
    %992 = vmatpush1.msra.mxu0 0.0
    %993 = vmatprep.subr.mxu0 0.0
    %994 = vmatpush1.msra.mxu0 0.0
    %995 = vmatprep.subr.mxu0 0.0
    %996 = vmatpush1.msra.mxu0 0.0
    %997 = vmatprep.subr.mxu0 0.0
    %998 = vmatpush1.msra.mxu0 0.0
    %999 = vmatprep.subr.mxu0 0.0
    %1000 = vmatpush1.msra.mxu0 0.0
    %1001 = vmatprep.subr.mxu0 0.0
    %1002 = vmatpush1.msra.mxu0 0.0
    %1003 = vmatprep.subr.mxu0 0.0
    %1004 = vmatpush1.msra.mxu0 0.0
    %1005 = vmatprep.subr.mxu0 0.0
    %1006 = vmatpush1.msra.mxu0 0.0
    %1007 = vmatprep.subr.mxu0 0.0
    %1008 = vmatpush1.msra.mxu0 0.0
    %1009 = vmatprep.subr.mxu0 0.0
    %1010 = vmatpush1.msra.mxu0 0.0
    %1011 = vmatprep.subr.mxu0 0.0
    %1012 = vmatpush1.msra.mxu0 0.0
    %1013 = vmatprep.subr.mxu0 0.0
    %1014 = vmatpush1.msra.mxu0 0.0
    %1015 = vmatprep.subr.mxu0 0.0
    %1016 = vmatpush1.msra.mxu0 0.0
    %1017 = vmatprep.subr.mxu0 0.0
    %1018 = vmatpush1.msra.mxu0 0.0
    %1019 = vmatprep.subr.mxu0 0.0
    %1020 = vmatpush1.msra.mxu0 0.0
    %1021 = vmatprep.subr.mxu0 0.0
    %1022 = vmatpush1.msra.mxu0 0.0
    %1023 = vmatprep.mubr.f32.mxu0 0.0
    %1024 = vmatmul.mubr.f32.gmra.mrb[0].mxu0 %v248
    %v1025 = vpop.f32.mrb[0].mxu0
    %v1026 = vadd.f32 0.0, %v1025
    %v1027 = vpop.f32.mrb[0].mxu0
    %1028 = vmatprep.mubr.f32.mxu0 0.0
    %1029 = vmatmul.mubr.f32.gmra.mrb[0].mxu0 %v251
    %v1030 = vpop.f32.mrb[0].mxu0
    %v1031 = vadd.f32 0.0, %v1030
    %v1032 = vpop.f32.mrb[0].mxu0
    %1033 = vmatprep.mubr.f32.mxu0 0.0
    %1034 = vmatmul.mubr.f32.gmra.mrb[0].mxu0 %v254
    %v1035 = vpop.f32.mrb[0].mxu0
    %v1036 = vadd.f32 0.0, %v1035
    %v1037 = vpop.f32.mrb[0].mxu0
    %1038 = vmatprep.mubr.f32.mxu0 0.0
    %1039 = vmatmul.mubr.f32.gmra.mrb[0].mxu0 %v257
    %v1040 = vpop.f32.mrb[0].mxu0
    %v1041 = vadd.f32 0.0, %v1040
    %v1042 = vpop.f32.mrb[0].mxu0
    %1043 = vdwg.mxu0
    %s1044 = scalar_lea.vmem [#allocation2], 384
    %v1045 = vld [vmem:[%s1044] sm:$0xff]
    %v1046 = vld [vmem:[%s1044 + $0x8] sm:$0xff]
    %v1047 = vld [vmem:[%s1044 + $0x10] sm:$0xff]
    %v1048 = vld [vmem:[%s1044 + $0x18] sm:$0xff]
    %v1049 = vld [vmem:[%s1044 + $0x20] sm:$0xff]
    %v1050 = vld [vmem:[%s1044 + $0x28] sm:$0xff]
    %v1051 = vld [vmem:[%s1044 + $0x30] sm:$0xff]
    %v1052 = vld [vmem:[%s1044 + $0x38] sm:$0xff]
    %v1053 = vld [vmem:[%s1044 + $0x40] sm:$0xff]
    %v1054 = vld [vmem:[%s1044 + $0x48] sm:$0xff]
    %v1055 = vld [vmem:[%s1044 + $0x50] sm:$0xff]
    %v1056 = vld [vmem:[%s1044 + $0x58] sm:$0xff]
    %v1057 = vld [vmem:[%s1044 + $0x60] sm:$0xff]
    %v1058 = vld [vmem:[%s1044 + $0x68] sm:$0xff]
    %v1059 = vld [vmem:[%s1044 + $0x70] sm:$0xff]
    %v1060 = vld [vmem:[%s1044 + $0x78] sm:$0xff]
    %s1061 = scalar_lea.vmem [#allocation2], 512
    %v1062 = vld [vmem:[%s1061] sm:$0xff]
    %v1063 = vld [vmem:[%s1061 + $0x8] sm:$0xff]
    %v1064 = vld [vmem:[%s1061 + $0x10] sm:$0xff]
    %v1065 = vld [vmem:[%s1061 + $0x18] sm:$0xff]
    %v1066 = vld [vmem:[%s1061 + $0x20] sm:$0xff]
    %v1067 = vld [vmem:[%s1061 + $0x28] sm:$0xff]
    %v1068 = vld [vmem:[%s1061 + $0x30] sm:$0xff]
    %v1069 = vld [vmem:[%s1061 + $0x38] sm:$0xff]
    %v1070 = vld [vmem:[%s1061 + $0x40] sm:$0xff]
    %v1071 = vld [vmem:[%s1061 + $0x48] sm:$0xff]
    %v1072 = vld [vmem:[%s1061 + $0x50] sm:$0xff]
    %v1073 = vld [vmem:[%s1061 + $0x58] sm:$0xff]
    %v1074 = vld [vmem:[%s1061 + $0x60] sm:$0xff]
    %v1075 = vld [vmem:[%s1061 + $0x68] sm:$0xff]
    %v1076 = vld [vmem:[%s1061 + $0x70] sm:$0xff]
    %v1077 = vld [vmem:[%s1061 + $0x78] sm:$0xff]
    %1078 = vmatprep.subr.mxu0 0.0
    %1079 = vmatpush1.msra.mxu0 %v1062
    %1080 = vmatprep.subr.mxu0 0.0
    %1081 = vmatpush1.msra.mxu0 %v1063
    %1082 = vmatprep.subr.mxu0 0.0
    %1083 = vmatpush1.msra.mxu0 %v1064
    %1084 = vmatprep.subr.mxu0 0.0
    %1085 = vmatpush1.msra.mxu0 %v1065
    %1086 = vmatprep.subr.mxu0 0.0
    %1087 = vmatpush1.msra.mxu0 %v1066
    %1088 = vmatprep.subr.mxu0 0.0
    %1089 = vmatpush1.msra.mxu0 %v1067
    %1090 = vmatprep.subr.mxu0 0.0
    %1091 = vmatpush1.msra.mxu0 %v1068
    %1092 = vmatprep.subr.mxu0 0.0
    %1093 = vmatpush1.msra.mxu0 %v1069
    %1094 = vmatprep.subr.mxu0 0.0
    %1095 = vmatpush1.msra.mxu0 %v1070
    %1096 = vmatprep.subr.mxu0 0.0
    %1097 = vmatpush1.msra.mxu0 %v1071
    %1098 = vmatprep.subr.mxu0 0.0
    %1099 = vmatpush1.msra.mxu0 %v1072
    %1100 = vmatprep.subr.mxu0 0.0
    %1101 = vmatpush1.msra.mxu0 %v1073
    %1102 = vmatprep.subr.mxu0 0.0
    %1103 = vmatpush1.msra.mxu0 %v1074
    %1104 = vmatprep.subr.mxu0 0.0
    %1105 = vmatpush1.msra.mxu0 %v1075
    %1106 = vmatprep.subr.mxu0 0.0
    %1107 = vmatpush1.msra.mxu0 %v1076
    %1108 = vmatprep.subr.mxu0 0.0
    %1109 = vmatpush1.msra.mxu0 %v1077
    %1110 = vmatprep.subr.mxu0 0.0
    %1111 = vmatpush1.msra.mxu0 0.0
    %1112 = vmatprep.subr.mxu0 0.0
    %1113 = vmatpush1.msra.mxu0 0.0
    %1114 = vmatprep.subr.mxu0 0.0
    %1115 = vmatpush1.msra.mxu0 0.0
    %1116 = vmatprep.subr.mxu0 0.0
    %1117 = vmatpush1.msra.mxu0 0.0
    %1118 = vmatprep.subr.mxu0 0.0
    %1119 = vmatpush1.msra.mxu0 0.0
    %1120 = vmatprep.subr.mxu0 0.0
    %1121 = vmatpush1.msra.mxu0 0.0
    %1122 = vmatprep.subr.mxu0 0.0
    %1123 = vmatpush1.msra.mxu0 0.0
    %1124 = vmatprep.subr.mxu0 0.0
    %1125 = vmatpush1.msra.mxu0 0.0
    %1126 = vmatprep.subr.mxu0 0.0
    %1127 = vmatpush1.msra.mxu0 0.0
    %1128 = vmatprep.subr.mxu0 0.0
    %1129 = vmatpush1.msra.mxu0 0.0
    %1130 = vmatprep.subr.mxu0 0.0
    %1131 = vmatpush1.msra.mxu0 0.0
    %1132 = vmatprep.subr.mxu0 0.0
    %1133 = vmatpush1.msra.mxu0 0.0
    %1134 = vmatprep.subr.mxu0 0.0
    %1135 = vmatpush1.msra.mxu0 0.0
    %1136 = vmatprep.subr.mxu0 0.0
    %1137 = vmatpush1.msra.mxu0 0.0
    %1138 = vmatprep.subr.mxu0 0.0
    %1139 = vmatpush1.msra.mxu0 0.0
    %1140 = vmatprep.subr.mxu0 0.0
    %1141 = vmatpush1.msra.mxu0 0.0
    %1142 = vmatprep.mubr.f32.mxu0 0.0
    %1143 = vmatmul.mubr.f32.gmra.mrb[0].mxu0 %v870
    %v1144 = vpop.f32.mrb[0].mxu0
    %v1145 = vadd.f32 0.0, %v1144
    %v1146 = vpop.f32.mrb[0].mxu0
    %1147 = vmatprep.mubr.f32.mxu0 0.0
    %1148 = vmatmul.mubr.f32.gmra.mrb[0].mxu0 %v871
    %v1149 = vpop.f32.mrb[0].mxu0
    %v1150 = vadd.f32 0.0, %v1149
    %v1151 = vpop.f32.mrb[0].mxu0
    %1152 = vmatprep.mubr.f32.mxu0 0.0
    %1153 = vmatmul.mubr.f32.gmra.mrb[0].mxu0 %v872
    %v1154 = vpop.f32.mrb[0].mxu0
    %v1155 = vadd.f32 0.0, %v1154
    %v1156 = vpop.f32.mrb[0].mxu0
    %1157 = vmatprep.mubr.f32.mxu0 0.0
    %1158 = vmatmul.mubr.f32.gmra.mrb[0].mxu0 %v873
    %v1159 = vpop.f32.mrb[0].mxu0
    %v1160 = vadd.f32 0.0, %v1159
    %v1161 = vpop.f32.mrb[0].mxu0
    %1162 = vdwg.mxu0
    %1163 = vmatprep.subr.mxu0 0.0
    %1164 = vmatpush1.msra.mxu0 %v1045
    %1165 = vmatprep.subr.mxu0 0.0
    %1166 = vmatpush1.msra.mxu0 %v1046
    %1167 = vmatprep.subr.mxu0 0.0
    %1168 = vmatpush1.msra.mxu0 %v1047
    %1169 = vmatprep.subr.mxu0 0.0
    %1170 = vmatpush1.msra.mxu0 %v1048
    %1171 = vmatprep.subr.mxu0 0.0
    %1172 = vmatpush1.msra.mxu0 %v1049
    %1173 = vmatprep.subr.mxu0 0.0
    %1174 = vmatpush1.msra.mxu0 %v1050
    %1175 = vmatprep.subr.mxu0 0.0
    %1176 = vmatpush1.msra.mxu0 %v1051
    %1177 = vmatprep.subr.mxu0 0.0
    %1178 = vmatpush1.msra.mxu0 %v1052
    %1179 = vmatprep.subr.mxu0 0.0
    %1180 = vmatpush1.msra.mxu0 %v1053
    %1181 = vmatprep.subr.mxu0 0.0
    %1182 = vmatpush1.msra.mxu0 %v1054
    %1183 = vmatprep.subr.mxu0 0.0
    %1184 = vmatpush1.msra.mxu0 %v1055
    %1185 = vmatprep.subr.mxu0 0.0
    %1186 = vmatpush1.msra.mxu0 %v1056
    %1187 = vmatprep.subr.mxu0 0.0
    %1188 = vmatpush1.msra.mxu0 %v1057
    %1189 = vmatprep.subr.mxu0 0.0
    %1190 = vmatpush1.msra.mxu0 %v1058
    %1191 = vmatprep.subr.mxu0 0.0
    %1192 = vmatpush1.msra.mxu0 %v1059
    %1193 = vmatprep.subr.mxu0 0.0
    %1194 = vmatpush1.msra.mxu0 %v1060
    %1195 = vmatprep.subr.mxu0 0.0
    %1196 = vmatpush1.msra.mxu0 0.0
    %1197 = vmatprep.subr.mxu0 0.0
    %1198 = vmatpush1.msra.mxu0 0.0
    %1199 = vmatprep.subr.mxu0 0.0
    %1200 = vmatpush1.msra.mxu0 0.0
    %1201 = vmatprep.subr.mxu0 0.0
    %1202 = vmatpush1.msra.mxu0 0.0
    %1203 = vmatprep.subr.mxu0 0.0
    %1204 = vmatpush1.msra.mxu0 0.0
    %1205 = vmatprep.subr.mxu0 0.0
    %1206 = vmatpush1.msra.mxu0 0.0
    %1207 = vmatprep.subr.mxu0 0.0
    %1208 = vmatpush1.msra.mxu0 0.0
    %1209 = vmatprep.subr.mxu0 0.0
    %1210 = vmatpush1.msra.mxu0 0.0
    %1211 = vmatprep.subr.mxu0 0.0
    %1212 = vmatpush1.msra.mxu0 0.0
    %1213 = vmatprep.subr.mxu0 0.0
    %1214 = vmatpush1.msra.mxu0 0.0
    %1215 = vmatprep.subr.mxu0 0.0
    %1216 = vmatpush1.msra.mxu0 0.0
    %1217 = vmatprep.subr.mxu0 0.0
    %1218 = vmatpush1.msra.mxu0 0.0
    %1219 = vmatprep.subr.mxu0 0.0
    %1220 = vmatpush1.msra.mxu0 0.0
    %1221 = vmatprep.subr.mxu0 0.0
    %1222 = vmatpush1.msra.mxu0 0.0
    %1223 = vmatprep.subr.mxu0 0.0
    %1224 = vmatpush1.msra.mxu0 0.0
    %1225 = vmatprep.subr.mxu0 0.0
    %1226 = vmatpush1.msra.mxu0 0.0
    %1227 = vmatprep.mubr.f32.mxu0 0.0
    %1228 = vmatmul.mubr.f32.gmra.mrb[0].mxu0 %v941
    %v1229 = vpop.f32.mrb[0].mxu0
    %v1230 = vadd.f32 %v1145, %v1229
    %v1231 = vpop.f32.mrb[0].mxu0
    %1232 = vmatprep.mubr.f32.mxu0 0.0
    %1233 = vmatmul.mubr.f32.gmra.mrb[0].mxu0 %v946
    %v1234 = vpop.f32.mrb[0].mxu0
    %v1235 = vadd.f32 %v1150, %v1234
    %v1236 = vpop.f32.mrb[0].mxu0
    %1237 = vmatprep.mubr.f32.mxu0 0.0
    %1238 = vmatmul.mubr.f32.gmra.mrb[0].mxu0 %v951
    %v1239 = vpop.f32.mrb[0].mxu0
    %v1240 = vadd.f32 %v1155, %v1239
    %v1241 = vpop.f32.mrb[0].mxu0
    %1242 = vmatprep.mubr.f32.mxu0 0.0
    %1243 = vmatmul.mubr.f32.gmra.mrb[0].mxu0 %v956
    %v1244 = vpop.f32.mrb[0].mxu0
    %v1245 = vadd.f32 %v1160, %v1244
    %v1246 = vpop.f32.mrb[0].mxu0
    %1247 = vdwg.mxu0
    %s1248 = scalar_lea.vmem [#allocation2], 640
    %v1249 = vld [vmem:[%s1248] sm:$0xff]
    %v1250 = vld [vmem:[%s1248 + $0x8] sm:$0xff]
    %v1251 = vld [vmem:[%s1248 + $0x10] sm:$0xff]
    %v1252 = vld [vmem:[%s1248 + $0x18] sm:$0xff]
    %v1253 = vld [vmem:[%s1248 + $0x20] sm:$0xff]
    %v1254 = vld [vmem:[%s1248 + $0x28] sm:$0xff]
    %v1255 = vld [vmem:[%s1248 + $0x30] sm:$0xff]
    %v1256 = vld [vmem:[%s1248 + $0x38] sm:$0xff]
    %v1257 = vld [vmem:[%s1248 + $0x40] sm:$0xff]
    %v1258 = vld [vmem:[%s1248 + $0x48] sm:$0xff]
    %v1259 = vld [vmem:[%s1248 + $0x50] sm:$0xff]
    %v1260 = vld [vmem:[%s1248 + $0x58] sm:$0xff]
    %v1261 = vld [vmem:[%s1248 + $0x60] sm:$0xff]
    %v1262 = vld [vmem:[%s1248 + $0x68] sm:$0xff]
    %v1263 = vld [vmem:[%s1248 + $0x70] sm:$0xff]
    %v1264 = vld [vmem:[%s1248 + $0x78] sm:$0xff]
    %1265 = vmatprep.subr.mxu0 0.0
    %1266 = vmatpush1.msra.mxu0 %v1249
    %1267 = vmatprep.subr.mxu0 0.0
    %1268 = vmatpush1.msra.mxu0 %v1250
    %1269 = vmatprep.subr.mxu0 0.0
    %1270 = vmatpush1.msra.mxu0 %v1251
    %1271 = vmatprep.subr.mxu0 0.0
    %1272 = vmatpush1.msra.mxu0 %v1252
    %1273 = vmatprep.subr.mxu0 0.0
    %1274 = vmatpush1.msra.mxu0 %v1253
    %1275 = vmatprep.subr.mxu0 0.0
    %1276 = vmatpush1.msra.mxu0 %v1254
    %1277 = vmatprep.subr.mxu0 0.0
    %1278 = vmatpush1.msra.mxu0 %v1255
    %1279 = vmatprep.subr.mxu0 0.0
    %1280 = vmatpush1.msra.mxu0 %v1256
    %1281 = vmatprep.subr.mxu0 0.0
    %1282 = vmatpush1.msra.mxu0 %v1257
    %1283 = vmatprep.subr.mxu0 0.0
    %1284 = vmatpush1.msra.mxu0 %v1258
    %1285 = vmatprep.subr.mxu0 0.0
    %1286 = vmatpush1.msra.mxu0 %v1259
    %1287 = vmatprep.subr.mxu0 0.0
    %1288 = vmatpush1.msra.mxu0 %v1260
    %1289 = vmatprep.subr.mxu0 0.0
    %1290 = vmatpush1.msra.mxu0 %v1261
    %1291 = vmatprep.subr.mxu0 0.0
    %1292 = vmatpush1.msra.mxu0 %v1262
    %1293 = vmatprep.subr.mxu0 0.0
    %1294 = vmatpush1.msra.mxu0 %v1263
    %1295 = vmatprep.subr.mxu0 0.0
    %1296 = vmatpush1.msra.mxu0 %v1264
    %1297 = vmatprep.subr.mxu0 0.0
    %1298 = vmatpush1.msra.mxu0 0.0
    %1299 = vmatprep.subr.mxu0 0.0
    %1300 = vmatpush1.msra.mxu0 0.0
    %1301 = vmatprep.subr.mxu0 0.0
    %1302 = vmatpush1.msra.mxu0 0.0
    %1303 = vmatprep.subr.mxu0 0.0
    %1304 = vmatpush1.msra.mxu0 0.0
    %1305 = vmatprep.subr.mxu0 0.0
    %1306 = vmatpush1.msra.mxu0 0.0
    %1307 = vmatprep.subr.mxu0 0.0
    %1308 = vmatpush1.msra.mxu0 0.0
    %1309 = vmatprep.subr.mxu0 0.0
    %1310 = vmatpush1.msra.mxu0 0.0
    %1311 = vmatprep.subr.mxu0 0.0
    %1312 = vmatpush1.msra.mxu0 0.0
    %1313 = vmatprep.subr.mxu0 0.0
    %1314 = vmatpush1.msra.mxu0 0.0
    %1315 = vmatprep.subr.mxu0 0.0
    %1316 = vmatpush1.msra.mxu0 0.0
    %1317 = vmatprep.subr.mxu0 0.0
    %1318 = vmatpush1.msra.mxu0 0.0
    %1319 = vmatprep.subr.mxu0 0.0
    %1320 = vmatpush1.msra.mxu0 0.0
    %1321 = vmatprep.subr.mxu0 0.0
    %1322 = vmatpush1.msra.mxu0 0.0
    %1323 = vmatprep.subr.mxu0 0.0
    %1324 = vmatpush1.msra.mxu0 0.0
    %1325 = vmatprep.subr.mxu0 0.0
    %1326 = vmatpush1.msra.mxu0 0.0
    %1327 = vmatprep.subr.mxu0 0.0
    %1328 = vmatpush1.msra.mxu0 0.0
    %1329 = vmatprep.mubr.f32.mxu0 0.0
    %1330 = vmatmul.mubr.f32.gmra.mrb[0].mxu0 %v1026
    %v1331 = vpop.f32.mrb[0].mxu0
    %v1332 = vadd.f32 0.0, %v1331
    %v1333 = vpop.f32.mrb[0].mxu0
    %1334 = vmatprep.mubr.f32.mxu0 0.0
    %1335 = vmatmul.mubr.f32.gmra.mrb[0].mxu0 %v1031
    %v1336 = vpop.f32.mrb[0].mxu0
    %v1337 = vadd.f32 0.0, %v1336
    %v1338 = vpop.f32.mrb[0].mxu0
    %1339 = vmatprep.mubr.f32.mxu0 0.0
    %1340 = vmatmul.mubr.f32.gmra.mrb[0].mxu0 %v1036
    %v1341 = vpop.f32.mrb[0].mxu0
    %v1342 = vadd.f32 0.0, %v1341
    %v1343 = vpop.f32.mrb[0].mxu0
    %1344 = vmatprep.mubr.f32.mxu0 0.0
    %1345 = vmatmul.mubr.f32.gmra.mrb[0].mxu0 %v1041
    %v1346 = vpop.f32.mrb[0].mxu0
    %v1347 = vadd.f32 0.0, %v1346
    %v1348 = vpop.f32.mrb[0].mxu0
    %1349 = vdwg.mxu0
    %v1350 = vadd.f32 %v1230, %v1332
    %v1351 = vadd.f32 %v1235, %v1337
    %v1352 = vadd.f32 %v1240, %v1342
    %v1353 = vadd.f32 %v1245, %v1347
    %1354 = vmatprep.subr.mxu0 0.0
    %1355 = vmatpush1.msra.mxu0 %v133
    %1356 = vmatprep.subr.mxu0 0.0
    %1357 = vmatpush1.msra.mxu0 %v134
    %1358 = vmatprep.subr.mxu0 0.0
    %1359 = vmatpush1.msra.mxu0 %v135
    %1360 = vmatprep.subr.mxu0 0.0
    %1361 = vmatpush1.msra.mxu0 %v136
    %1362 = vmatprep.subr.mxu0 0.0
    %1363 = vmatpush1.msra.mxu0 %v137
    %1364 = vmatprep.subr.mxu0 0.0
    %1365 = vmatpush1.msra.mxu0 %v138
    %1366 = vmatprep.subr.mxu0 0.0
    %1367 = vmatpush1.msra.mxu0 %v139
    %1368 = vmatprep.subr.mxu0 0.0
    %1369 = vmatpush1.msra.mxu0 %v140
    %1370 = vmatprep.subr.mxu0 0.0
    %1371 = vmatpush1.msra.mxu0 %v141
    %1372 = vmatprep.subr.mxu0 0.0
    %1373 = vmatpush1.msra.mxu0 %v142
    %1374 = vmatprep.subr.mxu0 0.0
    %1375 = vmatpush1.msra.mxu0 %v143
    %1376 = vmatprep.subr.mxu0 0.0
    %1377 = vmatpush1.msra.mxu0 %v144
    %1378 = vmatprep.subr.mxu0 0.0
    %1379 = vmatpush1.msra.mxu0 %v145
    %1380 = vmatprep.subr.mxu0 0.0
    %1381 = vmatpush1.msra.mxu0 %v146
    %1382 = vmatprep.subr.mxu0 0.0
    %1383 = vmatpush1.msra.mxu0 %v147
    %1384 = vmatprep.subr.mxu0 0.0
    %1385 = vmatpush1.msra.mxu0 %v148
    %1386 = vmatprep.subr.mxu0 0.0
    %1387 = vmatpush1.msra.mxu0 0.0
    %1388 = vmatprep.subr.mxu0 0.0
    %1389 = vmatpush1.msra.mxu0 0.0
    %1390 = vmatprep.subr.mxu0 0.0
    %1391 = vmatpush1.msra.mxu0 0.0
    %1392 = vmatprep.subr.mxu0 0.0
    %1393 = vmatpush1.msra.mxu0 0.0
    %1394 = vmatprep.subr.mxu0 0.0
    %1395 = vmatpush1.msra.mxu0 0.0
    %1396 = vmatprep.subr.mxu0 0.0
    %1397 = vmatpush1.msra.mxu0 0.0
    %1398 = vmatprep.subr.mxu0 0.0
    %1399 = vmatpush1.msra.mxu0 0.0
    %1400 = vmatprep.subr.mxu0 0.0
    %1401 = vmatpush1.msra.mxu0 0.0
    %1402 = vmatprep.subr.mxu0 0.0
    %1403 = vmatpush1.msra.mxu0 0.0
    %1404 = vmatprep.subr.mxu0 0.0
    %1405 = vmatpush1.msra.mxu0 0.0
    %1406 = vmatprep.subr.mxu0 0.0
    %1407 = vmatpush1.msra.mxu0 0.0
    %1408 = vmatprep.subr.mxu0 0.0
    %1409 = vmatpush1.msra.mxu0 0.0
    %1410 = vmatprep.subr.mxu0 0.0
    %1411 = vmatpush1.msra.mxu0 0.0
    %1412 = vmatprep.subr.mxu0 0.0
    %1413 = vmatpush1.msra.mxu0 0.0
    %1414 = vmatprep.subr.mxu0 0.0
    %1415 = vmatpush1.msra.mxu0 0.0
    %1416 = vmatprep.subr.mxu0 0.0
    %1417 = vmatpush1.msra.mxu0 0.0
    %1418 = vmatprep.mubr.f32.mxu0 0.0
    %1419 = vmatmul.mubr.f32.gmra.mrb[0].mxu0 %v1350
    %v1420 = vpop.f32.mrb[0].mxu0
    %v1421 = vadd.f32 0.0, %v1420
    %v1422 = vpop.f32.mrb[0].mxu0
    %1423 = vmatprep.mubr.f32.mxu0 0.0
    %1424 = vmatmul.mubr.f32.gmra.mrb[0].mxu0 %v1351
    %v1425 = vpop.f32.mrb[0].mxu0
    %v1426 = vadd.f32 0.0, %v1425
    %v1427 = vpop.f32.mrb[0].mxu0
    %1428 = vmatprep.mubr.f32.mxu0 0.0
    %1429 = vmatmul.mubr.f32.gmra.mrb[0].mxu0 %v1352
    %v1430 = vpop.f32.mrb[0].mxu0
    %v1431 = vadd.f32 0.0, %v1430
    %v1432 = vpop.f32.mrb[0].mxu0
    %1433 = vmatprep.mubr.f32.mxu0 0.0
    %1434 = vmatmul.mubr.f32.gmra.mrb[0].mxu0 %v1353
    %v1435 = vpop.f32.mrb[0].mxu0
    %v1436 = vadd.f32 0.0, %v1435
    %v1437 = vpop.f32.mrb[0].mxu0
    %1438 = vdwg.mxu0
    %v1439 = vadd.f32 %v1421, %v1426
    %v1440 = vadd.f32 %v1439, %v1431
    %v1441 = vadd.f32 %v1440, %v1436
    %v1442 = vrot.slane %v1441, 4
    %v1443 = vadd.f32 %v1441, %v1442
    %v1444 = vrot.slane %v1443, 2
    %v1445 = vadd.f32 %v1443, %v1444
    %v1446 = vrot.slane %v1445, 1
    %v1447 = vadd.f32 %v1445, %v1446
    %v1448 = vmul.f32 %v1447, 0.001953125
    %v1449 = vsub.f32 %v1350, %v1448
    %v1450 = vsub.f32 %v1351, %v1448
    %v1451 = vsub.f32 %v1352, %v1448
    %v1452 = vsub.f32 %v1353, %v1448
    %v1453 = vmul.f32 %v1449, %v1449
    %v1454 = vmul.f32 %v1450, %v1450
    %v1455 = vmul.f32 %v1451, %v1451
    %v1456 = vmul.f32 %v1452, %v1452
    %1457 = vmatprep.subr.mxu0 0.0
    %1458 = vmatpush1.msra.mxu0 %v133
    %1459 = vmatprep.subr.mxu0 0.0
    %1460 = vmatpush1.msra.mxu0 %v134
    %1461 = vmatprep.subr.mxu0 0.0
    %1462 = vmatpush1.msra.mxu0 %v135
    %1463 = vmatprep.subr.mxu0 0.0
    %1464 = vmatpush1.msra.mxu0 %v136
    %1465 = vmatprep.subr.mxu0 0.0
    %1466 = vmatpush1.msra.mxu0 %v137
    %1467 = vmatprep.subr.mxu0 0.0
    %1468 = vmatpush1.msra.mxu0 %v138
    %1469 = vmatprep.subr.mxu0 0.0
    %1470 = vmatpush1.msra.mxu0 %v139
    %1471 = vmatprep.subr.mxu0 0.0
    %1472 = vmatpush1.msra.mxu0 %v140
    %1473 = vmatprep.subr.mxu0 0.0
    %1474 = vmatpush1.msra.mxu0 %v141
    %1475 = vmatprep.subr.mxu0 0.0
    %1476 = vmatpush1.msra.mxu0 %v142
    %1477 = vmatprep.subr.mxu0 0.0
    %1478 = vmatpush1.msra.mxu0 %v143
    %1479 = vmatprep.subr.mxu0 0.0
    %1480 = vmatpush1.msra.mxu0 %v144
    %1481 = vmatprep.subr.mxu0 0.0
    %1482 = vmatpush1.msra.mxu0 %v145
    %1483 = vmatprep.subr.mxu0 0.0
    %1484 = vmatpush1.msra.mxu0 %v146
    %1485 = vmatprep.subr.mxu0 0.0
    %1486 = vmatpush1.msra.mxu0 %v147
    %1487 = vmatprep.subr.mxu0 0.0
    %1488 = vmatpush1.msra.mxu0 %v148
    %1489 = vmatprep.subr.mxu0 0.0
    %1490 = vmatpush1.msra.mxu0 0.0
    %1491 = vmatprep.subr.mxu0 0.0
    %1492 = vmatpush1.msra.mxu0 0.0
    %1493 = vmatprep.subr.mxu0 0.0
    %1494 = vmatpush1.msra.mxu0 0.0
    %1495 = vmatprep.subr.mxu0 0.0
    %1496 = vmatpush1.msra.mxu0 0.0
    %1497 = vmatprep.subr.mxu0 0.0
    %1498 = vmatpush1.msra.mxu0 0.0
    %1499 = vmatprep.subr.mxu0 0.0
    %1500 = vmatpush1.msra.mxu0 0.0
    %1501 = vmatprep.subr.mxu0 0.0
    %1502 = vmatpush1.msra.mxu0 0.0
    %1503 = vmatprep.subr.mxu0 0.0
    %1504 = vmatpush1.msra.mxu0 0.0
    %1505 = vmatprep.subr.mxu0 0.0
    %1506 = vmatpush1.msra.mxu0 0.0
    %1507 = vmatprep.subr.mxu0 0.0
    %1508 = vmatpush1.msra.mxu0 0.0
    %1509 = vmatprep.subr.mxu0 0.0
    %1510 = vmatpush1.msra.mxu0 0.0
    %1511 = vmatprep.subr.mxu0 0.0
    %1512 = vmatpush1.msra.mxu0 0.0
    %1513 = vmatprep.subr.mxu0 0.0
    %1514 = vmatpush1.msra.mxu0 0.0
    %1515 = vmatprep.subr.mxu0 0.0
    %1516 = vmatpush1.msra.mxu0 0.0
    %1517 = vmatprep.subr.mxu0 0.0
    %1518 = vmatpush1.msra.mxu0 0.0
    %1519 = vmatprep.subr.mxu0 0.0
    %1520 = vmatpush1.msra.mxu0 0.0
    %1521 = vmatprep.mubr.f32.mxu0 0.0
    %1522 = vmatmul.mubr.f32.gmra.mrb[0].mxu0 %v1453
    %v1523 = vpop.f32.mrb[0].mxu0
    %v1524 = vadd.f32 0.0, %v1523
    %v1525 = vpop.f32.mrb[0].mxu0
    %1526 = vmatprep.mubr.f32.mxu0 0.0
    %1527 = vmatmul.mubr.f32.gmra.mrb[0].mxu0 %v1454
    %v1528 = vpop.f32.mrb[0].mxu0
    %v1529 = vadd.f32 0.0, %v1528
    %v1530 = vpop.f32.mrb[0].mxu0
    %1531 = vmatprep.mubr.f32.mxu0 0.0
    %1532 = vmatmul.mubr.f32.gmra.mrb[0].mxu0 %v1455
    %v1533 = vpop.f32.mrb[0].mxu0
    %v1534 = vadd.f32 0.0, %v1533
    %v1535 = vpop.f32.mrb[0].mxu0
    %1536 = vmatprep.mubr.f32.mxu0 0.0
    %1537 = vmatmul.mubr.f32.gmra.mrb[0].mxu0 %v1456
    %v1538 = vpop.f32.mrb[0].mxu0
    %v1539 = vadd.f32 0.0, %v1538
    %v1540 = vpop.f32.mrb[0].mxu0
    %1541 = vdwg.mxu0
    %v1542 = vadd.f32 %v1524, %v1529
    %v1543 = vadd.f32 %v1542, %v1534
    %v1544 = vadd.f32 %v1543, %v1539
    %v1545 = vrot.slane %v1544, 4
    %v1546 = vadd.f32 %v1544, %v1545
    %v1547 = vrot.slane %v1546, 2
    %v1548 = vadd.f32 %v1546, %v1547
    %v1549 = vrot.slane %v1548, 1
    %v1550 = vadd.f32 %v1548, %v1549
    %v1551 = vmul.f32 %v1550, 0.001953125
    %v1552 = vld [vmem:[%s2 + $0x1] sm:$0x1]
    %v1553 = vadd.f32 %v1551, 1e-05
    %v1554 = vrsqrt.pop %v1553
    %v1555 = vmul.f32 %v1552, %v1554
    %v1556 = vld [vmem:[%s3 + $0x1] sm:$0x1]
    %v1557 = vmul.f32 %v1448, %v1555
    %v1558 = vsub.f32 %v1556, %v1557
    %v1559 = vlaneseq
    %v1560 = vshrl.u32 %v1559, 7
    %v1561 = vsub.s32 0, %v1560
    %v1562 = vrot.slane %v1555, %v1561
    %v1563 = vmul.f32 %v1350, %v1562
    %v1564 = vmul.f32 %v1351, %v1562
    %v1565 = vmul.f32 %v1352, %v1562
    %v1566 = vmul.f32 %v1353, %v1562
    %v1567 = vlaneseq
    %v1568 = vshrl.u32 %v1567, 7
    %v1569 = vsub.s32 0, %v1568
    %v1570 = vrot.slane %v1558, %v1569
    %v1571 = vadd.f32 %v1563, %v1570
    %v1572 = vadd.f32 %v1564, %v1570
    %v1573 = vadd.f32 %v1565, %v1570
    %v1574 = vadd.f32 %v1566, %v1570
    %v1575 = vadd.f32 %v1571, %v34
    %v1576 = vadd.f32 %v1572, %v35
    %v1577 = vadd.f32 %v1573, %v36
    %v1578 = vadd.f32 %v1574, %v37
    %1579 = vmatprep.subr.mxu0 0.0
    %1580 = vmatpush1.msra.mxu0 %v1575
    %1581 = vmatprep.subr.mxu0 0.0
    %1582 = vmatpush1.msra.mxu0 %v1576
    %1583 = vmatprep.subr.mxu0 0.0
    %1584 = vmatpush1.msra.mxu0 %v1577
    %1585 = vmatprep.subr.mxu0 0.0
    %1586 = vmatpush1.msra.mxu0 %v1578
    %1587 = vmatprep.subr.mxu0 0.0
    %1588 = vmatpush1.msra.mxu0 0.0
    %1589 = vmatprep.subr.mxu0 0.0
    %1590 = vmatpush1.msra.mxu0 0.0
    %1591 = vmatprep.subr.mxu0 0.0
    %1592 = vmatpush1.msra.mxu0 0.0
    %1593 = vmatprep.subr.mxu0 0.0
    %1594 = vmatpush1.msra.mxu0 0.0
    %1595 = vmatprep.subr.mxu0 0.0
    %1596 = vmatpush1.msra.mxu0 0.0
    %1597 = vmatprep.subr.mxu0 0.0
    %1598 = vmatpush1.msra.mxu0 0.0
    %1599 = vmatprep.subr.mxu0 0.0
    %1600 = vmatpush1.msra.mxu0 0.0
    %1601 = vmatprep.subr.mxu0 0.0
    %1602 = vmatpush1.msra.mxu0 0.0
    %1603 = vmatprep.subr.mxu0 0.0
    %1604 = vmatpush1.msra.mxu0 0.0
    %1605 = vmatprep.subr.mxu0 0.0
    %1606 = vmatpush1.msra.mxu0 0.0
    %1607 = vmatprep.subr.mxu0 0.0
    %1608 = vmatpush1.msra.mxu0 0.0
    %1609 = vmatprep.subr.mxu0 0.0
    %1610 = vmatpush1.msra.mxu0 0.0
    %1611 = vmatprep.subr.mxu0 0.0
    %1612 = vmatpush1.msra.mxu0 0.0
    %1613 = vmatprep.subr.mxu0 0.0
    %1614 = vmatpush1.msra.mxu0 0.0
    %1615 = vmatprep.subr.mxu0 0.0
    %1616 = vmatpush1.msra.mxu0 0.0
    %1617 = vmatprep.subr.mxu0 0.0
    %1618 = vmatpush1.msra.mxu0 0.0
    %1619 = vmatprep.subr.mxu0 0.0
    %1620 = vmatpush1.msra.mxu0 0.0
    %1621 = vmatprep.subr.mxu0 0.0
    %1622 = vmatpush1.msra.mxu0 0.0
    %1623 = vmatprep.subr.mxu0 0.0
    %1624 = vmatpush1.msra.mxu0 0.0
    %1625 = vmatprep.subr.mxu0 0.0
    %1626 = vmatpush1.msra.mxu0 0.0
    %1627 = vmatprep.subr.mxu0 0.0
    %1628 = vmatpush1.msra.mxu0 0.0
    %1629 = vmatprep.subr.mxu0 0.0
    %1630 = vmatpush1.msra.mxu0 0.0
    %1631 = vmatprep.subr.mxu0 0.0
    %1632 = vmatpush1.msra.mxu0 0.0
    %1633 = vmatprep.subr.mxu0 0.0
    %1634 = vmatpush1.msra.mxu0 0.0
    %1635 = vmatprep.subr.mxu0 0.0
    %1636 = vmatpush1.msra.mxu0 0.0
    %1637 = vmatprep.subr.mxu0 0.0
    %1638 = vmatpush1.msra.mxu0 0.0
    %1639 = vmatprep.subr.mxu0 0.0
    %1640 = vmatpush1.msra.mxu0 0.0
    %1641 = vmatprep.subr.mxu0 0.0
    %1642 = vmatpush1.msra.mxu0 0.0
    %1643 = vmatprep.mubr.f32.mxu0 0.0
    %1644 = vmatmul.mubr.f32.gmra.mrb[0].mxu0 %v151
    %v1645 = vpop.f32.mrb[0].mxu0
    %v1646 = vadd.f32 0.0, %v1645
    %v1647 = vpop.f32.mrb[0].mxu0
    %1648 = vmatprep.mubr.f32.mxu0 0.0
    %1649 = vmatmul.mubr.f32.gmra.mrb[0].mxu0 %v154
    %v1650 = vpop.f32.mrb[0].mxu0
    %v1651 = vadd.f32 0.0, %v1650
    %v1652 = vpop.f32.mrb[0].mxu0
    %1653 = vmatprep.mubr.f32.mxu0 0.0
    %1654 = vmatmul.mubr.f32.gmra.mrb[0].mxu0 %v157
    %v1655 = vpop.f32.mrb[0].mxu0
    %v1656 = vadd.f32 0.0, %v1655
    %v1657 = vpop.f32.mrb[0].mxu0
    %1658 = vmatprep.mubr.f32.mxu0 0.0
    %1659 = vmatmul.mubr.f32.gmra.mrb[0].mxu0 %v160
    %v1660 = vpop.f32.mrb[0].mxu0
    %v1661 = vadd.f32 0.0, %v1660
    %v1662 = vpop.f32.mrb[0].mxu0
    %1663 = vdwg.mxu0
    %1664 = vmatprep.subr.mxu0 0.0
    %1665 = vmatpush1.msra.mxu0 %v1575
    %1666 = vmatprep.subr.mxu0 0.0
    %1667 = vmatpush1.msra.mxu0 %v1576
    %1668 = vmatprep.subr.mxu0 0.0
    %1669 = vmatpush1.msra.mxu0 %v1577
    %1670 = vmatprep.subr.mxu0 0.0
    %1671 = vmatpush1.msra.mxu0 %v1578
    %1672 = vmatprep.subr.mxu0 0.0
    %1673 = vmatpush1.msra.mxu0 0.0
    %1674 = vmatprep.subr.mxu0 0.0
    %1675 = vmatpush1.msra.mxu0 0.0
    %1676 = vmatprep.subr.mxu0 0.0
    %1677 = vmatpush1.msra.mxu0 0.0
    %1678 = vmatprep.subr.mxu0 0.0
    %1679 = vmatpush1.msra.mxu0 0.0
    %1680 = vmatprep.subr.mxu0 0.0
    %1681 = vmatpush1.msra.mxu0 0.0
    %1682 = vmatprep.subr.mxu0 0.0
    %1683 = vmatpush1.msra.mxu0 0.0
    %1684 = vmatprep.subr.mxu0 0.0
    %1685 = vmatpush1.msra.mxu0 0.0
    %1686 = vmatprep.subr.mxu0 0.0
    %1687 = vmatpush1.msra.mxu0 0.0
    %1688 = vmatprep.subr.mxu0 0.0
    %1689 = vmatpush1.msra.mxu0 0.0
    %1690 = vmatprep.subr.mxu0 0.0
    %1691 = vmatpush1.msra.mxu0 0.0
    %1692 = vmatprep.subr.mxu0 0.0
    %1693 = vmatpush1.msra.mxu0 0.0
    %1694 = vmatprep.subr.mxu0 0.0
    %1695 = vmatpush1.msra.mxu0 0.0
    %1696 = vmatprep.subr.mxu0 0.0
    %1697 = vmatpush1.msra.mxu0 0.0
    %1698 = vmatprep.subr.mxu0 0.0
    %1699 = vmatpush1.msra.mxu0 0.0
    %1700 = vmatprep.subr.mxu0 0.0
    %1701 = vmatpush1.msra.mxu0 0.0
    %1702 = vmatprep.subr.mxu0 0.0
    %1703 = vmatpush1.msra.mxu0 0.0
    %1704 = vmatprep.subr.mxu0 0.0
    %1705 = vmatpush1.msra.mxu0 0.0
    %1706 = vmatprep.subr.mxu0 0.0
    %1707 = vmatpush1.msra.mxu0 0.0
    %1708 = vmatprep.subr.mxu0 0.0
    %1709 = vmatpush1.msra.mxu0 0.0
    %1710 = vmatprep.subr.mxu0 0.0
    %1711 = vmatpush1.msra.mxu0 0.0
    %1712 = vmatprep.subr.mxu0 0.0
    %1713 = vmatpush1.msra.mxu0 0.0
    %1714 = vmatprep.subr.mxu0 0.0
    %1715 = vmatpush1.msra.mxu0 0.0
    %1716 = vmatprep.subr.mxu0 0.0
    %1717 = vmatpush1.msra.mxu0 0.0
    %1718 = vmatprep.subr.mxu0 0.0
    %1719 = vmatpush1.msra.mxu0 0.0
    %1720 = vmatprep.subr.mxu0 0.0
    %1721 = vmatpush1.msra.mxu0 0.0
    %1722 = vmatprep.subr.mxu0 0.0
    %1723 = vmatpush1.msra.mxu0 0.0
    %1724 = vmatprep.subr.mxu0 0.0
    %1725 = vmatpush1.msra.mxu0 0.0
    %1726 = vmatprep.subr.mxu0 0.0
    %1727 = vmatpush1.msra.mxu0 0.0
    %1728 = vmatprep.mubr.f32.mxu0 0.0
    %1729 = vmatmul.mubr.f32.gmra.mrb[0].mxu0 %v248
    %v1730 = vpop.f32.mrb[0].mxu0
    %v1731 = vadd.f32 0.0, %v1730
    %v1732 = vpop.f32.mrb[0].mxu0
    %1733 = vmatprep.mubr.f32.mxu0 0.0
    %1734 = vmatmul.mubr.f32.gmra.mrb[0].mxu0 %v251
    %v1735 = vpop.f32.mrb[0].mxu0
    %v1736 = vadd.f32 0.0, %v1735
    %v1737 = vpop.f32.mrb[0].mxu0
    %1738 = vmatprep.mubr.f32.mxu0 0.0
    %1739 = vmatmul.mubr.f32.gmra.mrb[0].mxu0 %v254
    %v1740 = vpop.f32.mrb[0].mxu0
    %v1741 = vadd.f32 0.0, %v1740
    %v1742 = vpop.f32.mrb[0].mxu0
    %1743 = vmatprep.mubr.f32.mxu0 0.0
    %1744 = vmatmul.mubr.f32.gmra.mrb[0].mxu0 %v257
    %v1745 = vpop.f32.mrb[0].mxu0
    %v1746 = vadd.f32 0.0, %v1745
    %v1747 = vpop.f32.mrb[0].mxu0
    %1748 = vdwg.mxu0
    %s1749 = scalar_lea.vmem [#allocation2], 768
    %v1750 = vld [vmem:[%s1749] sm:$0xff]
    %v1751 = vld [vmem:[%s1749 + $0x8] sm:$0xff]
    %v1752 = vld [vmem:[%s1749 + $0x10] sm:$0xff]
    %v1753 = vld [vmem:[%s1749 + $0x18] sm:$0xff]
    %v1754 = vld [vmem:[%s1749 + $0x20] sm:$0xff]
    %v1755 = vld [vmem:[%s1749 + $0x28] sm:$0xff]
    %v1756 = vld [vmem:[%s1749 + $0x30] sm:$0xff]
    %v1757 = vld [vmem:[%s1749 + $0x38] sm:$0xff]
    %v1758 = vld [vmem:[%s1749 + $0x40] sm:$0xff]
    %v1759 = vld [vmem:[%s1749 + $0x48] sm:$0xff]
    %v1760 = vld [vmem:[%s1749 + $0x50] sm:$0xff]
    %v1761 = vld [vmem:[%s1749 + $0x58] sm:$0xff]
    %v1762 = vld [vmem:[%s1749 + $0x60] sm:$0xff]
    %v1763 = vld [vmem:[%s1749 + $0x68] sm:$0xff]
    %v1764 = vld [vmem:[%s1749 + $0x70] sm:$0xff]
    %v1765 = vld [vmem:[%s1749 + $0x78] sm:$0xff]
    %s1766 = scalar_lea.vmem [#allocation2], 896
    %v1767 = vld [vmem:[%s1766] sm:$0xff]
    %v1768 = vld [vmem:[%s1766 + $0x8] sm:$0xff]
    %v1769 = vld [vmem:[%s1766 + $0x10] sm:$0xff]
    %v1770 = vld [vmem:[%s1766 + $0x18] sm:$0xff]
    %v1771 = vld [vmem:[%s1766 + $0x20] sm:$0xff]
    %v1772 = vld [vmem:[%s1766 + $0x28] sm:$0xff]
    %v1773 = vld [vmem:[%s1766 + $0x30] sm:$0xff]
    %v1774 = vld [vmem:[%s1766 + $0x38] sm:$0xff]
    %v1775 = vld [vmem:[%s1766 + $0x40] sm:$0xff]
    %v1776 = vld [vmem:[%s1766 + $0x48] sm:$0xff]
    %v1777 = vld [vmem:[%s1766 + $0x50] sm:$0xff]
    %v1778 = vld [vmem:[%s1766 + $0x58] sm:$0xff]
    %v1779 = vld [vmem:[%s1766 + $0x60] sm:$0xff]
    %v1780 = vld [vmem:[%s1766 + $0x68] sm:$0xff]
    %v1781 = vld [vmem:[%s1766 + $0x70] sm:$0xff]
    %v1782 = vld [vmem:[%s1766 + $0x78] sm:$0xff]
    %1783 = vmatprep.subr.mxu0 0.0
    %1784 = vmatpush1.msra.mxu0 %v1767
    %1785 = vmatprep.subr.mxu0 0.0
    %1786 = vmatpush1.msra.mxu0 %v1768
    %1787 = vmatprep.subr.mxu0 0.0
    %1788 = vmatpush1.msra.mxu0 %v1769
    %1789 = vmatprep.subr.mxu0 0.0
    %1790 = vmatpush1.msra.mxu0 %v1770
    %1791 = vmatprep.subr.mxu0 0.0
    %1792 = vmatpush1.msra.mxu0 %v1771
    %1793 = vmatprep.subr.mxu0 0.0
    %1794 = vmatpush1.msra.mxu0 %v1772
    %1795 = vmatprep.subr.mxu0 0.0
    %1796 = vmatpush1.msra.mxu0 %v1773
    %1797 = vmatprep.subr.mxu0 0.0
    %1798 = vmatpush1.msra.mxu0 %v1774
    %1799 = vmatprep.subr.mxu0 0.0
    %1800 = vmatpush1.msra.mxu0 %v1775
    %1801 = vmatprep.subr.mxu0 0.0
    %1802 = vmatpush1.msra.mxu0 %v1776
    %1803 = vmatprep.subr.mxu0 0.0
    %1804 = vmatpush1.msra.mxu0 %v1777
    %1805 = vmatprep.subr.mxu0 0.0
    %1806 = vmatpush1.msra.mxu0 %v1778
    %1807 = vmatprep.subr.mxu0 0.0
    %1808 = vmatpush1.msra.mxu0 %v1779
    %1809 = vmatprep.subr.mxu0 0.0
    %1810 = vmatpush1.msra.mxu0 %v1780
    %1811 = vmatprep.subr.mxu0 0.0
    %1812 = vmatpush1.msra.mxu0 %v1781
    %1813 = vmatprep.subr.mxu0 0.0
    %1814 = vmatpush1.msra.mxu0 %v1782
    %1815 = vmatprep.subr.mxu0 0.0
    %1816 = vmatpush1.msra.mxu0 0.0
    %1817 = vmatprep.subr.mxu0 0.0
    %1818 = vmatpush1.msra.mxu0 0.0
    %1819 = vmatprep.subr.mxu0 0.0
    %1820 = vmatpush1.msra.mxu0 0.0
    %1821 = vmatprep.subr.mxu0 0.0
    %1822 = vmatpush1.msra.mxu0 0.0
    %1823 = vmatprep.subr.mxu0 0.0
    %1824 = vmatpush1.msra.mxu0 0.0
    %1825 = vmatprep.subr.mxu0 0.0
    %1826 = vmatpush1.msra.mxu0 0.0
    %1827 = vmatprep.subr.mxu0 0.0
    %1828 = vmatpush1.msra.mxu0 0.0
    %1829 = vmatprep.subr.mxu0 0.0
    %1830 = vmatpush1.msra.mxu0 0.0
    %1831 = vmatprep.subr.mxu0 0.0
    %1832 = vmatpush1.msra.mxu0 0.0
    %1833 = vmatprep.subr.mxu0 0.0
    %1834 = vmatpush1.msra.mxu0 0.0
    %1835 = vmatprep.subr.mxu0 0.0
    %1836 = vmatpush1.msra.mxu0 0.0
    %1837 = vmatprep.subr.mxu0 0.0
    %1838 = vmatpush1.msra.mxu0 0.0
    %1839 = vmatprep.subr.mxu0 0.0
    %1840 = vmatpush1.msra.mxu0 0.0
    %1841 = vmatprep.subr.mxu0 0.0
    %1842 = vmatpush1.msra.mxu0 0.0
    %1843 = vmatprep.subr.mxu0 0.0
    %1844 = vmatpush1.msra.mxu0 0.0
    %1845 = vmatprep.subr.mxu0 0.0
    %1846 = vmatpush1.msra.mxu0 0.0
    %1847 = vmatprep.mubr.f32.mxu0 0.0
    %1848 = vmatmul.mubr.f32.gmra.mrb[0].mxu0 %v1575
    %v1849 = vpop.f32.mrb[0].mxu0
    %v1850 = vadd.f32 0.0, %v1849
    %v1851 = vpop.f32.mrb[0].mxu0
    %1852 = vmatprep.mubr.f32.mxu0 0.0
    %1853 = vmatmul.mubr.f32.gmra.mrb[0].mxu0 %v1576
    %v1854 = vpop.f32.mrb[0].mxu0
    %v1855 = vadd.f32 0.0, %v1854
    %v1856 = vpop.f32.mrb[0].mxu0
    %1857 = vmatprep.mubr.f32.mxu0 0.0
    %1858 = vmatmul.mubr.f32.gmra.mrb[0].mxu0 %v1577
    %v1859 = vpop.f32.mrb[0].mxu0
    %v1860 = vadd.f32 0.0, %v1859
    %v1861 = vpop.f32.mrb[0].mxu0
    %1862 = vmatprep.mubr.f32.mxu0 0.0
    %1863 = vmatmul.mubr.f32.gmra.mrb[0].mxu0 %v1578
    %v1864 = vpop.f32.mrb[0].mxu0
    %v1865 = vadd.f32 0.0, %v1864
    %v1866 = vpop.f32.mrb[0].mxu0
    %1867 = vdwg.mxu0
    %1868 = vmatprep.subr.mxu0 0.0
    %1869 = vmatpush1.msra.mxu0 %v1750
    %1870 = vmatprep.subr.mxu0 0.0
    %1871 = vmatpush1.msra.mxu0 %v1751
    %1872 = vmatprep.subr.mxu0 0.0
    %1873 = vmatpush1.msra.mxu0 %v1752
    %1874 = vmatprep.subr.mxu0 0.0
    %1875 = vmatpush1.msra.mxu0 %v1753
    %1876 = vmatprep.subr.mxu0 0.0
    %1877 = vmatpush1.msra.mxu0 %v1754
    %1878 = vmatprep.subr.mxu0 0.0
    %1879 = vmatpush1.msra.mxu0 %v1755
    %1880 = vmatprep.subr.mxu0 0.0
    %1881 = vmatpush1.msra.mxu0 %v1756
    %1882 = vmatprep.subr.mxu0 0.0
    %1883 = vmatpush1.msra.mxu0 %v1757
    %1884 = vmatprep.subr.mxu0 0.0
    %1885 = vmatpush1.msra.mxu0 %v1758
    %1886 = vmatprep.subr.mxu0 0.0
    %1887 = vmatpush1.msra.mxu0 %v1759
    %1888 = vmatprep.subr.mxu0 0.0
    %1889 = vmatpush1.msra.mxu0 %v1760
    %1890 = vmatprep.subr.mxu0 0.0
    %1891 = vmatpush1.msra.mxu0 %v1761
    %1892 = vmatprep.subr.mxu0 0.0
    %1893 = vmatpush1.msra.mxu0 %v1762
    %1894 = vmatprep.subr.mxu0 0.0
    %1895 = vmatpush1.msra.mxu0 %v1763
    %1896 = vmatprep.subr.mxu0 0.0
    %1897 = vmatpush1.msra.mxu0 %v1764
    %1898 = vmatprep.subr.mxu0 0.0
    %1899 = vmatpush1.msra.mxu0 %v1765
    %1900 = vmatprep.subr.mxu0 0.0
    %1901 = vmatpush1.msra.mxu0 0.0
    %1902 = vmatprep.subr.mxu0 0.0
    %1903 = vmatpush1.msra.mxu0 0.0
    %1904 = vmatprep.subr.mxu0 0.0
    %1905 = vmatpush1.msra.mxu0 0.0
    %1906 = vmatprep.subr.mxu0 0.0
    %1907 = vmatpush1.msra.mxu0 0.0
    %1908 = vmatprep.subr.mxu0 0.0
    %1909 = vmatpush1.msra.mxu0 0.0
    %1910 = vmatprep.subr.mxu0 0.0
    %1911 = vmatpush1.msra.mxu0 0.0
    %1912 = vmatprep.subr.mxu0 0.0
    %1913 = vmatpush1.msra.mxu0 0.0
    %1914 = vmatprep.subr.mxu0 0.0
    %1915 = vmatpush1.msra.mxu0 0.0
    %1916 = vmatprep.subr.mxu0 0.0
    %1917 = vmatpush1.msra.mxu0 0.0
    %1918 = vmatprep.subr.mxu0 0.0
    %1919 = vmatpush1.msra.mxu0 0.0
    %1920 = vmatprep.subr.mxu0 0.0
    %1921 = vmatpush1.msra.mxu0 0.0
    %1922 = vmatprep.subr.mxu0 0.0
    %1923 = vmatpush1.msra.mxu0 0.0
    %1924 = vmatprep.subr.mxu0 0.0
    %1925 = vmatpush1.msra.mxu0 0.0
    %1926 = vmatprep.subr.mxu0 0.0
    %1927 = vmatpush1.msra.mxu0 0.0
    %1928 = vmatprep.subr.mxu0 0.0
    %1929 = vmatpush1.msra.mxu0 0.0
    %1930 = vmatprep.subr.mxu0 0.0
    %1931 = vmatpush1.msra.mxu0 0.0
    %1932 = vmatprep.mubr.f32.mxu0 0.0
    %1933 = vmatmul.mubr.f32.gmra.mrb[0].mxu0 %v1646
    %v1934 = vpop.f32.mrb[0].mxu0
    %v1935 = vadd.f32 %v1850, %v1934
    %v1936 = vpop.f32.mrb[0].mxu0
    %1937 = vmatprep.mubr.f32.mxu0 0.0
    %1938 = vmatmul.mubr.f32.gmra.mrb[0].mxu0 %v1651
    %v1939 = vpop.f32.mrb[0].mxu0
    %v1940 = vadd.f32 %v1855, %v1939
    %v1941 = vpop.f32.mrb[0].mxu0
    %1942 = vmatprep.mubr.f32.mxu0 0.0
    %1943 = vmatmul.mubr.f32.gmra.mrb[0].mxu0 %v1656
    %v1944 = vpop.f32.mrb[0].mxu0
    %v1945 = vadd.f32 %v1860, %v1944
    %v1946 = vpop.f32.mrb[0].mxu0
    %1947 = vmatprep.mubr.f32.mxu0 0.0
    %1948 = vmatmul.mubr.f32.gmra.mrb[0].mxu0 %v1661
    %v1949 = vpop.f32.mrb[0].mxu0
    %v1950 = vadd.f32 %v1865, %v1949
    %v1951 = vpop.f32.mrb[0].mxu0
    %1952 = vdwg.mxu0
    %s1953 = scalar_lea.vmem [#allocation2], 1024
    %v1954 = vld [vmem:[%s1953] sm:$0xff]
    %v1955 = vld [vmem:[%s1953 + $0x8] sm:$0xff]
    %v1956 = vld [vmem:[%s1953 + $0x10] sm:$0xff]
    %v1957 = vld [vmem:[%s1953 + $0x18] sm:$0xff]
    %v1958 = vld [vmem:[%s1953 + $0x20] sm:$0xff]
    %v1959 = vld [vmem:[%s1953 + $0x28] sm:$0xff]
    %v1960 = vld [vmem:[%s1953 + $0x30] sm:$0xff]
    %v1961 = vld [vmem:[%s1953 + $0x38] sm:$0xff]
    %v1962 = vld [vmem:[%s1953 + $0x40] sm:$0xff]
    %v1963 = vld [vmem:[%s1953 + $0x48] sm:$0xff]
    %v1964 = vld [vmem:[%s1953 + $0x50] sm:$0xff]
    %v1965 = vld [vmem:[%s1953 + $0x58] sm:$0xff]
    %v1966 = vld [vmem:[%s1953 + $0x60] sm:$0xff]
    %v1967 = vld [vmem:[%s1953 + $0x68] sm:$0xff]
    %v1968 = vld [vmem:[%s1953 + $0x70] sm:$0xff]
    %v1969 = vld [vmem:[%s1953 + $0x78] sm:$0xff]
    %1970 = vmatprep.subr.mxu0 0.0
    %1971 = vmatpush1.msra.mxu0 %v1954
    %1972 = vmatprep.subr.mxu0 0.0
    %1973 = vmatpush1.msra.mxu0 %v1955
    %1974 = vmatprep.subr.mxu0 0.0
    %1975 = vmatpush1.msra.mxu0 %v1956
    %1976 = vmatprep.subr.mxu0 0.0
    %1977 = vmatpush1.msra.mxu0 %v1957
    %1978 = vmatprep.subr.mxu0 0.0
    %1979 = vmatpush1.msra.mxu0 %v1958
    %1980 = vmatprep.subr.mxu0 0.0
    %1981 = vmatpush1.msra.mxu0 %v1959
    %1982 = vmatprep.subr.mxu0 0.0
    %1983 = vmatpush1.msra.mxu0 %v1960
    %1984 = vmatprep.subr.mxu0 0.0
    %1985 = vmatpush1.msra.mxu0 %v1961
    %1986 = vmatprep.subr.mxu0 0.0
    %1987 = vmatpush1.msra.mxu0 %v1962
    %1988 = vmatprep.subr.mxu0 0.0
    %1989 = vmatpush1.msra.mxu0 %v1963
    %1990 = vmatprep.subr.mxu0 0.0
    %1991 = vmatpush1.msra.mxu0 %v1964
    %1992 = vmatprep.subr.mxu0 0.0
    %1993 = vmatpush1.msra.mxu0 %v1965
    %1994 = vmatprep.subr.mxu0 0.0
    %1995 = vmatpush1.msra.mxu0 %v1966
    %1996 = vmatprep.subr.mxu0 0.0
    %1997 = vmatpush1.msra.mxu0 %v1967
    %1998 = vmatprep.subr.mxu0 0.0
    %1999 = vmatpush1.msra.mxu0 %v1968
    %2000 = vmatprep.subr.mxu0 0.0
    %2001 = vmatpush1.msra.mxu0 %v1969
    %2002 = vmatprep.subr.mxu0 0.0
    %2003 = vmatpush1.msra.mxu0 0.0
    %2004 = vmatprep.subr.mxu0 0.0
    %2005 = vmatpush1.msra.mxu0 0.0
    %2006 = vmatprep.subr.mxu0 0.0
    %2007 = vmatpush1.msra.mxu0 0.0
    %2008 = vmatprep.subr.mxu0 0.0
    %2009 = vmatpush1.msra.mxu0 0.0
    %2010 = vmatprep.subr.mxu0 0.0
    %2011 = vmatpush1.msra.mxu0 0.0
    %2012 = vmatprep.subr.mxu0 0.0
    %2013 = vmatpush1.msra.mxu0 0.0
    %2014 = vmatprep.subr.mxu0 0.0
    %2015 = vmatpush1.msra.mxu0 0.0
    %2016 = vmatprep.subr.mxu0 0.0
    %2017 = vmatpush1.msra.mxu0 0.0
    %2018 = vmatprep.subr.mxu0 0.0
    %2019 = vmatpush1.msra.mxu0 0.0
    %2020 = vmatprep.subr.mxu0 0.0
    %2021 = vmatpush1.msra.mxu0 0.0
    %2022 = vmatprep.subr.mxu0 0.0
    %2023 = vmatpush1.msra.mxu0 0.0
    %2024 = vmatprep.subr.mxu0 0.0
    %2025 = vmatpush1.msra.mxu0 0.0
    %2026 = vmatprep.subr.mxu0 0.0
    %2027 = vmatpush1.msra.mxu0 0.0
    %2028 = vmatprep.subr.mxu0 0.0
    %2029 = vmatpush1.msra.mxu0 0.0
    %2030 = vmatprep.subr.mxu0 0.0
    %2031 = vmatpush1.msra.mxu0 0.0
    %2032 = vmatprep.subr.mxu0 0.0
    %2033 = vmatpush1.msra.mxu0 0.0
    %2034 = vmatprep.mubr.f32.mxu0 0.0
    %2035 = vmatmul.mubr.f32.gmra.mrb[0].mxu0 %v1731
    %v2036 = vpop.f32.mrb[0].mxu0
    %v2037 = vadd.f32 0.0, %v2036
    %v2038 = vpop.f32.mrb[0].mxu0
    %2039 = vmatprep.mubr.f32.mxu0 0.0
    %2040 = vmatmul.mubr.f32.gmra.mrb[0].mxu0 %v1736
    %v2041 = vpop.f32.mrb[0].mxu0
    %v2042 = vadd.f32 0.0, %v2041
    %v2043 = vpop.f32.mrb[0].mxu0
    %2044 = vmatprep.mubr.f32.mxu0 0.0
    %2045 = vmatmul.mubr.f32.gmra.mrb[0].mxu0 %v1741
    %v2046 = vpop.f32.mrb[0].mxu0
    %v2047 = vadd.f32 0.0, %v2046
    %v2048 = vpop.f32.mrb[0].mxu0
    %2049 = vmatprep.mubr.f32.mxu0 0.0
    %2050 = vmatmul.mubr.f32.gmra.mrb[0].mxu0 %v1746
    %v2051 = vpop.f32.mrb[0].mxu0
    %v2052 = vadd.f32 0.0, %v2051
    %v2053 = vpop.f32.mrb[0].mxu0
    %2054 = vdwg.mxu0
    %v2055 = vadd.f32 %v1935, %v2037
    %v2056 = vadd.f32 %v1940, %v2042
    %v2057 = vadd.f32 %v1945, %v2047
    %v2058 = vadd.f32 %v1950, %v2052
    %v2059 = vmax.f32 %v2055, 0.0
    %v2060 = vmax.f32 %v2056, 0.0
    %v2061 = vmax.f32 %v2057, 0.0
    %v2062 = vmax.f32 %v2058, 0.0
    %2063 = vmatprep.subr.mxu0 0.0
    %2064 = vmatpush1.msra.mxu0 %v133
    %2065 = vmatprep.subr.mxu0 0.0
    %2066 = vmatpush1.msra.mxu0 %v134
    %2067 = vmatprep.subr.mxu0 0.0
    %2068 = vmatpush1.msra.mxu0 %v135
    %2069 = vmatprep.subr.mxu0 0.0
    %2070 = vmatpush1.msra.mxu0 %v136
    %2071 = vmatprep.subr.mxu0 0.0
    %2072 = vmatpush1.msra.mxu0 %v137
    %2073 = vmatprep.subr.mxu0 0.0
    %2074 = vmatpush1.msra.mxu0 %v138
    %2075 = vmatprep.subr.mxu0 0.0
    %2076 = vmatpush1.msra.mxu0 %v139
    %2077 = vmatprep.subr.mxu0 0.0
    %2078 = vmatpush1.msra.mxu0 %v140
    %2079 = vmatprep.subr.mxu0 0.0
    %2080 = vmatpush1.msra.mxu0 %v141
    %2081 = vmatprep.subr.mxu0 0.0
    %2082 = vmatpush1.msra.mxu0 %v142
    %2083 = vmatprep.subr.mxu0 0.0
    %2084 = vmatpush1.msra.mxu0 %v143
    %2085 = vmatprep.subr.mxu0 0.0
    %2086 = vmatpush1.msra.mxu0 %v144
    %2087 = vmatprep.subr.mxu0 0.0
    %2088 = vmatpush1.msra.mxu0 %v145
    %2089 = vmatprep.subr.mxu0 0.0
    %2090 = vmatpush1.msra.mxu0 %v146
    %2091 = vmatprep.subr.mxu0 0.0
    %2092 = vmatpush1.msra.mxu0 %v147
    %2093 = vmatprep.subr.mxu0 0.0
    %2094 = vmatpush1.msra.mxu0 %v148
    %2095 = vmatprep.subr.mxu0 0.0
    %2096 = vmatpush1.msra.mxu0 0.0
    %2097 = vmatprep.subr.mxu0 0.0
    %2098 = vmatpush1.msra.mxu0 0.0
    %2099 = vmatprep.subr.mxu0 0.0
    %2100 = vmatpush1.msra.mxu0 0.0
    %2101 = vmatprep.subr.mxu0 0.0
    %2102 = vmatpush1.msra.mxu0 0.0
    %2103 = vmatprep.subr.mxu0 0.0
    %2104 = vmatpush1.msra.mxu0 0.0
    %2105 = vmatprep.subr.mxu0 0.0
    %2106 = vmatpush1.msra.mxu0 0.0
    %2107 = vmatprep.subr.mxu0 0.0
    %2108 = vmatpush1.msra.mxu0 0.0
    %2109 = vmatprep.subr.mxu0 0.0
    %2110 = vmatpush1.msra.mxu0 0.0
    %2111 = vmatprep.subr.mxu0 0.0
    %2112 = vmatpush1.msra.mxu0 0.0
    %2113 = vmatprep.subr.mxu0 0.0
    %2114 = vmatpush1.msra.mxu0 0.0
    %2115 = vmatprep.subr.mxu0 0.0
    %2116 = vmatpush1.msra.mxu0 0.0
    %2117 = vmatprep.subr.mxu0 0.0
    %2118 = vmatpush1.msra.mxu0 0.0
    %2119 = vmatprep.subr.mxu0 0.0
    %2120 = vmatpush1.msra.mxu0 0.0
    %2121 = vmatprep.subr.mxu0 0.0
    %2122 = vmatpush1.msra.mxu0 0.0
    %2123 = vmatprep.subr.mxu0 0.0
    %2124 = vmatpush1.msra.mxu0 0.0
    %2125 = vmatprep.subr.mxu0 0.0
    %2126 = vmatpush1.msra.mxu0 0.0
    %2127 = vmatprep.mubr.f32.mxu0 0.0
    %2128 = vmatmul.mubr.f32.gmra.mrb[0].mxu0 %v2059
    %v2129 = vpop.f32.mrb[0].mxu0
    %v2130 = vadd.f32 0.0, %v2129
    %v2131 = vpop.f32.mrb[0].mxu0
    %2132 = vmatprep.mubr.f32.mxu0 0.0
    %2133 = vmatmul.mubr.f32.gmra.mrb[0].mxu0 %v2060
    %v2134 = vpop.f32.mrb[0].mxu0
    %v2135 = vadd.f32 0.0, %v2134
    %v2136 = vpop.f32.mrb[0].mxu0
    %2137 = vmatprep.mubr.f32.mxu0 0.0
    %2138 = vmatmul.mubr.f32.gmra.mrb[0].mxu0 %v2061
    %v2139 = vpop.f32.mrb[0].mxu0
    %v2140 = vadd.f32 0.0, %v2139
    %v2141 = vpop.f32.mrb[0].mxu0
    %2142 = vmatprep.mubr.f32.mxu0 0.0
    %2143 = vmatmul.mubr.f32.gmra.mrb[0].mxu0 %v2062
    %v2144 = vpop.f32.mrb[0].mxu0
    %v2145 = vadd.f32 0.0, %v2144
    %v2146 = vpop.f32.mrb[0].mxu0
    %2147 = vdwg.mxu0
    %v2148 = vadd.f32 %v2130, %v2135
    %v2149 = vadd.f32 %v2148, %v2140
    %v2150 = vadd.f32 %v2149, %v2145
    %v2151 = vrot.slane %v2150, 4
    %v2152 = vadd.f32 %v2150, %v2151
    %v2153 = vrot.slane %v2152, 2
    %v2154 = vadd.f32 %v2152, %v2153
    %v2155 = vrot.slane %v2154, 1
    %v2156 = vadd.f32 %v2154, %v2155
    %v2157 = vmul.f32 %v2156, 0.001953125
    %v2158 = vsub.f32 %v2059, %v2157
    %v2159 = vsub.f32 %v2060, %v2157
    %v2160 = vsub.f32 %v2061, %v2157
    %v2161 = vsub.f32 %v2062, %v2157
    %v2162 = vmul.f32 %v2158, %v2158
    %v2163 = vmul.f32 %v2159, %v2159
    %v2164 = vmul.f32 %v2160, %v2160
    %v2165 = vmul.f32 %v2161, %v2161
    %2166 = vmatprep.subr.mxu0 0.0
    %2167 = vmatpush1.msra.mxu0 %v133
    %2168 = vmatprep.subr.mxu0 0.0
    %2169 = vmatpush1.msra.mxu0 %v134
    %2170 = vmatprep.subr.mxu0 0.0
    %2171 = vmatpush1.msra.mxu0 %v135
    %2172 = vmatprep.subr.mxu0 0.0
    %2173 = vmatpush1.msra.mxu0 %v136
    %2174 = vmatprep.subr.mxu0 0.0
    %2175 = vmatpush1.msra.mxu0 %v137
    %2176 = vmatprep.subr.mxu0 0.0
    %2177 = vmatpush1.msra.mxu0 %v138
    %2178 = vmatprep.subr.mxu0 0.0
    %2179 = vmatpush1.msra.mxu0 %v139
    %2180 = vmatprep.subr.mxu0 0.0
    %2181 = vmatpush1.msra.mxu0 %v140
    %2182 = vmatprep.subr.mxu0 0.0
    %2183 = vmatpush1.msra.mxu0 %v141
    %2184 = vmatprep.subr.mxu0 0.0
    %2185 = vmatpush1.msra.mxu0 %v142
    %2186 = vmatprep.subr.mxu0 0.0
    %2187 = vmatpush1.msra.mxu0 %v143
    %2188 = vmatprep.subr.mxu0 0.0
    %2189 = vmatpush1.msra.mxu0 %v144
    %2190 = vmatprep.subr.mxu0 0.0
    %2191 = vmatpush1.msra.mxu0 %v145
    %2192 = vmatprep.subr.mxu0 0.0
    %2193 = vmatpush1.msra.mxu0 %v146
    %2194 = vmatprep.subr.mxu0 0.0
    %2195 = vmatpush1.msra.mxu0 %v147
    %2196 = vmatprep.subr.mxu0 0.0
    %2197 = vmatpush1.msra.mxu0 %v148
    %2198 = vmatprep.subr.mxu0 0.0
    %2199 = vmatpush1.msra.mxu0 0.0
    %2200 = vmatprep.subr.mxu0 0.0
    %2201 = vmatpush1.msra.mxu0 0.0
    %2202 = vmatprep.subr.mxu0 0.0
    %2203 = vmatpush1.msra.mxu0 0.0
    %2204 = vmatprep.subr.mxu0 0.0
    %2205 = vmatpush1.msra.mxu0 0.0
    %2206 = vmatprep.subr.mxu0 0.0
    %2207 = vmatpush1.msra.mxu0 0.0
    %2208 = vmatprep.subr.mxu0 0.0
    %2209 = vmatpush1.msra.mxu0 0.0
    %2210 = vmatprep.subr.mxu0 0.0
    %2211 = vmatpush1.msra.mxu0 0.0
    %2212 = vmatprep.subr.mxu0 0.0
    %2213 = vmatpush1.msra.mxu0 0.0
    %2214 = vmatprep.subr.mxu0 0.0
    %2215 = vmatpush1.msra.mxu0 0.0
    %2216 = vmatprep.subr.mxu0 0.0
    %2217 = vmatpush1.msra.mxu0 0.0
    %2218 = vmatprep.subr.mxu0 0.0
    %2219 = vmatpush1.msra.mxu0 0.0
    %2220 = vmatprep.subr.mxu0 0.0
    %2221 = vmatpush1.msra.mxu0 0.0
    %2222 = vmatprep.subr.mxu0 0.0
    %2223 = vmatpush1.msra.mxu0 0.0
    %2224 = vmatprep.subr.mxu0 0.0
    %2225 = vmatpush1.msra.mxu0 0.0
    %2226 = vmatprep.subr.mxu0 0.0
    %2227 = vmatpush1.msra.mxu0 0.0
    %2228 = vmatprep.subr.mxu0 0.0
    %2229 = vmatpush1.msra.mxu0 0.0
    %2230 = vmatprep.mubr.f32.mxu0 0.0
    %2231 = vmatmul.mubr.f32.gmra.mrb[0].mxu0 %v2162
    %v2232 = vpop.f32.mrb[0].mxu0
    %v2233 = vadd.f32 0.0, %v2232
    %v2234 = vpop.f32.mrb[0].mxu0
    %2235 = vmatprep.mubr.f32.mxu0 0.0
    %2236 = vmatmul.mubr.f32.gmra.mrb[0].mxu0 %v2163
    %v2237 = vpop.f32.mrb[0].mxu0
    %v2238 = vadd.f32 0.0, %v2237
    %v2239 = vpop.f32.mrb[0].mxu0
    %2240 = vmatprep.mubr.f32.mxu0 0.0
    %2241 = vmatmul.mubr.f32.gmra.mrb[0].mxu0 %v2164
    %v2242 = vpop.f32.mrb[0].mxu0
    %v2243 = vadd.f32 0.0, %v2242
    %v2244 = vpop.f32.mrb[0].mxu0
    %2245 = vmatprep.mubr.f32.mxu0 0.0
    %2246 = vmatmul.mubr.f32.gmra.mrb[0].mxu0 %v2165
    %v2247 = vpop.f32.mrb[0].mxu0
    %v2248 = vadd.f32 0.0, %v2247
    %v2249 = vpop.f32.mrb[0].mxu0
    %2250 = vdwg.mxu0
    %v2251 = vadd.f32 %v2233, %v2238
    %v2252 = vadd.f32 %v2251, %v2243
    %v2253 = vadd.f32 %v2252, %v2248
    %v2254 = vrot.slane %v2253, 4
    %v2255 = vadd.f32 %v2253, %v2254
    %v2256 = vrot.slane %v2255, 2
    %v2257 = vadd.f32 %v2255, %v2256
    %v2258 = vrot.slane %v2257, 1
    %v2259 = vadd.f32 %v2257, %v2258
    %v2260 = vmul.f32 %v2259, 0.001953125
    %v2261 = vld [vmem:[%s2 + $0x2] sm:$0x1]
    %v2262 = vadd.f32 %v2260, 1e-05
    %v2263 = vrsqrt.pop %v2262
    %v2264 = vmul.f32 %v2261, %v2263
    %v2265 = vld [vmem:[%s3 + $0x2] sm:$0x1]
    %v2266 = vmul.f32 %v2157, %v2264
    %v2267 = vsub.f32 %v2265, %v2266
    %v2268 = vlaneseq
    %v2269 = vshrl.u32 %v2268, 7
    %v2270 = vsub.s32 0, %v2269
    %v2271 = vrot.slane %v2264, %v2270
    %v2272 = vmul.f32 %v2059, %v2271
    %v2273 = vmul.f32 %v2060, %v2271
    %v2274 = vmul.f32 %v2061, %v2271
    %v2275 = vmul.f32 %v2062, %v2271
    %v2276 = vlaneseq
    %v2277 = vshrl.u32 %v2276, 7
    %v2278 = vsub.s32 0, %v2277
    %v2279 = vrot.slane %v2267, %v2278
    %v2280 = vadd.f32 %v2272, %v2279
    %v2281 = vadd.f32 %v2273, %v2279
    %v2282 = vadd.f32 %v2274, %v2279
    %v2283 = vadd.f32 %v2275, %v2279
    %2284 = vmatprep.subr.mxu0 0.0
    %2285 = vmatpush1.msra.mxu0 %v2280
    %2286 = vmatprep.subr.mxu0 0.0
    %2287 = vmatpush1.msra.mxu0 %v2281
    %2288 = vmatprep.subr.mxu0 0.0
    %2289 = vmatpush1.msra.mxu0 %v2282
    %2290 = vmatprep.subr.mxu0 0.0
    %2291 = vmatpush1.msra.mxu0 %v2283
    %2292 = vmatprep.subr.mxu0 0.0
    %2293 = vmatpush1.msra.mxu0 0.0
    %2294 = vmatprep.subr.mxu0 0.0
    %2295 = vmatpush1.msra.mxu0 0.0
    %2296 = vmatprep.subr.mxu0 0.0
    %2297 = vmatpush1.msra.mxu0 0.0
    %2298 = vmatprep.subr.mxu0 0.0
    %2299 = vmatpush1.msra.mxu0 0.0
    %2300 = vmatprep.subr.mxu0 0.0
    %2301 = vmatpush1.msra.mxu0 0.0
    %2302 = vmatprep.subr.mxu0 0.0
    %2303 = vmatpush1.msra.mxu0 0.0
    %2304 = vmatprep.subr.mxu0 0.0
    %2305 = vmatpush1.msra.mxu0 0.0
    %2306 = vmatprep.subr.mxu0 0.0
    %2307 = vmatpush1.msra.mxu0 0.0
    %2308 = vmatprep.subr.mxu0 0.0
    %2309 = vmatpush1.msra.mxu0 0.0
    %2310 = vmatprep.subr.mxu0 0.0
    %2311 = vmatpush1.msra.mxu0 0.0
    %2312 = vmatprep.subr.mxu0 0.0
    %2313 = vmatpush1.msra.mxu0 0.0
    %2314 = vmatprep.subr.mxu0 0.0
    %2315 = vmatpush1.msra.mxu0 0.0
    %2316 = vmatprep.subr.mxu0 0.0
    %2317 = vmatpush1.msra.mxu0 0.0
    %2318 = vmatprep.subr.mxu0 0.0
    %2319 = vmatpush1.msra.mxu0 0.0
    %2320 = vmatprep.subr.mxu0 0.0
    %2321 = vmatpush1.msra.mxu0 0.0
    %2322 = vmatprep.subr.mxu0 0.0
    %2323 = vmatpush1.msra.mxu0 0.0
    %2324 = vmatprep.subr.mxu0 0.0
    %2325 = vmatpush1.msra.mxu0 0.0
    %2326 = vmatprep.subr.mxu0 0.0
    %2327 = vmatpush1.msra.mxu0 0.0
    %2328 = vmatprep.subr.mxu0 0.0
    %2329 = vmatpush1.msra.mxu0 0.0
    %2330 = vmatprep.subr.mxu0 0.0
    %2331 = vmatpush1.msra.mxu0 0.0
    %2332 = vmatprep.subr.mxu0 0.0
    %2333 = vmatpush1.msra.mxu0 0.0
    %2334 = vmatprep.subr.mxu0 0.0
    %2335 = vmatpush1.msra.mxu0 0.0
    %2336 = vmatprep.subr.mxu0 0.0
    %2337 = vmatpush1.msra.mxu0 0.0
    %2338 = vmatprep.subr.mxu0 0.0
    %2339 = vmatpush1.msra.mxu0 0.0
    %2340 = vmatprep.subr.mxu0 0.0
    %2341 = vmatpush1.msra.mxu0 0.0
    %2342 = vmatprep.subr.mxu0 0.0
    %2343 = vmatpush1.msra.mxu0 0.0
    %2344 = vmatprep.subr.mxu0 0.0
    %2345 = vmatpush1.msra.mxu0 0.0
    %2346 = vmatprep.subr.mxu0 0.0
    %2347 = vmatpush1.msra.mxu0 0.0
    %2348 = vmatprep.mubr.f32.mxu0 0.0
    %2349 = vmatmul.mubr.f32.gmra.mrb[0].mxu0 %v151
    %v2350 = vpop.f32.mrb[0].mxu0
    %v2351 = vadd.f32 0.0, %v2350
    %v2352 = vpop.f32.mrb[0].mxu0
    %2353 = vmatprep.mubr.f32.mxu0 0.0
    %2354 = vmatmul.mubr.f32.gmra.mrb[0].mxu0 %v154
    %v2355 = vpop.f32.mrb[0].mxu0
    %v2356 = vadd.f32 0.0, %v2355
    %v2357 = vpop.f32.mrb[0].mxu0
    %2358 = vmatprep.mubr.f32.mxu0 0.0
    %2359 = vmatmul.mubr.f32.gmra.mrb[0].mxu0 %v157
    %v2360 = vpop.f32.mrb[0].mxu0
    %v2361 = vadd.f32 0.0, %v2360
    %v2362 = vpop.f32.mrb[0].mxu0
    %2363 = vmatprep.mubr.f32.mxu0 0.0
    %2364 = vmatmul.mubr.f32.gmra.mrb[0].mxu0 %v160
    %v2365 = vpop.f32.mrb[0].mxu0
    %v2366 = vadd.f32 0.0, %v2365
    %v2367 = vpop.f32.mrb[0].mxu0
    %2368 = vdwg.mxu0
    %2369 = vmatprep.subr.mxu0 0.0
    %2370 = vmatpush1.msra.mxu0 %v2280
    %2371 = vmatprep.subr.mxu0 0.0
    %2372 = vmatpush1.msra.mxu0 %v2281
    %2373 = vmatprep.subr.mxu0 0.0
    %2374 = vmatpush1.msra.mxu0 %v2282
    %2375 = vmatprep.subr.mxu0 0.0
    %2376 = vmatpush1.msra.mxu0 %v2283
    %2377 = vmatprep.subr.mxu0 0.0
    %2378 = vmatpush1.msra.mxu0 0.0
    %2379 = vmatprep.subr.mxu0 0.0
    %2380 = vmatpush1.msra.mxu0 0.0
    %2381 = vmatprep.subr.mxu0 0.0
    %2382 = vmatpush1.msra.mxu0 0.0
    %2383 = vmatprep.subr.mxu0 0.0
    %2384 = vmatpush1.msra.mxu0 0.0
    %2385 = vmatprep.subr.mxu0 0.0
    %2386 = vmatpush1.msra.mxu0 0.0
    %2387 = vmatprep.subr.mxu0 0.0
    %2388 = vmatpush1.msra.mxu0 0.0
    %2389 = vmatprep.subr.mxu0 0.0
    %2390 = vmatpush1.msra.mxu0 0.0
    %2391 = vmatprep.subr.mxu0 0.0
    %2392 = vmatpush1.msra.mxu0 0.0
    %2393 = vmatprep.subr.mxu0 0.0
    %2394 = vmatpush1.msra.mxu0 0.0
    %2395 = vmatprep.subr.mxu0 0.0
    %2396 = vmatpush1.msra.mxu0 0.0
    %2397 = vmatprep.subr.mxu0 0.0
    %2398 = vmatpush1.msra.mxu0 0.0
    %2399 = vmatprep.subr.mxu0 0.0
    %2400 = vmatpush1.msra.mxu0 0.0
    %2401 = vmatprep.subr.mxu0 0.0
    %2402 = vmatpush1.msra.mxu0 0.0
    %2403 = vmatprep.subr.mxu0 0.0
    %2404 = vmatpush1.msra.mxu0 0.0
    %2405 = vmatprep.subr.mxu0 0.0
    %2406 = vmatpush1.msra.mxu0 0.0
    %2407 = vmatprep.subr.mxu0 0.0
    %2408 = vmatpush1.msra.mxu0 0.0
    %2409 = vmatprep.subr.mxu0 0.0
    %2410 = vmatpush1.msra.mxu0 0.0
    %2411 = vmatprep.subr.mxu0 0.0
    %2412 = vmatpush1.msra.mxu0 0.0
    %2413 = vmatprep.subr.mxu0 0.0
    %2414 = vmatpush1.msra.mxu0 0.0
    %2415 = vmatprep.subr.mxu0 0.0
    %2416 = vmatpush1.msra.mxu0 0.0
    %2417 = vmatprep.subr.mxu0 0.0
    %2418 = vmatpush1.msra.mxu0 0.0
    %2419 = vmatprep.subr.mxu0 0.0
    %2420 = vmatpush1.msra.mxu0 0.0
    %2421 = vmatprep.subr.mxu0 0.0
    %2422 = vmatpush1.msra.mxu0 0.0
    %2423 = vmatprep.subr.mxu0 0.0
    %2424 = vmatpush1.msra.mxu0 0.0
    %2425 = vmatprep.subr.mxu0 0.0
    %2426 = vmatpush1.msra.mxu0 0.0
    %2427 = vmatprep.subr.mxu0 0.0
    %2428 = vmatpush1.msra.mxu0 0.0
    %2429 = vmatprep.subr.mxu0 0.0
    %2430 = vmatpush1.msra.mxu0 0.0
    %2431 = vmatprep.subr.mxu0 0.0
    %2432 = vmatpush1.msra.mxu0 0.0
    %2433 = vmatprep.mubr.f32.mxu0 0.0
    %2434 = vmatmul.mubr.f32.gmra.mrb[0].mxu0 %v248
    %v2435 = vpop.f32.mrb[0].mxu0
    %v2436 = vadd.f32 0.0, %v2435
    %v2437 = vpop.f32.mrb[0].mxu0
    %2438 = vmatprep.mubr.f32.mxu0 0.0
    %2439 = vmatmul.mubr.f32.gmra.mrb[0].mxu0 %v251
    %v2440 = vpop.f32.mrb[0].mxu0
    %v2441 = vadd.f32 0.0, %v2440
    %v2442 = vpop.f32.mrb[0].mxu0
    %2443 = vmatprep.mubr.f32.mxu0 0.0
    %2444 = vmatmul.mubr.f32.gmra.mrb[0].mxu0 %v254
    %v2445 = vpop.f32.mrb[0].mxu0
    %v2446 = vadd.f32 0.0, %v2445
    %v2447 = vpop.f32.mrb[0].mxu0
    %2448 = vmatprep.mubr.f32.mxu0 0.0
    %2449 = vmatmul.mubr.f32.gmra.mrb[0].mxu0 %v257
    %v2450 = vpop.f32.mrb[0].mxu0
    %v2451 = vadd.f32 0.0, %v2450
    %v2452 = vpop.f32.mrb[0].mxu0
    %2453 = vdwg.mxu0
    %s2454 = scalar_lea.vmem [#allocation2], 1152
    %v2455 = vld [vmem:[%s2454] sm:$0xff]
    %v2456 = vld [vmem:[%s2454 + $0x8] sm:$0xff]
    %v2457 = vld [vmem:[%s2454 + $0x10] sm:$0xff]
    %v2458 = vld [vmem:[%s2454 + $0x18] sm:$0xff]
    %v2459 = vld [vmem:[%s2454 + $0x20] sm:$0xff]
    %v2460 = vld [vmem:[%s2454 + $0x28] sm:$0xff]
    %v2461 = vld [vmem:[%s2454 + $0x30] sm:$0xff]
    %v2462 = vld [vmem:[%s2454 + $0x38] sm:$0xff]
    %v2463 = vld [vmem:[%s2454 + $0x40] sm:$0xff]
    %v2464 = vld [vmem:[%s2454 + $0x48] sm:$0xff]
    %v2465 = vld [vmem:[%s2454 + $0x50] sm:$0xff]
    %v2466 = vld [vmem:[%s2454 + $0x58] sm:$0xff]
    %v2467 = vld [vmem:[%s2454 + $0x60] sm:$0xff]
    %v2468 = vld [vmem:[%s2454 + $0x68] sm:$0xff]
    %v2469 = vld [vmem:[%s2454 + $0x70] sm:$0xff]
    %v2470 = vld [vmem:[%s2454 + $0x78] sm:$0xff]
    %s2471 = scalar_lea.vmem [#allocation2], 1280
    %v2472 = vld [vmem:[%s2471] sm:$0xff]
    %v2473 = vld [vmem:[%s2471 + $0x8] sm:$0xff]
    %v2474 = vld [vmem:[%s2471 + $0x10] sm:$0xff]
    %v2475 = vld [vmem:[%s2471 + $0x18] sm:$0xff]
    %v2476 = vld [vmem:[%s2471 + $0x20] sm:$0xff]
    %v2477 = vld [vmem:[%s2471 + $0x28] sm:$0xff]
    %v2478 = vld [vmem:[%s2471 + $0x30] sm:$0xff]
    %v2479 = vld [vmem:[%s2471 + $0x38] sm:$0xff]
    %v2480 = vld [vmem:[%s2471 + $0x40] sm:$0xff]
    %v2481 = vld [vmem:[%s2471 + $0x48] sm:$0xff]
    %v2482 = vld [vmem:[%s2471 + $0x50] sm:$0xff]
    %v2483 = vld [vmem:[%s2471 + $0x58] sm:$0xff]
    %v2484 = vld [vmem:[%s2471 + $0x60] sm:$0xff]
    %v2485 = vld [vmem:[%s2471 + $0x68] sm:$0xff]
    %v2486 = vld [vmem:[%s2471 + $0x70] sm:$0xff]
    %v2487 = vld [vmem:[%s2471 + $0x78] sm:$0xff]
    %2488 = vmatprep.subr.mxu0 0.0
    %2489 = vmatpush1.msra.mxu0 %v2472
    %2490 = vmatprep.subr.mxu0 0.0
    %2491 = vmatpush1.msra.mxu0 %v2473
    %2492 = vmatprep.subr.mxu0 0.0
    %2493 = vmatpush1.msra.mxu0 %v2474
    %2494 = vmatprep.subr.mxu0 0.0
    %2495 = vmatpush1.msra.mxu0 %v2475
    %2496 = vmatprep.subr.mxu0 0.0
    %2497 = vmatpush1.msra.mxu0 %v2476
    %2498 = vmatprep.subr.mxu0 0.0
    %2499 = vmatpush1.msra.mxu0 %v2477
    %2500 = vmatprep.subr.mxu0 0.0
    %2501 = vmatpush1.msra.mxu0 %v2478
    %2502 = vmatprep.subr.mxu0 0.0
    %2503 = vmatpush1.msra.mxu0 %v2479
    %2504 = vmatprep.subr.mxu0 0.0
    %2505 = vmatpush1.msra.mxu0 %v2480
    %2506 = vmatprep.subr.mxu0 0.0
    %2507 = vmatpush1.msra.mxu0 %v2481
    %2508 = vmatprep.subr.mxu0 0.0
    %2509 = vmatpush1.msra.mxu0 %v2482
    %2510 = vmatprep.subr.mxu0 0.0
    %2511 = vmatpush1.msra.mxu0 %v2483
    %2512 = vmatprep.subr.mxu0 0.0
    %2513 = vmatpush1.msra.mxu0 %v2484
    %2514 = vmatprep.subr.mxu0 0.0
    %2515 = vmatpush1.msra.mxu0 %v2485
    %2516 = vmatprep.subr.mxu0 0.0
    %2517 = vmatpush1.msra.mxu0 %v2486
    %2518 = vmatprep.subr.mxu0 0.0
    %2519 = vmatpush1.msra.mxu0 %v2487
    %2520 = vmatprep.subr.mxu0 0.0
    %2521 = vmatpush1.msra.mxu0 0.0
    %2522 = vmatprep.subr.mxu0 0.0
    %2523 = vmatpush1.msra.mxu0 0.0
    %2524 = vmatprep.subr.mxu0 0.0
    %2525 = vmatpush1.msra.mxu0 0.0
    %2526 = vmatprep.subr.mxu0 0.0
    %2527 = vmatpush1.msra.mxu0 0.0
    %2528 = vmatprep.subr.mxu0 0.0
    %2529 = vmatpush1.msra.mxu0 0.0
    %2530 = vmatprep.subr.mxu0 0.0
    %2531 = vmatpush1.msra.mxu0 0.0
    %2532 = vmatprep.subr.mxu0 0.0
    %2533 = vmatpush1.msra.mxu0 0.0
    %2534 = vmatprep.subr.mxu0 0.0
    %2535 = vmatpush1.msra.mxu0 0.0
    %2536 = vmatprep.subr.mxu0 0.0
    %2537 = vmatpush1.msra.mxu0 0.0
    %2538 = vmatprep.subr.mxu0 0.0
    %2539 = vmatpush1.msra.mxu0 0.0
    %2540 = vmatprep.subr.mxu0 0.0
    %2541 = vmatpush1.msra.mxu0 0.0
    %2542 = vmatprep.subr.mxu0 0.0
    %2543 = vmatpush1.msra.mxu0 0.0
    %2544 = vmatprep.subr.mxu0 0.0
    %2545 = vmatpush1.msra.mxu0 0.0
    %2546 = vmatprep.subr.mxu0 0.0
    %2547 = vmatpush1.msra.mxu0 0.0
    %2548 = vmatprep.subr.mxu0 0.0
    %2549 = vmatpush1.msra.mxu0 0.0
    %2550 = vmatprep.subr.mxu0 0.0
    %2551 = vmatpush1.msra.mxu0 0.0
    %2552 = vmatprep.mubr.f32.mxu0 0.0
    %2553 = vmatmul.mubr.f32.gmra.mrb[0].mxu0 %v2280
    %v2554 = vpop.f32.mrb[0].mxu0
    %v2555 = vadd.f32 0.0, %v2554
    %v2556 = vpop.f32.mrb[0].mxu0
    %2557 = vmatprep.mubr.f32.mxu0 0.0
    %2558 = vmatmul.mubr.f32.gmra.mrb[0].mxu0 %v2281
    %v2559 = vpop.f32.mrb[0].mxu0
    %v2560 = vadd.f32 0.0, %v2559
    %v2561 = vpop.f32.mrb[0].mxu0
    %2562 = vmatprep.mubr.f32.mxu0 0.0
    %2563 = vmatmul.mubr.f32.gmra.mrb[0].mxu0 %v2282
    %v2564 = vpop.f32.mrb[0].mxu0
    %v2565 = vadd.f32 0.0, %v2564
    %v2566 = vpop.f32.mrb[0].mxu0
    %2567 = vmatprep.mubr.f32.mxu0 0.0
    %2568 = vmatmul.mubr.f32.gmra.mrb[0].mxu0 %v2283
    %v2569 = vpop.f32.mrb[0].mxu0
    %v2570 = vadd.f32 0.0, %v2569
    %v2571 = vpop.f32.mrb[0].mxu0
    %2572 = vdwg.mxu0
    %2573 = vmatprep.subr.mxu0 0.0
    %2574 = vmatpush1.msra.mxu0 %v2455
    %2575 = vmatprep.subr.mxu0 0.0
    %2576 = vmatpush1.msra.mxu0 %v2456
    %2577 = vmatprep.subr.mxu0 0.0
    %2578 = vmatpush1.msra.mxu0 %v2457
    %2579 = vmatprep.subr.mxu0 0.0
    %2580 = vmatpush1.msra.mxu0 %v2458
    %2581 = vmatprep.subr.mxu0 0.0
    %2582 = vmatpush1.msra.mxu0 %v2459
    %2583 = vmatprep.subr.mxu0 0.0
    %2584 = vmatpush1.msra.mxu0 %v2460
    %2585 = vmatprep.subr.mxu0 0.0
    %2586 = vmatpush1.msra.mxu0 %v2461
    %2587 = vmatprep.subr.mxu0 0.0
    %2588 = vmatpush1.msra.mxu0 %v2462
    %2589 = vmatprep.subr.mxu0 0.0
    %2590 = vmatpush1.msra.mxu0 %v2463
    %2591 = vmatprep.subr.mxu0 0.0
    %2592 = vmatpush1.msra.mxu0 %v2464
    %2593 = vmatprep.subr.mxu0 0.0
    %2594 = vmatpush1.msra.mxu0 %v2465
    %2595 = vmatprep.subr.mxu0 0.0
    %2596 = vmatpush1.msra.mxu0 %v2466
    %2597 = vmatprep.subr.mxu0 0.0
    %2598 = vmatpush1.msra.mxu0 %v2467
    %2599 = vmatprep.subr.mxu0 0.0
    %2600 = vmatpush1.msra.mxu0 %v2468
    %2601 = vmatprep.subr.mxu0 0.0
    %2602 = vmatpush1.msra.mxu0 %v2469
    %2603 = vmatprep.subr.mxu0 0.0
    %2604 = vmatpush1.msra.mxu0 %v2470
    %2605 = vmatprep.subr.mxu0 0.0
    %2606 = vmatpush1.msra.mxu0 0.0
    %2607 = vmatprep.subr.mxu0 0.0
    %2608 = vmatpush1.msra.mxu0 0.0
    %2609 = vmatprep.subr.mxu0 0.0
    %2610 = vmatpush1.msra.mxu0 0.0
    %2611 = vmatprep.subr.mxu0 0.0
    %2612 = vmatpush1.msra.mxu0 0.0
    %2613 = vmatprep.subr.mxu0 0.0
    %2614 = vmatpush1.msra.mxu0 0.0
    %2615 = vmatprep.subr.mxu0 0.0
    %2616 = vmatpush1.msra.mxu0 0.0
    %2617 = vmatprep.subr.mxu0 0.0
    %2618 = vmatpush1.msra.mxu0 0.0
    %2619 = vmatprep.subr.mxu0 0.0
    %2620 = vmatpush1.msra.mxu0 0.0
    %2621 = vmatprep.subr.mxu0 0.0
    %2622 = vmatpush1.msra.mxu0 0.0
    %2623 = vmatprep.subr.mxu0 0.0
    %2624 = vmatpush1.msra.mxu0 0.0
    %2625 = vmatprep.subr.mxu0 0.0
    %2626 = vmatpush1.msra.mxu0 0.0
    %2627 = vmatprep.subr.mxu0 0.0
    %2628 = vmatpush1.msra.mxu0 0.0
    %2629 = vmatprep.subr.mxu0 0.0
    %2630 = vmatpush1.msra.mxu0 0.0
    %2631 = vmatprep.subr.mxu0 0.0
    %2632 = vmatpush1.msra.mxu0 0.0
    %2633 = vmatprep.subr.mxu0 0.0
    %2634 = vmatpush1.msra.mxu0 0.0
    %2635 = vmatprep.subr.mxu0 0.0
    %2636 = vmatpush1.msra.mxu0 0.0
    %2637 = vmatprep.mubr.f32.mxu0 0.0
    %2638 = vmatmul.mubr.f32.gmra.mrb[0].mxu0 %v2351
    %v2639 = vpop.f32.mrb[0].mxu0
    %v2640 = vadd.f32 %v2555, %v2639
    %v2641 = vpop.f32.mrb[0].mxu0
    %2642 = vmatprep.mubr.f32.mxu0 0.0
    %2643 = vmatmul.mubr.f32.gmra.mrb[0].mxu0 %v2356
    %v2644 = vpop.f32.mrb[0].mxu0
    %v2645 = vadd.f32 %v2560, %v2644
    %v2646 = vpop.f32.mrb[0].mxu0
    %2647 = vmatprep.mubr.f32.mxu0 0.0
    %2648 = vmatmul.mubr.f32.gmra.mrb[0].mxu0 %v2361
    %v2649 = vpop.f32.mrb[0].mxu0
    %v2650 = vadd.f32 %v2565, %v2649
    %v2651 = vpop.f32.mrb[0].mxu0
    %2652 = vmatprep.mubr.f32.mxu0 0.0
    %2653 = vmatmul.mubr.f32.gmra.mrb[0].mxu0 %v2366
    %v2654 = vpop.f32.mrb[0].mxu0
    %v2655 = vadd.f32 %v2570, %v2654
    %v2656 = vpop.f32.mrb[0].mxu0
    %2657 = vdwg.mxu0
    %s2658 = scalar_lea.vmem [#allocation2], 1408
    %v2659 = vld [vmem:[%s2658] sm:$0xff]
    %v2660 = vld [vmem:[%s2658 + $0x8] sm:$0xff]
    %v2661 = vld [vmem:[%s2658 + $0x10] sm:$0xff]
    %v2662 = vld [vmem:[%s2658 + $0x18] sm:$0xff]
    %v2663 = vld [vmem:[%s2658 + $0x20] sm:$0xff]
    %v2664 = vld [vmem:[%s2658 + $0x28] sm:$0xff]
    %v2665 = vld [vmem:[%s2658 + $0x30] sm:$0xff]
    %v2666 = vld [vmem:[%s2658 + $0x38] sm:$0xff]
    %v2667 = vld [vmem:[%s2658 + $0x40] sm:$0xff]
    %v2668 = vld [vmem:[%s2658 + $0x48] sm:$0xff]
    %v2669 = vld [vmem:[%s2658 + $0x50] sm:$0xff]
    %v2670 = vld [vmem:[%s2658 + $0x58] sm:$0xff]
    %v2671 = vld [vmem:[%s2658 + $0x60] sm:$0xff]
    %v2672 = vld [vmem:[%s2658 + $0x68] sm:$0xff]
    %v2673 = vld [vmem:[%s2658 + $0x70] sm:$0xff]
    %v2674 = vld [vmem:[%s2658 + $0x78] sm:$0xff]
    %2675 = vmatprep.subr.mxu0 0.0
    %2676 = vmatpush1.msra.mxu0 %v2659
    %2677 = vmatprep.subr.mxu0 0.0
    %2678 = vmatpush1.msra.mxu0 %v2660
    %2679 = vmatprep.subr.mxu0 0.0
    %2680 = vmatpush1.msra.mxu0 %v2661
    %2681 = vmatprep.subr.mxu0 0.0
    %2682 = vmatpush1.msra.mxu0 %v2662
    %2683 = vmatprep.subr.mxu0 0.0
    %2684 = vmatpush1.msra.mxu0 %v2663
    %2685 = vmatprep.subr.mxu0 0.0
    %2686 = vmatpush1.msra.mxu0 %v2664
    %2687 = vmatprep.subr.mxu0 0.0
    %2688 = vmatpush1.msra.mxu0 %v2665
    %2689 = vmatprep.subr.mxu0 0.0
    %2690 = vmatpush1.msra.mxu0 %v2666
    %2691 = vmatprep.subr.mxu0 0.0
    %2692 = vmatpush1.msra.mxu0 %v2667
    %2693 = vmatprep.subr.mxu0 0.0
    %2694 = vmatpush1.msra.mxu0 %v2668
    %2695 = vmatprep.subr.mxu0 0.0
    %2696 = vmatpush1.msra.mxu0 %v2669
    %2697 = vmatprep.subr.mxu0 0.0
    %2698 = vmatpush1.msra.mxu0 %v2670
    %2699 = vmatprep.subr.mxu0 0.0
    %2700 = vmatpush1.msra.mxu0 %v2671
    %2701 = vmatprep.subr.mxu0 0.0
    %2702 = vmatpush1.msra.mxu0 %v2672
    %2703 = vmatprep.subr.mxu0 0.0
    %2704 = vmatpush1.msra.mxu0 %v2673
    %2705 = vmatprep.subr.mxu0 0.0
    %2706 = vmatpush1.msra.mxu0 %v2674
    %2707 = vmatprep.subr.mxu0 0.0
    %2708 = vmatpush1.msra.mxu0 0.0
    %2709 = vmatprep.subr.mxu0 0.0
    %2710 = vmatpush1.msra.mxu0 0.0
    %2711 = vmatprep.subr.mxu0 0.0
    %2712 = vmatpush1.msra.mxu0 0.0
    %2713 = vmatprep.subr.mxu0 0.0
    %2714 = vmatpush1.msra.mxu0 0.0
    %2715 = vmatprep.subr.mxu0 0.0
    %2716 = vmatpush1.msra.mxu0 0.0
    %2717 = vmatprep.subr.mxu0 0.0
    %2718 = vmatpush1.msra.mxu0 0.0
    %2719 = vmatprep.subr.mxu0 0.0
    %2720 = vmatpush1.msra.mxu0 0.0
    %2721 = vmatprep.subr.mxu0 0.0
    %2722 = vmatpush1.msra.mxu0 0.0
    %2723 = vmatprep.subr.mxu0 0.0
    %2724 = vmatpush1.msra.mxu0 0.0
    %2725 = vmatprep.subr.mxu0 0.0
    %2726 = vmatpush1.msra.mxu0 0.0
    %2727 = vmatprep.subr.mxu0 0.0
    %2728 = vmatpush1.msra.mxu0 0.0
    %2729 = vmatprep.subr.mxu0 0.0
    %2730 = vmatpush1.msra.mxu0 0.0
    %2731 = vmatprep.subr.mxu0 0.0
    %2732 = vmatpush1.msra.mxu0 0.0
    %2733 = vmatprep.subr.mxu0 0.0
    %2734 = vmatpush1.msra.mxu0 0.0
    %2735 = vmatprep.subr.mxu0 0.0
    %2736 = vmatpush1.msra.mxu0 0.0
    %2737 = vmatprep.subr.mxu0 0.0
    %2738 = vmatpush1.msra.mxu0 0.0
    %2739 = vmatprep.mubr.f32.mxu0 0.0
    %2740 = vmatmul.mubr.f32.gmra.mrb[0].mxu0 %v2436
    %v2741 = vpop.f32.mrb[0].mxu0
    %v2742 = vadd.f32 0.0, %v2741
    %v2743 = vpop.f32.mrb[0].mxu0
    %2744 = vmatprep.mubr.f32.mxu0 0.0
    %2745 = vmatmul.mubr.f32.gmra.mrb[0].mxu0 %v2441
    %v2746 = vpop.f32.mrb[0].mxu0
    %v2747 = vadd.f32 0.0, %v2746
    %v2748 = vpop.f32.mrb[0].mxu0
    %2749 = vmatprep.mubr.f32.mxu0 0.0
    %2750 = vmatmul.mubr.f32.gmra.mrb[0].mxu0 %v2446
    %v2751 = vpop.f32.mrb[0].mxu0
    %v2752 = vadd.f32 0.0, %v2751
    %v2753 = vpop.f32.mrb[0].mxu0
    %2754 = vmatprep.mubr.f32.mxu0 0.0
    %2755 = vmatmul.mubr.f32.gmra.mrb[0].mxu0 %v2451
    %v2756 = vpop.f32.mrb[0].mxu0
    %v2757 = vadd.f32 0.0, %v2756
    %v2758 = vpop.f32.mrb[0].mxu0
    %2759 = vdwg.mxu0
    %v2760 = vadd.f32 %v2640, %v2742
    %v2761 = vadd.f32 %v2645, %v2747
    %v2762 = vadd.f32 %v2650, %v2752
    %v2763 = vadd.f32 %v2655, %v2757
    %v2764 = vxor.u32 %v2760, 2147483648
    %v2765 = vxor.u32 %v2761, 2147483648
    %v2766 = vxor.u32 %v2762, 2147483648
    %v2767 = vxor.u32 %v2763, 2147483648
    %v2768 = vmul.f32 %v2764, 1.442695
    %v2769 = vpow.pop %v2768
    %v2770 = vmul.f32 %v2765, 1.442695
    %v2771 = vpow.pop %v2770
    %v2772 = vmul.f32 %v2766, 1.442695
    %v2773 = vpow.pop %v2772
    %v2774 = vmul.f32 %v2767, 1.442695
    %v2775 = vpow.pop %v2774
    %v2776 = vadd.f32 %v2769, 1.0
    %v2777 = vadd.f32 %v2771, 1.0
    %v2778 = vadd.f32 %v2773, 1.0
    %v2779 = vadd.f32 %v2775, 1.0
    %v2780 = vrcp.pop %v2776
    %v2781 = vmul.f32 1.0, %v2780
    %v2782 = vrcp.pop %v2777
    %v2783 = vmul.f32 1.0, %v2782
    %v2784 = vrcp.pop %v2778
    %v2785 = vmul.f32 1.0, %v2784
    %v2786 = vrcp.pop %v2779
    %v2787 = vmul.f32 1.0, %v2786
    %v2788 = vmul.f32 %v1575, %v2781
    %v2789 = vmul.f32 %v1576, %v2783
    %v2790 = vmul.f32 %v1577, %v2785
    %v2791 = vmul.f32 %v1578, %v2787
    %2792 = vst [vmem:[%s5] sm:$0xff] %v2788
    %2793 = vst [vmem:[%s5 + $0x8] sm:$0xff] %v2789
    %2794 = vst [vmem:[%s5 + $0x10] sm:$0xff] %v2790
    %2795 = vst [vmem:[%s5 + $0x18] sm:$0xff] %v2791
    // Predicated region
    $region26: #{residual_block_type_b.1} parent=1 // pred_check
      _
    $region27: #{residual_block_type_b.1} parent=1 // pred_check_branch
      %2797 = sbr.rel (0) target = $region29
    $region28: #{residual_block_type_b.1} parent=1 // pred_region
      _
    $region29: #{residual_block_type_b.1} parent=1 // pred_fallthru
      _
    // Predicated region
    $region30: #{residual_block_type_b.1} parent=1 // pred_check
      _
    $region31: #{residual_block_type_b.1} parent=1 // pred_check_branch
      %2799 = sbr.rel (0) target = $region33
    $region32: #{residual_block_type_b.1} parent=1 // pred_region
      _
    $region33: #{residual_block_type_b.1} parent=1 // pred_fallthru
      _
    %2800 = vsyncpa [#allocation3], 1

</llo_original>
